<compile_context>
chip_gen: v7x
topology: tpu7x:2x2x1
jax: 0.10.0
libtpu: 0.0.40
codegen_flags: <defaults>
</compile_context>

<pallas_src>
import functools

import jax
import jax.numpy as jnp
import numpy as np
from jax.experimental import pallas as pl
from jax.experimental.pallas import tpu as pltpu


# ----------------------------- Pallas kernel --------------------------------
def char_gru_chunk_kernel(
    gi0_ref,        # (Ts, B, 3H)  chunk of x @ W_ih0 + (b_ih0 [+ b_hh0 for r,z])
    h_init_ref,     # (L, B, H)    initial hidden state
    w_hh0_ref,      # (H, 3H)
    b_hn0_ref,      # (1, H)       b_hh0 for the n gate only
    w_ih1_ref,      # (H, 3H)
    w_hh1_ref,      # (H, 3H)
    b_gi1_ref,      # (1, 3H)      b_ih1 (+ b_hh1 for r,z)
    b_hn1_ref,      # (1, H)       b_hh1 for the n gate only
    w_fc_ref,       # (H, O)
    b_fc_ref,       # (1, O)
    out_ref,        # (B, O)       fc(out[:, -1, :])
    hid_out_ref,    # (L, B, H)    final hidden state
    h0_ref,         # scratch (B, H)      layer-0 carry across chunks
    h1_ref,         # scratch (B, H)      layer-1 carry across chunks
    h0_seq_ref,     # scratch (Ts*B, H)   layer-0 outputs for the whole chunk
):
    c = pl.program_id(0)
    Ts, B, _ = gi0_ref.shape
    H = h_init_ref.shape[2]

    # Initialize carries from the provided hidden state on the first chunk.
    @pl.when(c == 0)
    def _():
        h0_ref[...] = h_init_ref[0]
        h1_ref[...] = h_init_ref[1]

    # Weights resident for the whole chunk.
    w_hh0 = w_hh0_ref[...]
    w_ih1 = w_ih1_ref[...]
    w_hh1 = w_hh1_ref[...]
    # Bias broadcasts hoisted out of the recurrence loops (JAX does not CSE
    # broadcast_in_dim; without this it would be re-emitted every step).
    b_hn0 = jnp.broadcast_to(b_hn0_ref[...], (B, H))
    b_hn1 = jnp.broadcast_to(b_hn1_ref[...], (B, H))
    b_gi1 = b_gi1_ref[...]

    def gru_gates(gi, gh, b_hn, h_prev):
        # PyTorch gate order (r, z, n). `gi` already carries b_ih for all gates
        # and b_hh for r,z; `gh` is bias-free; b_hn is added inside r * (...).
        r = jax.nn.sigmoid(gi[:, 0:H] + gh[:, 0:H])
        z = jax.nn.sigmoid(gi[:, H:2 * H] + gh[:, H:2 * H])
        n = jnp.tanh(gi[:, 2 * H:3 * H] + r * (gh[:, 2 * H:3 * H] + b_hn))
        return (1.0 - z) * n + z * h_prev

    # ---- Layer-0 recurrence over the chunk (only h @ W_hh0 on the serial
    # chain; the input projection was hoisted to the wrapper).  Static unroll.
    h0 = h0_ref[...]
    for t in range(Ts):
        gi0 = gi0_ref[t]                                               # (B, 3H)
        gh0 = jnp.dot(h0, w_hh0, preferred_element_type=jnp.float32)
        h0 = gru_gates(gi0, gh0, b_hn0, h0)
        h0_seq_ref[t * B:(t + 1) * B, :] = h0
    h0_ref[...] = h0

    # ---- Layer-1 input projection for the whole chunk: ONE MXU matmul
    # (Ts*B, H) @ (H, 3H) off the per-step critical path.
    gi1_seq = (
        jnp.dot(h0_seq_ref[...], w_ih1, preferred_element_type=jnp.float32)
        + b_gi1
    )                                                                  # (Ts*B, 3H)

    # ---- Layer-1 recurrence over the chunk (only h @ W_hh1 per step).
    h1 = h1_ref[...]
    for t in range(Ts):
        gi1 = gi1_seq[t * B:(t + 1) * B, :]                            # (B, 3H)
        gh1 = jnp.dot(h1, w_hh1, preferred_element_type=jnp.float32)
        h1 = gru_gates(gi1, gh1, b_hn1, h1)
    h1_ref[...] = h1

    # ---- Finalize on the last chunk: fc on the last timestep + hidden out.
    @pl.when(c == pl.num_programs(0) - 1)
    def _():
        out_ref[...] = (
            jnp.dot(h1, w_fc_ref[...], preferred_element_type=jnp.float32)
            + b_fc_ref[...]
        )
        hid_out_ref[0] = h0
        hid_out_ref[1] = h1


# ------------------------------- Wrapper -------------------------------------
@functools.partial(jax.jit, static_argnames=("time_chunk",))
def char_gru_forward(x, hidden, params, *, time_chunk=8):
    """x: (B, S, In) batch_first (PyTorch convention). hidden: (L, B, H)."""
    B, S, In = x.shape
    L, _, H = hidden.shape
    O = params["w_fc"].shape[1]
    if L != 2:
        raise NotImplementedError("kernel assumes num_layers == 2")

    Ts = min(time_chunk, S)
    if S % Ts != 0:
        raise ValueError("sequence length must be a multiple of the time chunk")
        # TODO(synk): handle ragged tails with a bounded final chunk.
    n_chunks = S // Ts

    w_ih0, w_hh0 = params["w_ih0"], params["w_hh0"]
    b_ih0, b_hh0 = params["b_ih0"], params["b_hh0"]
    w_ih1, w_hh1 = params["w_ih1"], params["w_hh1"]
    b_ih1, b_hh1 = params["b_ih1"], params["b_hh1"]

    # Pre-combine biases: r,z gates get b_ih + b_hh folded together; only the
    # n-gate hidden bias must stay separate (it sits inside r * (gh_n + b_hn)).
    b_gi0 = jnp.concatenate(
        [b_ih0[:, :2 * H] + b_hh0[:, :2 * H], b_ih0[:, 2 * H:]], axis=1)
    b_hn0 = b_hh0[:, 2 * H:]
    b_gi1 = jnp.concatenate(
        [b_ih1[:, :2 * H] + b_hh1[:, :2 * H], b_ih1[:, 2 * H:]], axis=1)
    b_hn1 = b_hh1[:, 2 * H:]

    # Hoisted layer-0 input projection: one (S*B, In) @ (In, 3H) matmul for the
    # whole sequence, emitted in time-major layout so the kernel indexes time
    # on the leading (untiled) dim.
    gi0_all = jnp.einsum('bsi,ig->sbg', x, w_ih0) + b_gi0   # (S, B, 3H)

    grid_spec = pltpu.PrefetchScalarGridSpec(
        num_scalar_prefetch=0,
        grid=(n_chunks,),
        in_specs=[
            # gi0: time-chunked block -> auto double-buffered DMA per chunk.
            pl.BlockSpec((Ts, B, 3 * H), lambda c: (c, 0, 0)),
            # Everything below is a constant block (fetched once, stays in VMEM).
            pl.BlockSpec((L, B, H), lambda c: (0, 0, 0)),
            pl.BlockSpec((H, 3 * H), lambda c: (0, 0)),
            pl.BlockSpec((1, H), lambda c: (0, 0)),
            pl.BlockSpec((H, 3 * H), lambda c: (0, 0)),
            pl.BlockSpec((H, 3 * H), lambda c: (0, 0)),
            pl.BlockSpec((1, 3 * H), lambda c: (0, 0)),
            pl.BlockSpec((1, H), lambda c: (0, 0)),
            pl.BlockSpec((H, O), lambda c: (0, 0)),
            pl.BlockSpec((1, O), lambda c: (0, 0)),
        ],
        out_specs=(
            pl.BlockSpec((B, O), lambda c: (0, 0)),
            pl.BlockSpec((L, B, H), lambda c: (0, 0, 0)),
        ),
        scratch_shapes=[
            pltpu.VMEM((B, H), jnp.float32),        # layer-0 carry
            pltpu.VMEM((B, H), jnp.float32),        # layer-1 carry
            pltpu.VMEM((Ts * B, H), jnp.float32),   # layer-0 chunk outputs
        ],
    )

    out, hid = pl.pallas_call(
        char_gru_chunk_kernel,
        out_shape=(
            jax.ShapeDtypeStruct((B, O), jnp.float32),
            jax.ShapeDtypeStruct((L, B, H), jnp.float32),
        ),
        grid_spec=grid_spec,
        compiler_params=pltpu.CompilerParams(
            dimension_semantics=("arbitrary",),     # serial recurrence over chunks
            vmem_limit_bytes=32 * 1024 * 1024,
        ),
    )(
        gi0_all, hidden,
        w_hh0, b_hn0,
        w_ih1, w_hh1, b_gi1, b_hn1,
        params["w_fc"], params["b_fc"],
    )
    return out, hid


# --------------------------- Pure-JAX reference -------------------------------
def char_gru_ref(x, hidden, p):
    B, S, In = x.shape
    H = p["w_hh0"].shape[0]

    def cell(x_t, h_prev, w_ih, w_hh, b_ih, b_hh):
        gi = x_t @ w_ih + b_ih
        gh = h_prev @ w_hh + b_hh
        r = jax.nn.sigmoid(gi[:, :H] + gh[:, :H])
        z = jax.nn.sigmoid(gi[:, H:2 * H] + gh[:, H:2 * H])
        n = jnp.tanh(gi[:, 2 * H:] + r * gh[:, 2 * H:])
        return (1.0 - z) * n + z * h_prev

    h0, h1 = hidden[0], hidden[1]
    for t in range(S):
        h0 = cell(x[:, t], h0, p["w_ih0"], p["w_hh0"], p["b_ih0"], p["b_hh0"])
        h1 = cell(h0, h1, p["w_ih1"], p["w_hh1"], p["b_ih1"], p["b_hh1"])
    out = h1 @ p["w_fc"] + p["b_fc"]
    return out, jnp.stack([h0, h1])


# -------------------------- Deterministic params ------------------------------
def init_params(key, input_size, hidden_size, output_size):
    k = 1.0 / np.sqrt(hidden_size)
    keys = jax.random.split(key, 12)
    u = lambda kk, shape: jax.random.uniform(
        kk, shape, dtype=jnp.float32, minval=-k, maxval=k)
    # Weights stored pre-transposed: (in_features, 3*H) so the kernel does x @ W.
    return {
        "w_ih0": u(keys[0], (input_size, 3 * hidden_size)),
        "w_hh0": u(keys[1], (hidden_size, 3 * hidden_size)),
        "b_ih0": u(keys[2], (1, 3 * hidden_size)),
        "b_hh0": u(keys[3], (1, 3 * hidden_size)),
        "w_ih1": u(keys[4], (hidden_size, 3 * hidden_size)),
        "w_hh1": u(keys[5], (hidden_size, 3 * hidden_size)),
        "b_ih1": u(keys[6], (1, 3 * hidden_size)),
        "b_hh1": u(keys[7], (1, 3 * hidden_size)),
        "w_fc": u(keys[8], (hidden_size, output_size)),
        "b_fc": u(keys[9], (1, output_size)),
    }


if __name__ == "__main__":
    B, S, IN, H, OUT, L = 2, 16, 16, 32, 8, 2   # S=16 -> two time chunks of 8

    key = jax.random.PRNGKey(0)
    kp, kx = jax.random.split(key)
    params = init_params(kp, IN, H, OUT)

    x = jax.random.normal(kx, (B, S, IN), dtype=jnp.float32)  # batch_first input
    hidden = jnp.zeros((L, B, H), dtype=jnp.float32)          # init_hidden

    out, hid = char_gru_forward(x, hidden, params, time_chunk=8)
    out, hid = jax.block_until_ready((out, hid))

    out_ref, hid_ref = char_gru_ref(x, hidden, params)
    np.testing.assert_allclose(np.asarray(out), np.asarray(out_ref),
                               rtol=1e-4, atol=1e-4)
    np.testing.assert_allclose(np.asarray(hid), np.asarray(hid_ref),
                               rtol=1e-4, atol=1e-4)

    print("KERNEL_OK")
</pallas_src>

<mosaic_0001>
module attributes {stable_mosaic.version = 11 : i64} {
  func.func @char_gru_chunk_kernel(%arg0: i32, %arg1: memref<8x2x96xf32, #tpu.memory_space<vmem>>, %arg2: memref<2x2x32xf32, #tpu.memory_space<vmem>>, %arg3: memref<32x96xf32, #tpu.memory_space<vmem>>, %arg4: memref<1x32xf32, #tpu.memory_space<vmem>>, %arg5: memref<32x96xf32, #tpu.memory_space<vmem>>, %arg6: memref<32x96xf32, #tpu.memory_space<vmem>>, %arg7: memref<1x96xf32, #tpu.memory_space<vmem>>, %arg8: memref<1x32xf32, #tpu.memory_space<vmem>>, %arg9: memref<32x8xf32, #tpu.memory_space<vmem>>, %arg10: memref<1x8xf32, #tpu.memory_space<vmem>>, %arg11: memref<2x8xf32, #tpu.memory_space<vmem>>, %arg12: memref<2x2x32xf32, #tpu.memory_space<vmem>>, %arg13: memref<2x32xf32, #tpu.memory_space<vmem>>, %arg14: memref<2x32xf32, #tpu.memory_space<vmem>>, %arg15: memref<16x32xf32, #tpu.memory_space<vmem>>) attributes {dimension_semantics = [#tpu.dimension_semantics<arbitrary>], iteration_bounds = array<i64: 2>, scalar_prefetch = 0 : i64, scratch_operands = 3 : i64, tpu.core_type = #tpu.core_type<tc>, window_params = [{transform_indices = @transform_0, window_bounds = array<i64: 8, 2, 96>}, {pipeline_mode = #tpu.pipeline_mode<synchronous>, transform_indices = @transform_1, window_bounds = array<i64: 2, 2, 32>}, {pipeline_mode = #tpu.pipeline_mode<synchronous>, transform_indices = @transform_2, window_bounds = array<i64: 32, 96>}, {pipeline_mode = #tpu.pipeline_mode<synchronous>, transform_indices = @transform_3, window_bounds = array<i64: 1, 32>}, {pipeline_mode = #tpu.pipeline_mode<synchronous>, transform_indices = @transform_4, window_bounds = array<i64: 32, 96>}, {pipeline_mode = #tpu.pipeline_mode<synchronous>, transform_indices = @transform_5, window_bounds = array<i64: 32, 96>}, {pipeline_mode = #tpu.pipeline_mode<synchronous>, transform_indices = @transform_6, window_bounds = array<i64: 1, 96>}, {pipeline_mode = #tpu.pipeline_mode<synchronous>, transform_indices = @transform_7, window_bounds = array<i64: 1, 32>}, {pipeline_mode = #tpu.pipeline_mode<synchronous>, transform_indices = @transform_8, window_bounds = array<i64: 32, 8>}, {pipeline_mode = #tpu.pipeline_mode<synchronous>, transform_indices = @transform_9, window_bounds = array<i64: 1, 8>}, {pipeline_mode = #tpu.pipeline_mode<synchronous>, transform_indices = @transform_10, window_bounds = array<i64: 2, 8>}, {pipeline_mode = #tpu.pipeline_mode<synchronous>, transform_indices = @transform_11, window_bounds = array<i64: 2, 2, 32>}]} {
    %c0_i32 = arith.constant 0 : i32
    %0 = arith.cmpi eq, %arg0, %c0_i32 : i32
    %1 = arith.extui %0 : i1 to i32
    %c0_i32_0 = arith.constant 0 : i32
    %2 = arith.cmpi ne, %1, %c0_i32_0 : i32
    scf.if %2 {
      %c0_116 = arith.constant 0 : index
      %c0_117 = arith.constant 0 : index
      %c0_118 = arith.constant 0 : index
      %504 = vector.load %arg2[%c0_116, %c0_117, %c0_118] : memref<2x2x32xf32, #tpu.memory_space<vmem>>, vector<1x2x32xf32>
      %505 = vector.shape_cast %504 : vector<1x2x32xf32> to vector<2x32xf32>
      %c0_119 = arith.constant 0 : index
      %c0_120 = arith.constant 0 : index
      %506 = vector.load %arg13[%c0_119, %c0_120] : memref<2x32xf32, #tpu.memory_space<vmem>>, vector<2x32xf32>
      tpu.vector_store %arg13[%c0_119, %c0_120], %505 {strides = array<i32>} : memref<2x32xf32, #tpu.memory_space<vmem>>, vector<2x32xf32>,
      %c1_121 = arith.constant 1 : index
      %c0_122 = arith.constant 0 : index
      %c0_123 = arith.constant 0 : index
      %507 = vector.load %arg2[%c1_121, %c0_122, %c0_123] : memref<2x2x32xf32, #tpu.memory_space<vmem>>, vector<1x2x32xf32>
      %508 = vector.shape_cast %507 : vector<1x2x32xf32> to vector<2x32xf32>
      %c0_124 = arith.constant 0 : index
      %c0_125 = arith.constant 0 : index
      %509 = vector.load %arg14[%c0_124, %c0_125] : memref<2x32xf32, #tpu.memory_space<vmem>>, vector<2x32xf32>
      tpu.vector_store %arg14[%c0_124, %c0_125], %508 {strides = array<i32>} : memref<2x32xf32, #tpu.memory_space<vmem>>, vector<2x32xf32>,
    } else {
    }
    %c0 = arith.constant 0 : index
    %c0_1 = arith.constant 0 : index
    %3 = vector.load %arg3[%c0, %c0_1] : memref<32x96xf32, #tpu.memory_space<vmem>>, vector<32x96xf32>
    %c0_2 = arith.constant 0 : index
    %c0_3 = arith.constant 0 : index
    %4 = vector.load %arg5[%c0_2, %c0_3] : memref<32x96xf32, #tpu.memory_space<vmem>>, vector<32x96xf32>
    %c0_4 = arith.constant 0 : index
    %c0_5 = arith.constant 0 : index
    %5 = vector.load %arg6[%c0_4, %c0_5] : memref<32x96xf32, #tpu.memory_space<vmem>>, vector<32x96xf32>
    %c0_6 = arith.constant 0 : index
    %c0_7 = arith.constant 0 : index
    %6 = vector.load %arg4[%c0_6, %c0_7] : memref<1x32xf32, #tpu.memory_space<vmem>>, vector<1x32xf32>
    %7 = vector.shape_cast %6 : vector<1x32xf32> to vector<1x32xf32>
    %8 = vector.broadcast %7 : vector<1x32xf32> to vector<2x32xf32>
    %c0_8 = arith.constant 0 : index
    %c0_9 = arith.constant 0 : index
    %9 = vector.load %arg8[%c0_8, %c0_9] : memref<1x32xf32, #tpu.memory_space<vmem>>, vector<1x32xf32>
    %10 = vector.shape_cast %9 : vector<1x32xf32> to vector<1x32xf32>
    %11 = vector.broadcast %10 : vector<1x32xf32> to vector<2x32xf32>
    %c0_10 = arith.constant 0 : index
    %c0_11 = arith.constant 0 : index
    %12 = vector.load %arg7[%c0_10, %c0_11] : memref<1x96xf32, #tpu.memory_space<vmem>>, vector<1x96xf32>
    %c0_12 = arith.constant 0 : index
    %c0_13 = arith.constant 0 : index
    %13 = vector.load %arg13[%c0_12, %c0_13] : memref<2x32xf32, #tpu.memory_space<vmem>>, vector<2x32xf32>
    %c0_14 = arith.constant 0 : index
    %c0_15 = arith.constant 0 : index
    %c0_16 = arith.constant 0 : index
    %14 = vector.load %arg1[%c0_14, %c0_15, %c0_16] : memref<8x2x96xf32, #tpu.memory_space<vmem>>, vector<1x2x96xf32>
    %15 = vector.shape_cast %14 : vector<1x2x96xf32> to vector<2x96xf32>
    %cst = arith.constant dense<0.000000e+00> : vector<2x96xf32>
    %16 = tpu.matmul %13, %3, %cst {dimension_numbers = #tpu.dot_dimension_numbers<[1], [0], [0], [1], [0, 0, 1, 1], [], []>} : vector<2x32xf32>, vector<32x96xf32>, vector<2x96xf32> -> vector<2x96xf32>
    %17 = vector.extract_strided_slice %15 {offsets = [0, 0], sizes = [2, 32], strides = [1, 1]} : vector<2x96xf32> to vector<2x32xf32>
    %18 = vector.extract_strided_slice %16 {offsets = [0, 0], sizes = [2, 32], strides = [1, 1]} : vector<2x96xf32> to vector<2x32xf32>
    %19 = arith.addf %17, %18 : vector<2x32xf32>
    %20 = arith.negf %19 : vector<2x32xf32>
    %21 = math.exp %20 : vector<2x32xf32>
    %cst_17 = arith.constant 1.000000e+00 : f32
    %22 = vector.broadcast %cst_17 : f32 to vector<2x32xf32>
    %23 = arith.addf %22, %21 : vector<2x32xf32>
    %24 = arith.divf %22, %23 : vector<2x32xf32>
    %25 = vector.extract_strided_slice %15 {offsets = [0, 32], sizes = [2, 32], strides = [1, 1]} : vector<2x96xf32> to vector<2x32xf32>
    %26 = vector.extract_strided_slice %16 {offsets = [0, 32], sizes = [2, 32], strides = [1, 1]} : vector<2x96xf32> to vector<2x32xf32>
    %27 = arith.addf %25, %26 : vector<2x32xf32>
    %28 = arith.negf %27 : vector<2x32xf32>
    %29 = math.exp %28 : vector<2x32xf32>
    %cst_18 = arith.constant 1.000000e+00 : f32
    %30 = vector.broadcast %cst_18 : f32 to vector<2x32xf32>
    %31 = arith.addf %30, %29 : vector<2x32xf32>
    %32 = arith.divf %30, %31 : vector<2x32xf32>
    %33 = vector.extract_strided_slice %15 {offsets = [0, 64], sizes = [2, 32], strides = [1, 1]} : vector<2x96xf32> to vector<2x32xf32>
    %34 = vector.extract_strided_slice %16 {offsets = [0, 64], sizes = [2, 32], strides = [1, 1]} : vector<2x96xf32> to vector<2x32xf32>
    %35 = arith.addf %34, %8 : vector<2x32xf32>
    %36 = arith.mulf %24, %35 : vector<2x32xf32>
    %37 = arith.addf %33, %36 : vector<2x32xf32>
    %38 = math.tanh %37 : vector<2x32xf32>
    %cst_19 = arith.constant 1.000000e+00 : f32
    %39 = vector.broadcast %cst_19 : f32 to vector<2x32xf32>
    %40 = arith.subf %39, %32 : vector<2x32xf32>
    %41 = arith.mulf %40, %38 : vector<2x32xf32>
    %42 = arith.mulf %32, %13 : vector<2x32xf32>
    %43 = arith.addf %41, %42 : vector<2x32xf32>
    %c0_20 = arith.constant 0 : index
    %c0_21 = arith.constant 0 : index
    %44 = vector.load %arg15[%c0_20, %c0_21] : memref<16x32xf32, #tpu.memory_space<vmem>>, vector<2x32xf32>
    tpu.vector_store %arg15[%c0_20, %c0_21], %43 {strides = array<i32>} : memref<16x32xf32, #tpu.memory_space<vmem>>, vector<2x32xf32>,
    %c1 = arith.constant 1 : index
    %c0_22 = arith.constant 0 : index
    %c0_23 = arith.constant 0 : index
    %45 = vector.load %arg1[%c1, %c0_22, %c0_23] : memref<8x2x96xf32, #tpu.memory_space<vmem>>, vector<1x2x96xf32>
    %46 = vector.shape_cast %45 : vector<1x2x96xf32> to vector<2x96xf32>
    %cst_24 = arith.constant dense<0.000000e+00> : vector<2x96xf32>
    %47 = tpu.matmul %43, %3, %cst_24 {dimension_numbers = #tpu.dot_dimension_numbers<[1], [0], [0], [1], [0, 0, 1, 1], [], []>} : vector<2x32xf32>, vector<32x96xf32>, vector<2x96xf32> -> vector<2x96xf32>
    %48 = vector.extract_strided_slice %46 {offsets = [0, 0], sizes = [2, 32], strides = [1, 1]} : vector<2x96xf32> to vector<2x32xf32>
    %49 = vector.extract_strided_slice %47 {offsets = [0, 0], sizes = [2, 32], strides = [1, 1]} : vector<2x96xf32> to vector<2x32xf32>
    %50 = arith.addf %48, %49 : vector<2x32xf32>
    %51 = arith.negf %50 : vector<2x32xf32>
    %52 = math.exp %51 : vector<2x32xf32>
    %cst_25 = arith.constant 1.000000e+00 : f32
    %53 = vector.broadcast %cst_25 : f32 to vector<2x32xf32>
    %54 = arith.addf %53, %52 : vector<2x32xf32>
    %55 = arith.divf %53, %54 : vector<2x32xf32>
    %56 = vector.extract_strided_slice %46 {offsets = [0, 32], sizes = [2, 32], strides = [1, 1]} : vector<2x96xf32> to vector<2x32xf32>
    %57 = vector.extract_strided_slice %47 {offsets = [0, 32], sizes = [2, 32], strides = [1, 1]} : vector<2x96xf32> to vector<2x32xf32>
    %58 = arith.addf %56, %57 : vector<2x32xf32>
    %59 = arith.negf %58 : vector<2x32xf32>
    %60 = math.exp %59 : vector<2x32xf32>
    %cst_26 = arith.constant 1.000000e+00 : f32
    %61 = vector.broadcast %cst_26 : f32 to vector<2x32xf32>
    %62 = arith.addf %61, %60 : vector<2x32xf32>
    %63 = arith.divf %61, %62 : vector<2x32xf32>
    %64 = vector.extract_strided_slice %46 {offsets = [0, 64], sizes = [2, 32], strides = [1, 1]} : vector<2x96xf32> to vector<2x32xf32>
    %65 = vector.extract_strided_slice %47 {offsets = [0, 64], sizes = [2, 32], strides = [1, 1]} : vector<2x96xf32> to vector<2x32xf32>
    %66 = arith.addf %65, %8 : vector<2x32xf32>
    %67 = arith.mulf %55, %66 : vector<2x32xf32>
    %68 = arith.addf %64, %67 : vector<2x32xf32>
    %69 = math.tanh %68 : vector<2x32xf32>
    %cst_27 = arith.constant 1.000000e+00 : f32
    %70 = vector.broadcast %cst_27 : f32 to vector<2x32xf32>
    %71 = arith.subf %70, %63 : vector<2x32xf32>
    %72 = arith.mulf %71, %69 : vector<2x32xf32>
    %73 = arith.mulf %63, %43 : vector<2x32xf32>
    %74 = arith.addf %72, %73 : vector<2x32xf32>
    %c2 = arith.constant 2 : index
    %c0_28 = arith.constant 0 : index
    %75 = vector.load %arg15[%c2, %c0_28] : memref<16x32xf32, #tpu.memory_space<vmem>>, vector<2x32xf32>
    tpu.vector_store %arg15[%c2, %c0_28], %74 {strides = array<i32>} : memref<16x32xf32, #tpu.memory_space<vmem>>, vector<2x32xf32>,
    %c2_29 = arith.constant 2 : index
    %c0_30 = arith.constant 0 : index
    %c0_31 = arith.constant 0 : index
    %76 = vector.load %arg1[%c2_29, %c0_30, %c0_31] : memref<8x2x96xf32, #tpu.memory_space<vmem>>, vector<1x2x96xf32>
    %77 = vector.shape_cast %76 : vector<1x2x96xf32> to vector<2x96xf32>
    %cst_32 = arith.constant dense<0.000000e+00> : vector<2x96xf32>
    %78 = tpu.matmul %74, %3, %cst_32 {dimension_numbers = #tpu.dot_dimension_numbers<[1], [0], [0], [1], [0, 0, 1, 1], [], []>} : vector<2x32xf32>, vector<32x96xf32>, vector<2x96xf32> -> vector<2x96xf32>
    %79 = vector.extract_strided_slice %77 {offsets = [0, 0], sizes = [2, 32], strides = [1, 1]} : vector<2x96xf32> to vector<2x32xf32>
    %80 = vector.extract_strided_slice %78 {offsets = [0, 0], sizes = [2, 32], strides = [1, 1]} : vector<2x96xf32> to vector<2x32xf32>
    %81 = arith.addf %79, %80 : vector<2x32xf32>
    %82 = arith.negf %81 : vector<2x32xf32>
    %83 = math.exp %82 : vector<2x32xf32>
    %cst_33 = arith.constant 1.000000e+00 : f32
    %84 = vector.broadcast %cst_33 : f32 to vector<2x32xf32>
    %85 = arith.addf %84, %83 : vector<2x32xf32>
    %86 = arith.divf %84, %85 : vector<2x32xf32>
    %87 = vector.extract_strided_slice %77 {offsets = [0, 32], sizes = [2, 32], strides = [1, 1]} : vector<2x96xf32> to vector<2x32xf32>
    %88 = vector.extract_strided_slice %78 {offsets = [0, 32], sizes = [2, 32], strides = [1, 1]} : vector<2x96xf32> to vector<2x32xf32>
    %89 = arith.addf %87, %88 : vector<2x32xf32>
    %90 = arith.negf %89 : vector<2x32xf32>
    %91 = math.exp %90 : vector<2x32xf32>
    %cst_34 = arith.constant 1.000000e+00 : f32
    %92 = vector.broadcast %cst_34 : f32 to vector<2x32xf32>
    %93 = arith.addf %92, %91 : vector<2x32xf32>
    %94 = arith.divf %92, %93 : vector<2x32xf32>
    %95 = vector.extract_strided_slice %77 {offsets = [0, 64], sizes = [2, 32], strides = [1, 1]} : vector<2x96xf32> to vector<2x32xf32>
    %96 = vector.extract_strided_slice %78 {offsets = [0, 64], sizes = [2, 32], strides = [1, 1]} : vector<2x96xf32> to vector<2x32xf32>
    %97 = arith.addf %96, %8 : vector<2x32xf32>
    %98 = arith.mulf %86, %97 : vector<2x32xf32>
    %99 = arith.addf %95, %98 : vector<2x32xf32>
    %100 = math.tanh %99 : vector<2x32xf32>
    %cst_35 = arith.constant 1.000000e+00 : f32
    %101 = vector.broadcast %cst_35 : f32 to vector<2x32xf32>
    %102 = arith.subf %101, %94 : vector<2x32xf32>
    %103 = arith.mulf %102, %100 : vector<2x32xf32>
    %104 = arith.mulf %94, %74 : vector<2x32xf32>
    %105 = arith.addf %103, %104 : vector<2x32xf32>
    %c4 = arith.constant 4 : index
    %c0_36 = arith.constant 0 : index
    %106 = vector.load %arg15[%c4, %c0_36] : memref<16x32xf32, #tpu.memory_space<vmem>>, vector<2x32xf32>
    tpu.vector_store %arg15[%c4, %c0_36], %105 {strides = array<i32>} : memref<16x32xf32, #tpu.memory_space<vmem>>, vector<2x32xf32>,
    %c3 = arith.constant 3 : index
    %c0_37 = arith.constant 0 : index
    %c0_38 = arith.constant 0 : index
    %107 = vector.load %arg1[%c3, %c0_37, %c0_38] : memref<8x2x96xf32, #tpu.memory_space<vmem>>, vector<1x2x96xf32>
    %108 = vector.shape_cast %107 : vector<1x2x96xf32> to vector<2x96xf32>
    %cst_39 = arith.constant dense<0.000000e+00> : vector<2x96xf32>
    %109 = tpu.matmul %105, %3, %cst_39 {dimension_numbers = #tpu.dot_dimension_numbers<[1], [0], [0], [1], [0, 0, 1, 1], [], []>} : vector<2x32xf32>, vector<32x96xf32>, vector<2x96xf32> -> vector<2x96xf32>
    %110 = vector.extract_strided_slice %108 {offsets = [0, 0], sizes = [2, 32], strides = [1, 1]} : vector<2x96xf32> to vector<2x32xf32>
    %111 = vector.extract_strided_slice %109 {offsets = [0, 0], sizes = [2, 32], strides = [1, 1]} : vector<2x96xf32> to vector<2x32xf32>
    %112 = arith.addf %110, %111 : vector<2x32xf32>
    %113 = arith.negf %112 : vector<2x32xf32>
    %114 = math.exp %113 : vector<2x32xf32>
    %cst_40 = arith.constant 1.000000e+00 : f32
    %115 = vector.broadcast %cst_40 : f32 to vector<2x32xf32>
    %116 = arith.addf %115, %114 : vector<2x32xf32>
    %117 = arith.divf %115, %116 : vector<2x32xf32>
    %118 = vector.extract_strided_slice %108 {offsets = [0, 32], sizes = [2, 32], strides = [1, 1]} : vector<2x96xf32> to vector<2x32xf32>
    %119 = vector.extract_strided_slice %109 {offsets = [0, 32], sizes = [2, 32], strides = [1, 1]} : vector<2x96xf32> to vector<2x32xf32>
    %120 = arith.addf %118, %119 : vector<2x32xf32>
    %121 = arith.negf %120 : vector<2x32xf32>
    %122 = math.exp %121 : vector<2x32xf32>
    %cst_41 = arith.constant 1.000000e+00 : f32
    %123 = vector.broadcast %cst_41 : f32 to vector<2x32xf32>
    %124 = arith.addf %123, %122 : vector<2x32xf32>
    %125 = arith.divf %123, %124 : vector<2x32xf32>
    %126 = vector.extract_strided_slice %108 {offsets = [0, 64], sizes = [2, 32], strides = [1, 1]} : vector<2x96xf32> to vector<2x32xf32>
    %127 = vector.extract_strided_slice %109 {offsets = [0, 64], sizes = [2, 32], strides = [1, 1]} : vector<2x96xf32> to vector<2x32xf32>
    %128 = arith.addf %127, %8 : vector<2x32xf32>
    %129 = arith.mulf %117, %128 : vector<2x32xf32>
    %130 = arith.addf %126, %129 : vector<2x32xf32>
    %131 = math.tanh %130 : vector<2x32xf32>
    %cst_42 = arith.constant 1.000000e+00 : f32
    %132 = vector.broadcast %cst_42 : f32 to vector<2x32xf32>
    %133 = arith.subf %132, %125 : vector<2x32xf32>
    %134 = arith.mulf %133, %131 : vector<2x32xf32>
    %135 = arith.mulf %125, %105 : vector<2x32xf32>
    %136 = arith.addf %134, %135 : vector<2x32xf32>
    %c6 = arith.constant 6 : index
    %c0_43 = arith.constant 0 : index
    %137 = vector.load %arg15[%c6, %c0_43] : memref<16x32xf32, #tpu.memory_space<vmem>>, vector<2x32xf32>
    tpu.vector_store %arg15[%c6, %c0_43], %136 {strides = array<i32>} : memref<16x32xf32, #tpu.memory_space<vmem>>, vector<2x32xf32>,
    %c4_44 = arith.constant 4 : index
    %c0_45 = arith.constant 0 : index
    %c0_46 = arith.constant 0 : index
    %138 = vector.load %arg1[%c4_44, %c0_45, %c0_46] : memref<8x2x96xf32, #tpu.memory_space<vmem>>, vector<1x2x96xf32>
    %139 = vector.shape_cast %138 : vector<1x2x96xf32> to vector<2x96xf32>
    %cst_47 = arith.constant dense<0.000000e+00> : vector<2x96xf32>
    %140 = tpu.matmul %136, %3, %cst_47 {dimension_numbers = #tpu.dot_dimension_numbers<[1], [0], [0], [1], [0, 0, 1, 1], [], []>} : vector<2x32xf32>, vector<32x96xf32>, vector<2x96xf32> -> vector<2x96xf32>
    %141 = vector.extract_strided_slice %139 {offsets = [0, 0], sizes = [2, 32], strides = [1, 1]} : vector<2x96xf32> to vector<2x32xf32>
    %142 = vector.extract_strided_slice %140 {offsets = [0, 0], sizes = [2, 32], strides = [1, 1]} : vector<2x96xf32> to vector<2x32xf32>
    %143 = arith.addf %141, %142 : vector<2x32xf32>
    %144 = arith.negf %143 : vector<2x32xf32>
    %145 = math.exp %144 : vector<2x32xf32>
    %cst_48 = arith.constant 1.000000e+00 : f32
    %146 = vector.broadcast %cst_48 : f32 to vector<2x32xf32>
    %147 = arith.addf %146, %145 : vector<2x32xf32>
    %148 = arith.divf %146, %147 : vector<2x32xf32>
    %149 = vector.extract_strided_slice %139 {offsets = [0, 32], sizes = [2, 32], strides = [1, 1]} : vector<2x96xf32> to vector<2x32xf32>
    %150 = vector.extract_strided_slice %140 {offsets = [0, 32], sizes = [2, 32], strides = [1, 1]} : vector<2x96xf32> to vector<2x32xf32>
    %151 = arith.addf %149, %150 : vector<2x32xf32>
    %152 = arith.negf %151 : vector<2x32xf32>
    %153 = math.exp %152 : vector<2x32xf32>
    %cst_49 = arith.constant 1.000000e+00 : f32
    %154 = vector.broadcast %cst_49 : f32 to vector<2x32xf32>
    %155 = arith.addf %154, %153 : vector<2x32xf32>
    %156 = arith.divf %154, %155 : vector<2x32xf32>
    %157 = vector.extract_strided_slice %139 {offsets = [0, 64], sizes = [2, 32], strides = [1, 1]} : vector<2x96xf32> to vector<2x32xf32>
    %158 = vector.extract_strided_slice %140 {offsets = [0, 64], sizes = [2, 32], strides = [1, 1]} : vector<2x96xf32> to vector<2x32xf32>
    %159 = arith.addf %158, %8 : vector<2x32xf32>
    %160 = arith.mulf %148, %159 : vector<2x32xf32>
    %161 = arith.addf %157, %160 : vector<2x32xf32>
    %162 = math.tanh %161 : vector<2x32xf32>
    %cst_50 = arith.constant 1.000000e+00 : f32
    %163 = vector.broadcast %cst_50 : f32 to vector<2x32xf32>
    %164 = arith.subf %163, %156 : vector<2x32xf32>
    %165 = arith.mulf %164, %162 : vector<2x32xf32>
    %166 = arith.mulf %156, %136 : vector<2x32xf32>
    %167 = arith.addf %165, %166 : vector<2x32xf32>
    %c8 = arith.constant 8 : index
    %c0_51 = arith.constant 0 : index
    %168 = vector.load %arg15[%c8, %c0_51] : memref<16x32xf32, #tpu.memory_space<vmem>>, vector<2x32xf32>
    tpu.vector_store %arg15[%c8, %c0_51], %167 {strides = array<i32>} : memref<16x32xf32, #tpu.memory_space<vmem>>, vector<2x32xf32>,
    %c5 = arith.constant 5 : index
    %c0_52 = arith.constant 0 : index
    %c0_53 = arith.constant 0 : index
    %169 = vector.load %arg1[%c5, %c0_52, %c0_53] : memref<8x2x96xf32, #tpu.memory_space<vmem>>, vector<1x2x96xf32>
    %170 = vector.shape_cast %169 : vector<1x2x96xf32> to vector<2x96xf32>
    %cst_54 = arith.constant dense<0.000000e+00> : vector<2x96xf32>
    %171 = tpu.matmul %167, %3, %cst_54 {dimension_numbers = #tpu.dot_dimension_numbers<[1], [0], [0], [1], [0, 0, 1, 1], [], []>} : vector<2x32xf32>, vector<32x96xf32>, vector<2x96xf32> -> vector<2x96xf32>
    %172 = vector.extract_strided_slice %170 {offsets = [0, 0], sizes = [2, 32], strides = [1, 1]} : vector<2x96xf32> to vector<2x32xf32>
    %173 = vector.extract_strided_slice %171 {offsets = [0, 0], sizes = [2, 32], strides = [1, 1]} : vector<2x96xf32> to vector<2x32xf32>
    %174 = arith.addf %172, %173 : vector<2x32xf32>
    %175 = arith.negf %174 : vector<2x32xf32>
    %176 = math.exp %175 : vector<2x32xf32>
    %cst_55 = arith.constant 1.000000e+00 : f32
    %177 = vector.broadcast %cst_55 : f32 to vector<2x32xf32>
    %178 = arith.addf %177, %176 : vector<2x32xf32>
    %179 = arith.divf %177, %178 : vector<2x32xf32>
    %180 = vector.extract_strided_slice %170 {offsets = [0, 32], sizes = [2, 32], strides = [1, 1]} : vector<2x96xf32> to vector<2x32xf32>
    %181 = vector.extract_strided_slice %171 {offsets = [0, 32], sizes = [2, 32], strides = [1, 1]} : vector<2x96xf32> to vector<2x32xf32>
    %182 = arith.addf %180, %181 : vector<2x32xf32>
    %183 = arith.negf %182 : vector<2x32xf32>
    %184 = math.exp %183 : vector<2x32xf32>
    %cst_56 = arith.constant 1.000000e+00 : f32
    %185 = vector.broadcast %cst_56 : f32 to vector<2x32xf32>
    %186 = arith.addf %185, %184 : vector<2x32xf32>
    %187 = arith.divf %185, %186 : vector<2x32xf32>
    %188 = vector.extract_strided_slice %170 {offsets = [0, 64], sizes = [2, 32], strides = [1, 1]} : vector<2x96xf32> to vector<2x32xf32>
    %189 = vector.extract_strided_slice %171 {offsets = [0, 64], sizes = [2, 32], strides = [1, 1]} : vector<2x96xf32> to vector<2x32xf32>
    %190 = arith.addf %189, %8 : vector<2x32xf32>
    %191 = arith.mulf %179, %190 : vector<2x32xf32>
    %192 = arith.addf %188, %191 : vector<2x32xf32>
    %193 = math.tanh %192 : vector<2x32xf32>
    %cst_57 = arith.constant 1.000000e+00 : f32
    %194 = vector.broadcast %cst_57 : f32 to vector<2x32xf32>
    %195 = arith.subf %194, %187 : vector<2x32xf32>
    %196 = arith.mulf %195, %193 : vector<2x32xf32>
    %197 = arith.mulf %187, %167 : vector<2x32xf32>
    %198 = arith.addf %196, %197 : vector<2x32xf32>
    %c10 = arith.constant 10 : index
    %c0_58 = arith.constant 0 : index
    %199 = vector.load %arg15[%c10, %c0_58] : memref<16x32xf32, #tpu.memory_space<vmem>>, vector<2x32xf32>
    tpu.vector_store %arg15[%c10, %c0_58], %198 {strides = array<i32>} : memref<16x32xf32, #tpu.memory_space<vmem>>, vector<2x32xf32>,
    %c6_59 = arith.constant 6 : index
    %c0_60 = arith.constant 0 : index
    %c0_61 = arith.constant 0 : index
    %200 = vector.load %arg1[%c6_59, %c0_60, %c0_61] : memref<8x2x96xf32, #tpu.memory_space<vmem>>, vector<1x2x96xf32>
    %201 = vector.shape_cast %200 : vector<1x2x96xf32> to vector<2x96xf32>
    %cst_62 = arith.constant dense<0.000000e+00> : vector<2x96xf32>
    %202 = tpu.matmul %198, %3, %cst_62 {dimension_numbers = #tpu.dot_dimension_numbers<[1], [0], [0], [1], [0, 0, 1, 1], [], []>} : vector<2x32xf32>, vector<32x96xf32>, vector<2x96xf32> -> vector<2x96xf32>
    %203 = vector.extract_strided_slice %201 {offsets = [0, 0], sizes = [2, 32], strides = [1, 1]} : vector<2x96xf32> to vector<2x32xf32>
    %204 = vector.extract_strided_slice %202 {offsets = [0, 0], sizes = [2, 32], strides = [1, 1]} : vector<2x96xf32> to vector<2x32xf32>
    %205 = arith.addf %203, %204 : vector<2x32xf32>
    %206 = arith.negf %205 : vector<2x32xf32>
    %207 = math.exp %206 : vector<2x32xf32>
    %cst_63 = arith.constant 1.000000e+00 : f32
    %208 = vector.broadcast %cst_63 : f32 to vector<2x32xf32>
    %209 = arith.addf %208, %207 : vector<2x32xf32>
    %210 = arith.divf %208, %209 : vector<2x32xf32>
    %211 = vector.extract_strided_slice %201 {offsets = [0, 32], sizes = [2, 32], strides = [1, 1]} : vector<2x96xf32> to vector<2x32xf32>
    %212 = vector.extract_strided_slice %202 {offsets = [0, 32], sizes = [2, 32], strides = [1, 1]} : vector<2x96xf32> to vector<2x32xf32>
    %213 = arith.addf %211, %212 : vector<2x32xf32>
    %214 = arith.negf %213 : vector<2x32xf32>
    %215 = math.exp %214 : vector<2x32xf32>
    %cst_64 = arith.constant 1.000000e+00 : f32
    %216 = vector.broadcast %cst_64 : f32 to vector<2x32xf32>
    %217 = arith.addf %216, %215 : vector<2x32xf32>
    %218 = arith.divf %216, %217 : vector<2x32xf32>
    %219 = vector.extract_strided_slice %201 {offsets = [0, 64], sizes = [2, 32], strides = [1, 1]} : vector<2x96xf32> to vector<2x32xf32>
    %220 = vector.extract_strided_slice %202 {offsets = [0, 64], sizes = [2, 32], strides = [1, 1]} : vector<2x96xf32> to vector<2x32xf32>
    %221 = arith.addf %220, %8 : vector<2x32xf32>
    %222 = arith.mulf %210, %221 : vector<2x32xf32>
    %223 = arith.addf %219, %222 : vector<2x32xf32>
    %224 = math.tanh %223 : vector<2x32xf32>
    %cst_65 = arith.constant 1.000000e+00 : f32
    %225 = vector.broadcast %cst_65 : f32 to vector<2x32xf32>
    %226 = arith.subf %225, %218 : vector<2x32xf32>
    %227 = arith.mulf %226, %224 : vector<2x32xf32>
    %228 = arith.mulf %218, %198 : vector<2x32xf32>
    %229 = arith.addf %227, %228 : vector<2x32xf32>
    %c12 = arith.constant 12 : index
    %c0_66 = arith.constant 0 : index
    %230 = vector.load %arg15[%c12, %c0_66] : memref<16x32xf32, #tpu.memory_space<vmem>>, vector<2x32xf32>
    tpu.vector_store %arg15[%c12, %c0_66], %229 {strides = array<i32>} : memref<16x32xf32, #tpu.memory_space<vmem>>, vector<2x32xf32>,
    %c7 = arith.constant 7 : index
    %c0_67 = arith.constant 0 : index
    %c0_68 = arith.constant 0 : index
    %231 = vector.load %arg1[%c7, %c0_67, %c0_68] : memref<8x2x96xf32, #tpu.memory_space<vmem>>, vector<1x2x96xf32>
    %232 = vector.shape_cast %231 : vector<1x2x96xf32> to vector<2x96xf32>
    %cst_69 = arith.constant dense<0.000000e+00> : vector<2x96xf32>
    %233 = tpu.matmul %229, %3, %cst_69 {dimension_numbers = #tpu.dot_dimension_numbers<[1], [0], [0], [1], [0, 0, 1, 1], [], []>} : vector<2x32xf32>, vector<32x96xf32>, vector<2x96xf32> -> vector<2x96xf32>
    %234 = vector.extract_strided_slice %232 {offsets = [0, 0], sizes = [2, 32], strides = [1, 1]} : vector<2x96xf32> to vector<2x32xf32>
    %235 = vector.extract_strided_slice %233 {offsets = [0, 0], sizes = [2, 32], strides = [1, 1]} : vector<2x96xf32> to vector<2x32xf32>
    %236 = arith.addf %234, %235 : vector<2x32xf32>
    %237 = arith.negf %236 : vector<2x32xf32>
    %238 = math.exp %237 : vector<2x32xf32>
    %cst_70 = arith.constant 1.000000e+00 : f32
    %239 = vector.broadcast %cst_70 : f32 to vector<2x32xf32>
    %240 = arith.addf %239, %238 : vector<2x32xf32>
    %241 = arith.divf %239, %240 : vector<2x32xf32>
    %242 = vector.extract_strided_slice %232 {offsets = [0, 32], sizes = [2, 32], strides = [1, 1]} : vector<2x96xf32> to vector<2x32xf32>
    %243 = vector.extract_strided_slice %233 {offsets = [0, 32], sizes = [2, 32], strides = [1, 1]} : vector<2x96xf32> to vector<2x32xf32>
    %244 = arith.addf %242, %243 : vector<2x32xf32>
    %245 = arith.negf %244 : vector<2x32xf32>
    %246 = math.exp %245 : vector<2x32xf32>
    %cst_71 = arith.constant 1.000000e+00 : f32
    %247 = vector.broadcast %cst_71 : f32 to vector<2x32xf32>
    %248 = arith.addf %247, %246 : vector<2x32xf32>
    %249 = arith.divf %247, %248 : vector<2x32xf32>
    %250 = vector.extract_strided_slice %232 {offsets = [0, 64], sizes = [2, 32], strides = [1, 1]} : vector<2x96xf32> to vector<2x32xf32>
    %251 = vector.extract_strided_slice %233 {offsets = [0, 64], sizes = [2, 32], strides = [1, 1]} : vector<2x96xf32> to vector<2x32xf32>
    %252 = arith.addf %251, %8 : vector<2x32xf32>
    %253 = arith.mulf %241, %252 : vector<2x32xf32>
    %254 = arith.addf %250, %253 : vector<2x32xf32>
    %255 = math.tanh %254 : vector<2x32xf32>
    %cst_72 = arith.constant 1.000000e+00 : f32
    %256 = vector.broadcast %cst_72 : f32 to vector<2x32xf32>
    %257 = arith.subf %256, %249 : vector<2x32xf32>
    %258 = arith.mulf %257, %255 : vector<2x32xf32>
    %259 = arith.mulf %249, %229 : vector<2x32xf32>
    %260 = arith.addf %258, %259 : vector<2x32xf32>
    %c14 = arith.constant 14 : index
    %c0_73 = arith.constant 0 : index
    %261 = vector.load %arg15[%c14, %c0_73] : memref<16x32xf32, #tpu.memory_space<vmem>>, vector<2x32xf32>
    tpu.vector_store %arg15[%c14, %c0_73], %260 {strides = array<i32>} : memref<16x32xf32, #tpu.memory_space<vmem>>, vector<2x32xf32>,
    %c0_74 = arith.constant 0 : index
    %c0_75 = arith.constant 0 : index
    %262 = vector.load %arg13[%c0_74, %c0_75] : memref<2x32xf32, #tpu.memory_space<vmem>>, vector<2x32xf32>
    tpu.vector_store %arg13[%c0_74, %c0_75], %260 {strides = array<i32>} : memref<2x32xf32, #tpu.memory_space<vmem>>, vector<2x32xf32>,
    %c0_76 = arith.constant 0 : index
    %c0_77 = arith.constant 0 : index
    %263 = vector.load %arg15[%c0_76, %c0_77] : memref<16x32xf32, #tpu.memory_space<vmem>>, vector<16x32xf32>
    %cst_78 = arith.constant dense<0.000000e+00> : vector<16x96xf32>
    %264 = tpu.matmul %263, %4, %cst_78 {dimension_numbers = #tpu.dot_dimension_numbers<[1], [0], [0], [1], [0, 0, 1, 1], [], []>} : vector<16x32xf32>, vector<32x96xf32>, vector<16x96xf32> -> vector<16x96xf32>
    %265 = vector.broadcast %12 : vector<1x96xf32> to vector<16x96xf32>
    %266 = arith.addf %264, %265 : vector<16x96xf32>
    %c0_79 = arith.constant 0 : index
    %c0_80 = arith.constant 0 : index
    %267 = vector.load %arg14[%c0_79, %c0_80] : memref<2x32xf32, #tpu.memory_space<vmem>>, vector<2x32xf32>
    %268 = vector.extract_strided_slice %266 {offsets = [0, 0], sizes = [2, 96], strides = [1, 1]} : vector<16x96xf32> to vector<2x96xf32>
    %cst_81 = arith.constant dense<0.000000e+00> : vector<2x96xf32>
    %269 = tpu.matmul %267, %5, %cst_81 {dimension_numbers = #tpu.dot_dimension_numbers<[1], [0], [0], [1], [0, 0, 1, 1], [], []>} : vector<2x32xf32>, vector<32x96xf32>, vector<2x96xf32> -> vector<2x96xf32>
    %270 = vector.extract_strided_slice %268 {offsets = [0, 0], sizes = [2, 32], strides = [1, 1]} : vector<2x96xf32> to vector<2x32xf32>
    %271 = vector.extract_strided_slice %269 {offsets = [0, 0], sizes = [2, 32], strides = [1, 1]} : vector<2x96xf32> to vector<2x32xf32>
    %272 = arith.addf %270, %271 : vector<2x32xf32>
    %273 = arith.negf %272 : vector<2x32xf32>
    %274 = math.exp %273 : vector<2x32xf32>
    %cst_82 = arith.constant 1.000000e+00 : f32
    %275 = vector.broadcast %cst_82 : f32 to vector<2x32xf32>
    %276 = arith.addf %275, %274 : vector<2x32xf32>
    %277 = arith.divf %275, %276 : vector<2x32xf32>
    %278 = vector.extract_strided_slice %268 {offsets = [0, 32], sizes = [2, 32], strides = [1, 1]} : vector<2x96xf32> to vector<2x32xf32>
    %279 = vector.extract_strided_slice %269 {offsets = [0, 32], sizes = [2, 32], strides = [1, 1]} : vector<2x96xf32> to vector<2x32xf32>
    %280 = arith.addf %278, %279 : vector<2x32xf32>
    %281 = arith.negf %280 : vector<2x32xf32>
    %282 = math.exp %281 : vector<2x32xf32>
    %cst_83 = arith.constant 1.000000e+00 : f32
    %283 = vector.broadcast %cst_83 : f32 to vector<2x32xf32>
    %284 = arith.addf %283, %282 : vector<2x32xf32>
    %285 = arith.divf %283, %284 : vector<2x32xf32>
    %286 = vector.extract_strided_slice %268 {offsets = [0, 64], sizes = [2, 32], strides = [1, 1]} : vector<2x96xf32> to vector<2x32xf32>
    %287 = vector.extract_strided_slice %269 {offsets = [0, 64], sizes = [2, 32], strides = [1, 1]} : vector<2x96xf32> to vector<2x32xf32>
    %288 = arith.addf %287, %11 : vector<2x32xf32>
    %289 = arith.mulf %277, %288 : vector<2x32xf32>
    %290 = arith.addf %286, %289 : vector<2x32xf32>
    %291 = math.tanh %290 : vector<2x32xf32>
    %cst_84 = arith.constant 1.000000e+00 : f32
    %292 = vector.broadcast %cst_84 : f32 to vector<2x32xf32>
    %293 = arith.subf %292, %285 : vector<2x32xf32>
    %294 = arith.mulf %293, %291 : vector<2x32xf32>
    %295 = arith.mulf %285, %267 : vector<2x32xf32>
    %296 = arith.addf %294, %295 : vector<2x32xf32>
    %297 = vector.extract_strided_slice %266 {offsets = [2, 0], sizes = [2, 96], strides = [1, 1]} : vector<16x96xf32> to vector<2x96xf32>
    %cst_85 = arith.constant dense<0.000000e+00> : vector<2x96xf32>
    %298 = tpu.matmul %296, %5, %cst_85 {dimension_numbers = #tpu.dot_dimension_numbers<[1], [0], [0], [1], [0, 0, 1, 1], [], []>} : vector<2x32xf32>, vector<32x96xf32>, vector<2x96xf32> -> vector<2x96xf32>
    %299 = vector.extract_strided_slice %297 {offsets = [0, 0], sizes = [2, 32], strides = [1, 1]} : vector<2x96xf32> to vector<2x32xf32>
    %300 = vector.extract_strided_slice %298 {offsets = [0, 0], sizes = [2, 32], strides = [1, 1]} : vector<2x96xf32> to vector<2x32xf32>
    %301 = arith.addf %299, %300 : vector<2x32xf32>
    %302 = arith.negf %301 : vector<2x32xf32>
    %303 = math.exp %302 : vector<2x32xf32>
    %cst_86 = arith.constant 1.000000e+00 : f32
    %304 = vector.broadcast %cst_86 : f32 to vector<2x32xf32>
    %305 = arith.addf %304, %303 : vector<2x32xf32>
    %306 = arith.divf %304, %305 : vector<2x32xf32>
    %307 = vector.extract_strided_slice %297 {offsets = [0, 32], sizes = [2, 32], strides = [1, 1]} : vector<2x96xf32> to vector<2x32xf32>
    %308 = vector.extract_strided_slice %298 {offsets = [0, 32], sizes = [2, 32], strides = [1, 1]} : vector<2x96xf32> to vector<2x32xf32>
    %309 = arith.addf %307, %308 : vector<2x32xf32>
    %310 = arith.negf %309 : vector<2x32xf32>
    %311 = math.exp %310 : vector<2x32xf32>
    %cst_87 = arith.constant 1.000000e+00 : f32
    %312 = vector.broadcast %cst_87 : f32 to vector<2x32xf32>
    %313 = arith.addf %312, %311 : vector<2x32xf32>
    %314 = arith.divf %312, %313 : vector<2x32xf32>
    %315 = vector.extract_strided_slice %297 {offsets = [0, 64], sizes = [2, 32], strides = [1, 1]} : vector<2x96xf32> to vector<2x32xf32>
    %316 = vector.extract_strided_slice %298 {offsets = [0, 64], sizes = [2, 32], strides = [1, 1]} : vector<2x96xf32> to vector<2x32xf32>
    %317 = arith.addf %316, %11 : vector<2x32xf32>
    %318 = arith.mulf %306, %317 : vector<2x32xf32>
    %319 = arith.addf %315, %318 : vector<2x32xf32>
    %320 = math.tanh %319 : vector<2x32xf32>
    %cst_88 = arith.constant 1.000000e+00 : f32
    %321 = vector.broadcast %cst_88 : f32 to vector<2x32xf32>
    %322 = arith.subf %321, %314 : vector<2x32xf32>
    %323 = arith.mulf %322, %320 : vector<2x32xf32>
    %324 = arith.mulf %314, %296 : vector<2x32xf32>
    %325 = arith.addf %323, %324 : vector<2x32xf32>
    %326 = vector.extract_strided_slice %266 {offsets = [4, 0], sizes = [2, 96], strides = [1, 1]} : vector<16x96xf32> to vector<2x96xf32>
    %cst_89 = arith.constant dense<0.000000e+00> : vector<2x96xf32>
    %327 = tpu.matmul %325, %5, %cst_89 {dimension_numbers = #tpu.dot_dimension_numbers<[1], [0], [0], [1], [0, 0, 1, 1], [], []>} : vector<2x32xf32>, vector<32x96xf32>, vector<2x96xf32> -> vector<2x96xf32>
    %328 = vector.extract_strided_slice %326 {offsets = [0, 0], sizes = [2, 32], strides = [1, 1]} : vector<2x96xf32> to vector<2x32xf32>
    %329 = vector.extract_strided_slice %327 {offsets = [0, 0], sizes = [2, 32], strides = [1, 1]} : vector<2x96xf32> to vector<2x32xf32>
    %330 = arith.addf %328, %329 : vector<2x32xf32>
    %331 = arith.negf %330 : vector<2x32xf32>
    %332 = math.exp %331 : vector<2x32xf32>
    %cst_90 = arith.constant 1.000000e+00 : f32
    %333 = vector.broadcast %cst_90 : f32 to vector<2x32xf32>
    %334 = arith.addf %333, %332 : vector<2x32xf32>
    %335 = arith.divf %333, %334 : vector<2x32xf32>
    %336 = vector.extract_strided_slice %326 {offsets = [0, 32], sizes = [2, 32], strides = [1, 1]} : vector<2x96xf32> to vector<2x32xf32>
    %337 = vector.extract_strided_slice %327 {offsets = [0, 32], sizes = [2, 32], strides = [1, 1]} : vector<2x96xf32> to vector<2x32xf32>
    %338 = arith.addf %336, %337 : vector<2x32xf32>
    %339 = arith.negf %338 : vector<2x32xf32>
    %340 = math.exp %339 : vector<2x32xf32>
    %cst_91 = arith.constant 1.000000e+00 : f32
    %341 = vector.broadcast %cst_91 : f32 to vector<2x32xf32>
    %342 = arith.addf %341, %340 : vector<2x32xf32>
    %343 = arith.divf %341, %342 : vector<2x32xf32>
    %344 = vector.extract_strided_slice %326 {offsets = [0, 64], sizes = [2, 32], strides = [1, 1]} : vector<2x96xf32> to vector<2x32xf32>
    %345 = vector.extract_strided_slice %327 {offsets = [0, 64], sizes = [2, 32], strides = [1, 1]} : vector<2x96xf32> to vector<2x32xf32>
    %346 = arith.addf %345, %11 : vector<2x32xf32>
    %347 = arith.mulf %335, %346 : vector<2x32xf32>
    %348 = arith.addf %344, %347 : vector<2x32xf32>
    %349 = math.tanh %348 : vector<2x32xf32>
    %cst_92 = arith.constant 1.000000e+00 : f32
    %350 = vector.broadcast %cst_92 : f32 to vector<2x32xf32>
    %351 = arith.subf %350, %343 : vector<2x32xf32>
    %352 = arith.mulf %351, %349 : vector<2x32xf32>
    %353 = arith.mulf %343, %325 : vector<2x32xf32>
    %354 = arith.addf %352, %353 : vector<2x32xf32>
    %355 = vector.extract_strided_slice %266 {offsets = [6, 0], sizes = [2, 96], strides = [1, 1]} : vector<16x96xf32> to vector<2x96xf32>
    %cst_93 = arith.constant dense<0.000000e+00> : vector<2x96xf32>
    %356 = tpu.matmul %354, %5, %cst_93 {dimension_numbers = #tpu.dot_dimension_numbers<[1], [0], [0], [1], [0, 0, 1, 1], [], []>} : vector<2x32xf32>, vector<32x96xf32>, vector<2x96xf32> -> vector<2x96xf32>
    %357 = vector.extract_strided_slice %355 {offsets = [0, 0], sizes = [2, 32], strides = [1, 1]} : vector<2x96xf32> to vector<2x32xf32>
    %358 = vector.extract_strided_slice %356 {offsets = [0, 0], sizes = [2, 32], strides = [1, 1]} : vector<2x96xf32> to vector<2x32xf32>
    %359 = arith.addf %357, %358 : vector<2x32xf32>
    %360 = arith.negf %359 : vector<2x32xf32>
    %361 = math.exp %360 : vector<2x32xf32>
    %cst_94 = arith.constant 1.000000e+00 : f32
    %362 = vector.broadcast %cst_94 : f32 to vector<2x32xf32>
    %363 = arith.addf %362, %361 : vector<2x32xf32>
    %364 = arith.divf %362, %363 : vector<2x32xf32>
    %365 = vector.extract_strided_slice %355 {offsets = [0, 32], sizes = [2, 32], strides = [1, 1]} : vector<2x96xf32> to vector<2x32xf32>
    %366 = vector.extract_strided_slice %356 {offsets = [0, 32], sizes = [2, 32], strides = [1, 1]} : vector<2x96xf32> to vector<2x32xf32>
    %367 = arith.addf %365, %366 : vector<2x32xf32>
    %368 = arith.negf %367 : vector<2x32xf32>
    %369 = math.exp %368 : vector<2x32xf32>
    %cst_95 = arith.constant 1.000000e+00 : f32
    %370 = vector.broadcast %cst_95 : f32 to vector<2x32xf32>
    %371 = arith.addf %370, %369 : vector<2x32xf32>
    %372 = arith.divf %370, %371 : vector<2x32xf32>
    %373 = vector.extract_strided_slice %355 {offsets = [0, 64], sizes = [2, 32], strides = [1, 1]} : vector<2x96xf32> to vector<2x32xf32>
    %374 = vector.extract_strided_slice %356 {offsets = [0, 64], sizes = [2, 32], strides = [1, 1]} : vector<2x96xf32> to vector<2x32xf32>
    %375 = arith.addf %374, %11 : vector<2x32xf32>
    %376 = arith.mulf %364, %375 : vector<2x32xf32>
    %377 = arith.addf %373, %376 : vector<2x32xf32>
    %378 = math.tanh %377 : vector<2x32xf32>
    %cst_96 = arith.constant 1.000000e+00 : f32
    %379 = vector.broadcast %cst_96 : f32 to vector<2x32xf32>
    %380 = arith.subf %379, %372 : vector<2x32xf32>
    %381 = arith.mulf %380, %378 : vector<2x32xf32>
    %382 = arith.mulf %372, %354 : vector<2x32xf32>
    %383 = arith.addf %381, %382 : vector<2x32xf32>
    %384 = vector.extract_strided_slice %266 {offsets = [8, 0], sizes = [2, 96], strides = [1, 1]} : vector<16x96xf32> to vector<2x96xf32>
    %cst_97 = arith.constant dense<0.000000e+00> : vector<2x96xf32>
    %385 = tpu.matmul %383, %5, %cst_97 {dimension_numbers = #tpu.dot_dimension_numbers<[1], [0], [0], [1], [0, 0, 1, 1], [], []>} : vector<2x32xf32>, vector<32x96xf32>, vector<2x96xf32> -> vector<2x96xf32>
    %386 = vector.extract_strided_slice %384 {offsets = [0, 0], sizes = [2, 32], strides = [1, 1]} : vector<2x96xf32> to vector<2x32xf32>
    %387 = vector.extract_strided_slice %385 {offsets = [0, 0], sizes = [2, 32], strides = [1, 1]} : vector<2x96xf32> to vector<2x32xf32>
    %388 = arith.addf %386, %387 : vector<2x32xf32>
    %389 = arith.negf %388 : vector<2x32xf32>
    %390 = math.exp %389 : vector<2x32xf32>
    %cst_98 = arith.constant 1.000000e+00 : f32
    %391 = vector.broadcast %cst_98 : f32 to vector<2x32xf32>
    %392 = arith.addf %391, %390 : vector<2x32xf32>
    %393 = arith.divf %391, %392 : vector<2x32xf32>
    %394 = vector.extract_strided_slice %384 {offsets = [0, 32], sizes = [2, 32], strides = [1, 1]} : vector<2x96xf32> to vector<2x32xf32>
    %395 = vector.extract_strided_slice %385 {offsets = [0, 32], sizes = [2, 32], strides = [1, 1]} : vector<2x96xf32> to vector<2x32xf32>
    %396 = arith.addf %394, %395 : vector<2x32xf32>
    %397 = arith.negf %396 : vector<2x32xf32>
    %398 = math.exp %397 : vector<2x32xf32>
    %cst_99 = arith.constant 1.000000e+00 : f32
    %399 = vector.broadcast %cst_99 : f32 to vector<2x32xf32>
    %400 = arith.addf %399, %398 : vector<2x32xf32>
    %401 = arith.divf %399, %400 : vector<2x32xf32>
    %402 = vector.extract_strided_slice %384 {offsets = [0, 64], sizes = [2, 32], strides = [1, 1]} : vector<2x96xf32> to vector<2x32xf32>
    %403 = vector.extract_strided_slice %385 {offsets = [0, 64], sizes = [2, 32], strides = [1, 1]} : vector<2x96xf32> to vector<2x32xf32>
    %404 = arith.addf %403, %11 : vector<2x32xf32>
    %405 = arith.mulf %393, %404 : vector<2x32xf32>
    %406 = arith.addf %402, %405 : vector<2x32xf32>
    %407 = math.tanh %406 : vector<2x32xf32>
    %cst_100 = arith.constant 1.000000e+00 : f32
    %408 = vector.broadcast %cst_100 : f32 to vector<2x32xf32>
    %409 = arith.subf %408, %401 : vector<2x32xf32>
    %410 = arith.mulf %409, %407 : vector<2x32xf32>
    %411 = arith.mulf %401, %383 : vector<2x32xf32>
    %412 = arith.addf %410, %411 : vector<2x32xf32>
    %413 = vector.extract_strided_slice %266 {offsets = [10, 0], sizes = [2, 96], strides = [1, 1]} : vector<16x96xf32> to vector<2x96xf32>
    %cst_101 = arith.constant dense<0.000000e+00> : vector<2x96xf32>
    %414 = tpu.matmul %412, %5, %cst_101 {dimension_numbers = #tpu.dot_dimension_numbers<[1], [0], [0], [1], [0, 0, 1, 1], [], []>} : vector<2x32xf32>, vector<32x96xf32>, vector<2x96xf32> -> vector<2x96xf32>
    %415 = vector.extract_strided_slice %413 {offsets = [0, 0], sizes = [2, 32], strides = [1, 1]} : vector<2x96xf32> to vector<2x32xf32>
    %416 = vector.extract_strided_slice %414 {offsets = [0, 0], sizes = [2, 32], strides = [1, 1]} : vector<2x96xf32> to vector<2x32xf32>
    %417 = arith.addf %415, %416 : vector<2x32xf32>
    %418 = arith.negf %417 : vector<2x32xf32>
    %419 = math.exp %418 : vector<2x32xf32>
    %cst_102 = arith.constant 1.000000e+00 : f32
    %420 = vector.broadcast %cst_102 : f32 to vector<2x32xf32>
    %421 = arith.addf %420, %419 : vector<2x32xf32>
    %422 = arith.divf %420, %421 : vector<2x32xf32>
    %423 = vector.extract_strided_slice %413 {offsets = [0, 32], sizes = [2, 32], strides = [1, 1]} : vector<2x96xf32> to vector<2x32xf32>
    %424 = vector.extract_strided_slice %414 {offsets = [0, 32], sizes = [2, 32], strides = [1, 1]} : vector<2x96xf32> to vector<2x32xf32>
    %425 = arith.addf %423, %424 : vector<2x32xf32>
    %426 = arith.negf %425 : vector<2x32xf32>
    %427 = math.exp %426 : vector<2x32xf32>
    %cst_103 = arith.constant 1.000000e+00 : f32
    %428 = vector.broadcast %cst_103 : f32 to vector<2x32xf32>
    %429 = arith.addf %428, %427 : vector<2x32xf32>
    %430 = arith.divf %428, %429 : vector<2x32xf32>
    %431 = vector.extract_strided_slice %413 {offsets = [0, 64], sizes = [2, 32], strides = [1, 1]} : vector<2x96xf32> to vector<2x32xf32>
    %432 = vector.extract_strided_slice %414 {offsets = [0, 64], sizes = [2, 32], strides = [1, 1]} : vector<2x96xf32> to vector<2x32xf32>
    %433 = arith.addf %432, %11 : vector<2x32xf32>
    %434 = arith.mulf %422, %433 : vector<2x32xf32>
    %435 = arith.addf %431, %434 : vector<2x32xf32>
    %436 = math.tanh %435 : vector<2x32xf32>
    %cst_104 = arith.constant 1.000000e+00 : f32
    %437 = vector.broadcast %cst_104 : f32 to vector<2x32xf32>
    %438 = arith.subf %437, %430 : vector<2x32xf32>
    %439 = arith.mulf %438, %436 : vector<2x32xf32>
    %440 = arith.mulf %430, %412 : vector<2x32xf32>
    %441 = arith.addf %439, %440 : vector<2x32xf32>
    %442 = vector.extract_strided_slice %266 {offsets = [12, 0], sizes = [2, 96], strides = [1, 1]} : vector<16x96xf32> to vector<2x96xf32>
    %cst_105 = arith.constant dense<0.000000e+00> : vector<2x96xf32>
    %443 = tpu.matmul %441, %5, %cst_105 {dimension_numbers = #tpu.dot_dimension_numbers<[1], [0], [0], [1], [0, 0, 1, 1], [], []>} : vector<2x32xf32>, vector<32x96xf32>, vector<2x96xf32> -> vector<2x96xf32>
    %444 = vector.extract_strided_slice %442 {offsets = [0, 0], sizes = [2, 32], strides = [1, 1]} : vector<2x96xf32> to vector<2x32xf32>
    %445 = vector.extract_strided_slice %443 {offsets = [0, 0], sizes = [2, 32], strides = [1, 1]} : vector<2x96xf32> to vector<2x32xf32>
    %446 = arith.addf %444, %445 : vector<2x32xf32>
    %447 = arith.negf %446 : vector<2x32xf32>
    %448 = math.exp %447 : vector<2x32xf32>
    %cst_106 = arith.constant 1.000000e+00 : f32
    %449 = vector.broadcast %cst_106 : f32 to vector<2x32xf32>
    %450 = arith.addf %449, %448 : vector<2x32xf32>
    %451 = arith.divf %449, %450 : vector<2x32xf32>
    %452 = vector.extract_strided_slice %442 {offsets = [0, 32], sizes = [2, 32], strides = [1, 1]} : vector<2x96xf32> to vector<2x32xf32>
    %453 = vector.extract_strided_slice %443 {offsets = [0, 32], sizes = [2, 32], strides = [1, 1]} : vector<2x96xf32> to vector<2x32xf32>
    %454 = arith.addf %452, %453 : vector<2x32xf32>
    %455 = arith.negf %454 : vector<2x32xf32>
    %456 = math.exp %455 : vector<2x32xf32>
    %cst_107 = arith.constant 1.000000e+00 : f32
    %457 = vector.broadcast %cst_107 : f32 to vector<2x32xf32>
    %458 = arith.addf %457, %456 : vector<2x32xf32>
    %459 = arith.divf %457, %458 : vector<2x32xf32>
    %460 = vector.extract_strided_slice %442 {offsets = [0, 64], sizes = [2, 32], strides = [1, 1]} : vector<2x96xf32> to vector<2x32xf32>
    %461 = vector.extract_strided_slice %443 {offsets = [0, 64], sizes = [2, 32], strides = [1, 1]} : vector<2x96xf32> to vector<2x32xf32>
    %462 = arith.addf %461, %11 : vector<2x32xf32>
    %463 = arith.mulf %451, %462 : vector<2x32xf32>
    %464 = arith.addf %460, %463 : vector<2x32xf32>
    %465 = math.tanh %464 : vector<2x32xf32>
    %cst_108 = arith.constant 1.000000e+00 : f32
    %466 = vector.broadcast %cst_108 : f32 to vector<2x32xf32>
    %467 = arith.subf %466, %459 : vector<2x32xf32>
    %468 = arith.mulf %467, %465 : vector<2x32xf32>
    %469 = arith.mulf %459, %441 : vector<2x32xf32>
    %470 = arith.addf %468, %469 : vector<2x32xf32>
    %471 = vector.extract_strided_slice %266 {offsets = [14, 0], sizes = [2, 96], strides = [1, 1]} : vector<16x96xf32> to vector<2x96xf32>
    %cst_109 = arith.constant dense<0.000000e+00> : vector<2x96xf32>
    %472 = tpu.matmul %470, %5, %cst_109 {dimension_numbers = #tpu.dot_dimension_numbers<[1], [0], [0], [1], [0, 0, 1, 1], [], []>} : vector<2x32xf32>, vector<32x96xf32>, vector<2x96xf32> -> vector<2x96xf32>
    %473 = vector.extract_strided_slice %471 {offsets = [0, 0], sizes = [2, 32], strides = [1, 1]} : vector<2x96xf32> to vector<2x32xf32>
    %474 = vector.extract_strided_slice %472 {offsets = [0, 0], sizes = [2, 32], strides = [1, 1]} : vector<2x96xf32> to vector<2x32xf32>
    %475 = arith.addf %473, %474 : vector<2x32xf32>
    %476 = arith.negf %475 : vector<2x32xf32>
    %477 = math.exp %476 : vector<2x32xf32>
    %cst_110 = arith.constant 1.000000e+00 : f32
    %478 = vector.broadcast %cst_110 : f32 to vector<2x32xf32>
    %479 = arith.addf %478, %477 : vector<2x32xf32>
    %480 = arith.divf %478, %479 : vector<2x32xf32>
    %481 = vector.extract_strided_slice %471 {offsets = [0, 32], sizes = [2, 32], strides = [1, 1]} : vector<2x96xf32> to vector<2x32xf32>
    %482 = vector.extract_strided_slice %472 {offsets = [0, 32], sizes = [2, 32], strides = [1, 1]} : vector<2x96xf32> to vector<2x32xf32>
    %483 = arith.addf %481, %482 : vector<2x32xf32>
    %484 = arith.negf %483 : vector<2x32xf32>
    %485 = math.exp %484 : vector<2x32xf32>
    %cst_111 = arith.constant 1.000000e+00 : f32
    %486 = vector.broadcast %cst_111 : f32 to vector<2x32xf32>
    %487 = arith.addf %486, %485 : vector<2x32xf32>
    %488 = arith.divf %486, %487 : vector<2x32xf32>
    %489 = vector.extract_strided_slice %471 {offsets = [0, 64], sizes = [2, 32], strides = [1, 1]} : vector<2x96xf32> to vector<2x32xf32>
    %490 = vector.extract_strided_slice %472 {offsets = [0, 64], sizes = [2, 32], strides = [1, 1]} : vector<2x96xf32> to vector<2x32xf32>
    %491 = arith.addf %490, %11 : vector<2x32xf32>
    %492 = arith.mulf %480, %491 : vector<2x32xf32>
    %493 = arith.addf %489, %492 : vector<2x32xf32>
    %494 = math.tanh %493 : vector<2x32xf32>
    %cst_112 = arith.constant 1.000000e+00 : f32
    %495 = vector.broadcast %cst_112 : f32 to vector<2x32xf32>
    %496 = arith.subf %495, %488 : vector<2x32xf32>
    %497 = arith.mulf %496, %494 : vector<2x32xf32>
    %498 = arith.mulf %488, %470 : vector<2x32xf32>
    %499 = arith.addf %497, %498 : vector<2x32xf32>
    %c0_113 = arith.constant 0 : index
    %c0_114 = arith.constant 0 : index
    %500 = vector.load %arg14[%c0_113, %c0_114] : memref<2x32xf32, #tpu.memory_space<vmem>>, vector<2x32xf32>
    tpu.vector_store %arg14[%c0_113, %c0_114], %499 {strides = array<i32>} : memref<2x32xf32, #tpu.memory_space<vmem>>, vector<2x32xf32>,
    %c1_i32 = arith.constant 1 : i32
    %501 = arith.cmpi eq, %arg0, %c1_i32 : i32
    %502 = arith.extui %501 : i1 to i32
    %c0_i32_115 = arith.constant 0 : i32
    %503 = arith.cmpi ne, %502, %c0_i32_115 : i32
    scf.if %503 {
      %c0_116 = arith.constant 0 : index
      %c0_117 = arith.constant 0 : index
      %504 = vector.load %arg9[%c0_116, %c0_117] : memref<32x8xf32, #tpu.memory_space<vmem>>, vector<32x8xf32>
      %cst_118 = arith.constant dense<0.000000e+00> : vector<2x8xf32>
      %505 = tpu.matmul %499, %504, %cst_118 {dimension_numbers = #tpu.dot_dimension_numbers<[1], [0], [0], [1], [0, 0, 1, 1], [], []>} : vector<2x32xf32>, vector<32x8xf32>, vector<2x8xf32> -> vector<2x8xf32>
      %c0_119 = arith.constant 0 : index
      %c0_120 = arith.constant 0 : index
      %506 = vector.load %arg10[%c0_119, %c0_120] : memref<1x8xf32, #tpu.memory_space<vmem>>, vector<1x8xf32>
      %507 = vector.broadcast %506 : vector<1x8xf32> to vector<2x8xf32>
      %508 = arith.addf %505, %507 : vector<2x8xf32>
      %c0_121 = arith.constant 0 : index
      %c0_122 = arith.constant 0 : index
      %509 = vector.load %arg11[%c0_121, %c0_122] : memref<2x8xf32, #tpu.memory_space<vmem>>, vector<2x8xf32>
      tpu.vector_store %arg11[%c0_121, %c0_122], %508 {strides = array<i32>} : memref<2x8xf32, #tpu.memory_space<vmem>>, vector<2x8xf32>,
      %c0_123 = arith.constant 0 : index
      %c0_124 = arith.constant 0 : index
      %c0_125 = arith.constant 0 : index
      %510 = vector.load %arg12[%c0_123, %c0_124, %c0_125] : memref<2x2x32xf32, #tpu.memory_space<vmem>>, vector<1x2x32xf32>
      %511 = vector.shape_cast %510 : vector<1x2x32xf32> to vector<2x32xf32>
      %512 = vector.shape_cast %260 : vector<2x32xf32> to vector<1x2x32xf32>
      tpu.vector_store %arg12[%c0_123, %c0_124, %c0_125], %512 {strides = array<i32>} : memref<2x2x32xf32, #tpu.memory_space<vmem>>, vector<1x2x32xf32>,
      %c1_126 = arith.constant 1 : index
      %c0_127 = arith.constant 0 : index
      %c0_128 = arith.constant 0 : index
      %513 = vector.load %arg12[%c1_126, %c0_127, %c0_128] : memref<2x2x32xf32, #tpu.memory_space<vmem>>, vector<1x2x32xf32>
      %514 = vector.shape_cast %513 : vector<1x2x32xf32> to vector<2x32xf32>
      %515 = vector.shape_cast %499 : vector<2x32xf32> to vector<1x2x32xf32>
      tpu.vector_store %arg12[%c1_126, %c0_127, %c0_128], %515 {strides = array<i32>} : memref<2x2x32xf32, #tpu.memory_space<vmem>>, vector<1x2x32xf32>,
    } else {
    }
    return
  }
  func.func @transform_0(%arg0: i32) -> (i32, i32, i32) {
    %c0_i32 = arith.constant 0 : i32
    %c0_i32_0 = arith.constant 0 : i32
    %c0_i32_1 = arith.constant 0 : i32
    return %arg0, %c0_i32, %c0_i32_0 : i32, i32, i32
  }
  func.func @transform_1(%arg0: i32) -> (i32, i32, i32) {
    %c0_i32 = arith.constant 0 : i32
    %c0_i32_0 = arith.constant 0 : i32
    %c0_i32_1 = arith.constant 0 : i32
    %c0_i32_2 = arith.constant 0 : i32
    return %c0_i32, %c0_i32_0, %c0_i32_1 : i32, i32, i32
  }
  func.func @transform_2(%arg0: i32) -> (i32, i32) {
    %c0_i32 = arith.constant 0 : i32
    %c0_i32_0 = arith.constant 0 : i32
    %c0_i32_1 = arith.constant 0 : i32
    return %c0_i32, %c0_i32_0 : i32, i32
  }
  func.func @transform_3(%arg0: i32) -> (i32, i32) {
    %c0_i32 = arith.constant 0 : i32
    %c0_i32_0 = arith.constant 0 : i32
    %c0_i32_1 = arith.constant 0 : i32
    return %c0_i32, %c0_i32_0 : i32, i32
  }
  func.func @transform_4(%arg0: i32) -> (i32, i32) {
    %c0_i32 = arith.constant 0 : i32
    %c0_i32_0 = arith.constant 0 : i32
    %c0_i32_1 = arith.constant 0 : i32
    return %c0_i32, %c0_i32_0 : i32, i32
  }
  func.func @transform_5(%arg0: i32) -> (i32, i32) {
    %c0_i32 = arith.constant 0 : i32
    %c0_i32_0 = arith.constant 0 : i32
    %c0_i32_1 = arith.constant 0 : i32
    return %c0_i32, %c0_i32_0 : i32, i32
  }
  func.func @transform_6(%arg0: i32) -> (i32, i32) {
    %c0_i32 = arith.constant 0 : i32
    %c0_i32_0 = arith.constant 0 : i32
    %c0_i32_1 = arith.constant 0 : i32
    return %c0_i32, %c0_i32_0 : i32, i32
  }
  func.func @transform_7(%arg0: i32) -> (i32, i32) {
    %c0_i32 = arith.constant 0 : i32
    %c0_i32_0 = arith.constant 0 : i32
    %c0_i32_1 = arith.constant 0 : i32
    return %c0_i32, %c0_i32_0 : i32, i32
  }
  func.func @transform_8(%arg0: i32) -> (i32, i32) {
    %c0_i32 = arith.constant 0 : i32
    %c0_i32_0 = arith.constant 0 : i32
    %c0_i32_1 = arith.constant 0 : i32
    return %c0_i32, %c0_i32_0 : i32, i32
  }
  func.func @transform_9(%arg0: i32) -> (i32, i32) {
    %c0_i32 = arith.constant 0 : i32
    %c0_i32_0 = arith.constant 0 : i32
    %c0_i32_1 = arith.constant 0 : i32
    return %c0_i32, %c0_i32_0 : i32, i32
  }
  func.func @transform_10(%arg0: i32) -> (i32, i32) {
    %c0_i32 = arith.constant 0 : i32
    %c0_i32_0 = arith.constant 0 : i32
    %c0_i32_1 = arith.constant 0 : i32
    return %c0_i32, %c0_i32_0 : i32, i32
  }
  func.func @transform_11(%arg0: i32) -> (i32, i32, i32) {
    %c0_i32 = arith.constant 0 : i32
    %c0_i32_0 = arith.constant 0 : i32
    %c0_i32_1 = arith.constant 0 : i32
    %c0_i32_2 = arith.constant 0 : i32
    return %c0_i32, %c0_i32_0, %c0_i32_1 : i32, i32, i32
  }
}

</mosaic_0001>

<llo_original>
// kernel: char_gru_forward.1
$region0: #{char_gru_forward.1}
  #allocation0 [shape = 'u32[]', space=smem, size = 0x4, offset = 0x4, fixed_abs, tag = 'smem constant byte address 0x4 - core index']
  #allocation1 [shape = 'u32[144,128]{1,0:T(1,128)}', space=vmem, size = 0x12000, scoped, tag = 'internal scratch']
  #allocation2 [shape = 'f32[2,32]{1,0:T(2,128)}', space=vmem, size = 0x400, scoped, tag = 'scratch operand']
  #allocation3 [shape = 'f32[2,32]{1,0:T(2,128)}', space=vmem, size = 0x400, scoped, tag = 'scratch operand']
  #allocation4 [shape = 'f32[16,32]{1,0:T(8,128)}', space=vmem, size = 0x2000, scoped, tag = 'scratch operand']
  %s0 = inlined_call_operand.vmem [shape: f32[16,2,96], index: 0, kind: input, shape index: {}]
  %s1 = inlined_call_operand.vmem [shape: f32[2,2,32], index: 1, kind: input, shape index: {}]
  %s2 = inlined_call_operand.vmem [shape: f32[32,96], index: 2, kind: input, shape index: {}]
  %s3 = inlined_call_operand.vmem [shape: f32[1,32], index: 3, kind: input, shape index: {}]
  %s4 = inlined_call_operand.vmem [shape: f32[32,96], index: 4, kind: input, shape index: {}]
  %s5 = inlined_call_operand.vmem [shape: f32[32,96], index: 5, kind: input, shape index: {}]
  %s6 = inlined_call_operand.vmem [shape: f32[1,96], index: 6, kind: input, shape index: {}]
  %s7 = inlined_call_operand.vmem [shape: f32[1,32], index: 7, kind: input, shape index: {}]
  %s8 = inlined_call_operand.vmem [shape: f32[32,8], index: 8, kind: input, shape index: {}]
  %s9 = inlined_call_operand.vmem [shape: f32[1,8], index: 9, kind: input, shape index: {}]
  %s10 = inlined_call_operand.hbm [shape: f32[2,8], index: 10, kind: output, shape index: {0}]
  %s11 = inlined_call_operand.hbm [shape: f32[2,2,32], index: 11, kind: output, shape index: {1}]
  %12 = xla_tuple %s10, %s11
  %s13 = sld [smem:[#allocation0]]
  $region89: #{char_gru_forward.1} parent=0
    _
  %s15 = ssub.s32 1, %s13
  %s16 = scalar_select 0, %s15, %s13
  $region1: #{char_gru_forward.1} parent=0
    #allocation5 [shape = 'u8[1024]{0}', space=vmem, size = 0x400, scoped, tag = 'output window, operand 0, single buffered']
    #allocation6 [shape = 's32[2]{0}', space=sflag, size = 0x8, scoped, tag = 'scoped memory for char_gru_forward.1']
    #allocation7 [shape = 'u8[2048]{0}', space=vmem, size = 0x800, scoped, tag = 'output window, operand 1, single buffered']
    #allocation8 [shape = 's32[1]{0}', space=sflag, size = 0x4, scoped, tag = 'scoped memory for char_gru_forward.1']
    %17 = vsyncpa [#allocation6], 0
    %18 = vsyncpa [#allocation8], 0
    loop: start=0, step=1, limit=4
    $region2: #{char_gru_forward.1} parent=1 // loop_pre_header
      _
    $region3: #{char_gru_forward.1} parent=1 // loop_header
      %s20 = sphi 0, %s24
      %p21 = scmp.ge.s32.totalorder %s20, 4
      %s30 = sphi 0, %s32
      %s33 = sphi 0, %s30
      %s34 = sphi 0, %s33
      %s50 = sphi 0, %s34
      %s54 = sphi 0, %s54
      %s56 = sphi 0, %s54
      %s57 = sphi 0, %s56
      %s71 = sphi 0, %s57
      %s75 = sphi 0, %s75
      %s77 = sphi 0, %s75
      %s78 = sphi 0, %s77
      %s92 = sphi 0, %s78
      %s96 = sphi 0, %s96
      %s98 = sphi 0, %s96
      %s99 = sphi 0, %s98
      %s113 = sphi 0, %s99
      %s117 = sphi 0, %s117
      %s119 = sphi 0, %s117
      %s120 = sphi 0, %s119
      %s134 = sphi 0, %s120
      %s138 = sphi 0, %s138
      %s140 = sphi 0, %s138
      %s141 = sphi 0, %s140
      %s155 = sphi 0, %s141
      %s159 = sphi 0, %s159
      %s161 = sphi 0, %s159
      %s162 = sphi 0, %s161
      %s176 = sphi 0, %s162
      %s180 = sphi 0, %s180
      %s182 = sphi 0, %s180
      %s183 = sphi 0, %s182
      %s197 = sphi 0, %s183
      %s201 = sphi 0, %s201
      %s203 = sphi 0, %s201
      %s204 = sphi 0, %s203
      %s218 = sphi 0, %s204
      %s222 = sphi 0, %s222
      %s224 = sphi 0, %s222
      %s225 = sphi 0, %s224
      %s239 = sphi 0, %s225
      %s243 = sphi 0, %s243
      %s245 = sphi 0, %s243
      %s246 = sphi 0, %s245
      %s260 = sphi 0, %s246
      %s264 = sphi 0, %s264
      %s266 = sphi 0, %s264
      %s267 = sphi 0, %s266
      %s281 = sphi 0, %s267
    $region4: #{char_gru_forward.1} parent=1 // loop_header_branch
      %23 = sbr.rel (%p21) target = $region8
    $region5: #{char_gru_forward.1} parent=1 // loop_body
      %s25 = ssub.s32 %s20, 1
      %s26 = ssub.s32 %s20, 2
      %s27 = sadd.s32 %s20, 1
      %s28 = ssub.s32 %s20, %s27
      %p29 = scmp.eq.s32.totalorder %s28, 0
      %s31 = sadd.s32 %s30, 1
      %s32 = scalar_select %p29, %s30, %s31
      %p35 = pneg %p29
      %p36 = scmp.eq.s32.totalorder %s20, 1
      %p37 = por %p35, %p36
      %p38 = scmp.ne.s32.totalorder %s30, %s33
      %p39 = scmp.eq.s32.totalorder %s20, 0
      %p40 = por %p38, %p39
      %p41 = scmp.ne.s32.totalorder %s30, %s33
      %p42 = scmp.eq.s32.totalorder %s25, 1
      %p43 = por %p41, %p42
      %p44 = scmp.ne.s32.totalorder %s33, %s34
      %p45 = scmp.eq.s32.totalorder %s25, 0
      %p46 = por %p44, %p45
      %p47 = scmp.ne.s32.totalorder %s33, %s34
      %p48 = scmp.eq.s32.totalorder %s26, 1
      %p49 = por %p47, %p48
      %p51 = scmp.ne.s32.totalorder %s34, %s50
      %p52 = scmp.eq.s32.totalorder %s26, 0
      %p53 = por %p51, %p52
      %s55 = sadd.s32 %s54, 1
      %p58 = scmp.eq.s32.totalorder %s20, 1
      %p59 = scmp.ne.s32.totalorder %s54, %s56
      %p60 = scmp.eq.s32.totalorder %s20, 0
      %p61 = por %p59, %p60
      %p62 = scmp.ne.s32.totalorder %s54, %s56
      %p63 = scmp.eq.s32.totalorder %s25, 1
      %p64 = por %p62, %p63
      %p65 = scmp.ne.s32.totalorder %s56, %s57
      %p66 = scmp.eq.s32.totalorder %s25, 0
      %p67 = por %p65, %p66
      %p68 = scmp.ne.s32.totalorder %s56, %s57
      %p69 = scmp.eq.s32.totalorder %s26, 1
      %p70 = por %p68, %p69
      %p72 = scmp.ne.s32.totalorder %s57, %s71
      %p73 = scmp.eq.s32.totalorder %s26, 0
      %p74 = por %p72, %p73
      %s76 = sadd.s32 %s75, 1
      %p79 = scmp.eq.s32.totalorder %s20, 1
      %p80 = scmp.ne.s32.totalorder %s75, %s77
      %p81 = scmp.eq.s32.totalorder %s20, 0
      %p82 = por %p80, %p81
      %p83 = scmp.ne.s32.totalorder %s75, %s77
      %p84 = scmp.eq.s32.totalorder %s25, 1
      %p85 = por %p83, %p84
      %p86 = scmp.ne.s32.totalorder %s77, %s78
      %p87 = scmp.eq.s32.totalorder %s25, 0
      %p88 = por %p86, %p87
      %p89 = scmp.ne.s32.totalorder %s77, %s78
      %p90 = scmp.eq.s32.totalorder %s26, 1
      %p91 = por %p89, %p90
      %p93 = scmp.ne.s32.totalorder %s78, %s92
      %p94 = scmp.eq.s32.totalorder %s26, 0
      %p95 = por %p93, %p94
      %s97 = sadd.s32 %s96, 1
      %p100 = scmp.eq.s32.totalorder %s20, 1
      %p101 = scmp.ne.s32.totalorder %s96, %s98
      %p102 = scmp.eq.s32.totalorder %s20, 0
      %p103 = por %p101, %p102
      %p104 = scmp.ne.s32.totalorder %s96, %s98
      %p105 = scmp.eq.s32.totalorder %s25, 1
      %p106 = por %p104, %p105
      %p107 = scmp.ne.s32.totalorder %s98, %s99
      %p108 = scmp.eq.s32.totalorder %s25, 0
      %p109 = por %p107, %p108
      %p110 = scmp.ne.s32.totalorder %s98, %s99
      %p111 = scmp.eq.s32.totalorder %s26, 1
      %p112 = por %p110, %p111
      %p114 = scmp.ne.s32.totalorder %s99, %s113
      %p115 = scmp.eq.s32.totalorder %s26, 0
      %p116 = por %p114, %p115
      %s118 = sadd.s32 %s117, 1
      %p121 = scmp.eq.s32.totalorder %s20, 1
      %p122 = scmp.ne.s32.totalorder %s117, %s119
      %p123 = scmp.eq.s32.totalorder %s20, 0
      %p124 = por %p122, %p123
      %p125 = scmp.ne.s32.totalorder %s117, %s119
      %p126 = scmp.eq.s32.totalorder %s25, 1
      %p127 = por %p125, %p126
      %p128 = scmp.ne.s32.totalorder %s119, %s120
      %p129 = scmp.eq.s32.totalorder %s25, 0
      %p130 = por %p128, %p129
      %p131 = scmp.ne.s32.totalorder %s119, %s120
      %p132 = scmp.eq.s32.totalorder %s26, 1
      %p133 = por %p131, %p132
      %p135 = scmp.ne.s32.totalorder %s120, %s134
      %p136 = scmp.eq.s32.totalorder %s26, 0
      %p137 = por %p135, %p136
      %s139 = sadd.s32 %s138, 1
      %p142 = scmp.eq.s32.totalorder %s20, 1
      %p143 = scmp.ne.s32.totalorder %s138, %s140
      %p144 = scmp.eq.s32.totalorder %s20, 0
      %p145 = por %p143, %p144
      %p146 = scmp.ne.s32.totalorder %s138, %s140
      %p147 = scmp.eq.s32.totalorder %s25, 1
      %p148 = por %p146, %p147
      %p149 = scmp.ne.s32.totalorder %s140, %s141
      %p150 = scmp.eq.s32.totalorder %s25, 0
      %p151 = por %p149, %p150
      %p152 = scmp.ne.s32.totalorder %s140, %s141
      %p153 = scmp.eq.s32.totalorder %s26, 1
      %p154 = por %p152, %p153
      %p156 = scmp.ne.s32.totalorder %s141, %s155
      %p157 = scmp.eq.s32.totalorder %s26, 0
      %p158 = por %p156, %p157
      %s160 = sadd.s32 %s159, 1
      %p163 = scmp.eq.s32.totalorder %s20, 1
      %p164 = scmp.ne.s32.totalorder %s159, %s161
      %p165 = scmp.eq.s32.totalorder %s20, 0
      %p166 = por %p164, %p165
      %p167 = scmp.ne.s32.totalorder %s159, %s161
      %p168 = scmp.eq.s32.totalorder %s25, 1
      %p169 = por %p167, %p168
      %p170 = scmp.ne.s32.totalorder %s161, %s162
      %p171 = scmp.eq.s32.totalorder %s25, 0
      %p172 = por %p170, %p171
      %p173 = scmp.ne.s32.totalorder %s161, %s162
      %p174 = scmp.eq.s32.totalorder %s26, 1
      %p175 = por %p173, %p174
      %p177 = scmp.ne.s32.totalorder %s162, %s176
      %p178 = scmp.eq.s32.totalorder %s26, 0
      %p179 = por %p177, %p178
      %s181 = sadd.s32 %s180, 1
      %p184 = scmp.eq.s32.totalorder %s20, 1
      %p185 = scmp.ne.s32.totalorder %s180, %s182
      %p186 = scmp.eq.s32.totalorder %s20, 0
      %p187 = por %p185, %p186
      %p188 = scmp.ne.s32.totalorder %s180, %s182
      %p189 = scmp.eq.s32.totalorder %s25, 1
      %p190 = por %p188, %p189
      %p191 = scmp.ne.s32.totalorder %s182, %s183
      %p192 = scmp.eq.s32.totalorder %s25, 0
      %p193 = por %p191, %p192
      %p194 = scmp.ne.s32.totalorder %s182, %s183
      %p195 = scmp.eq.s32.totalorder %s26, 1
      %p196 = por %p194, %p195
      %p198 = scmp.ne.s32.totalorder %s183, %s197
      %p199 = scmp.eq.s32.totalorder %s26, 0
      %p200 = por %p198, %p199
      %s202 = sadd.s32 %s201, 1
      %p205 = scmp.eq.s32.totalorder %s20, 1
      %p206 = scmp.ne.s32.totalorder %s201, %s203
      %p207 = scmp.eq.s32.totalorder %s20, 0
      %p208 = por %p206, %p207
      %p209 = scmp.ne.s32.totalorder %s201, %s203
      %p210 = scmp.eq.s32.totalorder %s25, 1
      %p211 = por %p209, %p210
      %p212 = scmp.ne.s32.totalorder %s203, %s204
      %p213 = scmp.eq.s32.totalorder %s25, 0
      %p214 = por %p212, %p213
      %p215 = scmp.ne.s32.totalorder %s203, %s204
      %p216 = scmp.eq.s32.totalorder %s26, 1
      %p217 = por %p215, %p216
      %p219 = scmp.ne.s32.totalorder %s204, %s218
      %p220 = scmp.eq.s32.totalorder %s26, 0
      %p221 = por %p219, %p220
      %s223 = sadd.s32 %s222, 1
      %p226 = scmp.eq.s32.totalorder %s20, 1
      %p227 = scmp.ne.s32.totalorder %s222, %s224
      %p228 = scmp.eq.s32.totalorder %s20, 0
      %p229 = por %p227, %p228
      %p230 = scmp.ne.s32.totalorder %s222, %s224
      %p231 = scmp.eq.s32.totalorder %s25, 1
      %p232 = por %p230, %p231
      %p233 = scmp.ne.s32.totalorder %s224, %s225
      %p234 = scmp.eq.s32.totalorder %s25, 0
      %p235 = por %p233, %p234
      %p236 = scmp.ne.s32.totalorder %s224, %s225
      %p237 = scmp.eq.s32.totalorder %s26, 1
      %p238 = por %p236, %p237
      %p240 = scmp.ne.s32.totalorder %s225, %s239
      %p241 = scmp.eq.s32.totalorder %s26, 0
      %p242 = por %p240, %p241
      %s244 = sadd.s32 %s243, 1
      %p247 = scmp.eq.s32.totalorder %s20, 1
      %p248 = scmp.ne.s32.totalorder %s243, %s245
      %p249 = scmp.eq.s32.totalorder %s20, 0
      %p250 = por %p248, %p249
      %p251 = scmp.ne.s32.totalorder %s243, %s245
      %p252 = scmp.eq.s32.totalorder %s25, 1
      %p253 = por %p251, %p252
      %p254 = scmp.ne.s32.totalorder %s245, %s246
      %p255 = scmp.eq.s32.totalorder %s25, 0
      %p256 = por %p254, %p255
      %p257 = scmp.ne.s32.totalorder %s245, %s246
      %p258 = scmp.eq.s32.totalorder %s26, 1
      %p259 = por %p257, %p258
      %p261 = scmp.ne.s32.totalorder %s246, %s260
      %p262 = scmp.eq.s32.totalorder %s26, 0
      %p263 = por %p261, %p262
      %s265 = sadd.s32 %s264, 1
      %p268 = scmp.eq.s32.totalorder %s20, 1
      %p269 = scmp.ne.s32.totalorder %s264, %s266
      %p270 = scmp.eq.s32.totalorder %s20, 0
      %p271 = por %p269, %p270
      %p272 = scmp.ne.s32.totalorder %s264, %s266
      %p273 = scmp.eq.s32.totalorder %s25, 1
      %p274 = por %p272, %p273
      %p275 = scmp.ne.s32.totalorder %s266, %s267
      %p276 = scmp.eq.s32.totalorder %s25, 0
      %p277 = por %p275, %p276
      %p278 = scmp.ne.s32.totalorder %s266, %s267
      %p279 = scmp.eq.s32.totalorder %s26, 1
      %p280 = por %p278, %p279
      %p282 = scmp.ne.s32.totalorder %s267, %s281
      %p283 = scmp.eq.s32.totalorder %s26, 0
      %p284 = por %p282, %p283
      %p285 = scmp.le.s32.totalorder 1, %s20
      %p286 = scmp.lt.s32.totalorder %s20, 3
      %p287 = pnand %p285, %p286
      %p288 = pneg %p287
      // Predicated region
      $region9: #{char_gru_forward.1} parent=5 // pred_check
        _
      $region10: #{char_gru_forward.1} parent=5 // pred_check_branch
        %290 = sbr.rel (%p287) target = $region12
      $region11: #{char_gru_forward.1} parent=5 // pred_region
        %s291 = ssub.s32 %s20, 1
        // Predicated region
        $region13: #{char_gru_forward.1} parent=11 // pred_check
          %p292 = pneg %p67
        $region14: #{char_gru_forward.1} parent=11 // pred_check_branch
          %294 = sbr.rel (%p292) target = $region16
        $region15: #{char_gru_forward.1} parent=11 // pred_region
          _
        $region16: #{char_gru_forward.1} parent=11 // pred_fallthru
          _
        // Predicated region
        $region17: #{char_gru_forward.1} parent=11 // pred_check
          %p295 = pneg %p88
        $region18: #{char_gru_forward.1} parent=11 // pred_check_branch
          %297 = sbr.rel (%p295) target = $region20
        $region19: #{char_gru_forward.1} parent=11 // pred_region
          _
        $region20: #{char_gru_forward.1} parent=11 // pred_fallthru
          _
        // Predicated region
        $region21: #{char_gru_forward.1} parent=11 // pred_check
          %p298 = pneg %p109
        $region22: #{char_gru_forward.1} parent=11 // pred_check_branch
          %300 = sbr.rel (%p298) target = $region24
        $region23: #{char_gru_forward.1} parent=11 // pred_region
          _
        $region24: #{char_gru_forward.1} parent=11 // pred_fallthru
          _
        // Predicated region
        $region25: #{char_gru_forward.1} parent=11 // pred_check
          %p301 = pneg %p130
        $region26: #{char_gru_forward.1} parent=11 // pred_check_branch
          %303 = sbr.rel (%p301) target = $region28
        $region27: #{char_gru_forward.1} parent=11 // pred_region
          _
        $region28: #{char_gru_forward.1} parent=11 // pred_fallthru
          _
        // Predicated region
        $region29: #{char_gru_forward.1} parent=11 // pred_check
          %p304 = pneg %p151
        $region30: #{char_gru_forward.1} parent=11 // pred_check_branch
          %306 = sbr.rel (%p304) target = $region32
        $region31: #{char_gru_forward.1} parent=11 // pred_region
          _
        $region32: #{char_gru_forward.1} parent=11 // pred_fallthru
          _
        // Predicated region
        $region33: #{char_gru_forward.1} parent=11 // pred_check
          %p307 = pneg %p172
        $region34: #{char_gru_forward.1} parent=11 // pred_check_branch
          %309 = sbr.rel (%p307) target = $region36
        $region35: #{char_gru_forward.1} parent=11 // pred_region
          _
        $region36: #{char_gru_forward.1} parent=11 // pred_fallthru
          _
        // Predicated region
        $region37: #{char_gru_forward.1} parent=11 // pred_check
          %p310 = pneg %p193
        $region38: #{char_gru_forward.1} parent=11 // pred_check_branch
          %312 = sbr.rel (%p310) target = $region40
        $region39: #{char_gru_forward.1} parent=11 // pred_region
          _
        $region40: #{char_gru_forward.1} parent=11 // pred_fallthru
          _
        // Predicated region
        $region41: #{char_gru_forward.1} parent=11 // pred_check
          %p313 = pneg %p214
        $region42: #{char_gru_forward.1} parent=11 // pred_check_branch
          %315 = sbr.rel (%p313) target = $region44
        $region43: #{char_gru_forward.1} parent=11 // pred_region
          _
        $region44: #{char_gru_forward.1} parent=11 // pred_fallthru
          _
        // Predicated region
        $region45: #{char_gru_forward.1} parent=11 // pred_check
          %p316 = pneg %p235
        $region46: #{char_gru_forward.1} parent=11 // pred_check_branch
          %318 = sbr.rel (%p316) target = $region48
        $region47: #{char_gru_forward.1} parent=11 // pred_region
          _
        $region48: #{char_gru_forward.1} parent=11 // pred_fallthru
          _
      $region12: #{char_gru_forward.1} parent=5 // pred_fallthru
        _
      %p319 = scmp.lt.s32.totalorder %s20, 2
      // Predicated region
      $region49: #{char_gru_forward.1} parent=5 // pred_check
        %p320 = pneg %p319
      $region50: #{char_gru_forward.1} parent=5 // pred_check_branch
        %322 = sbr.rel (%p320) target = $region52
      $region51: #{char_gru_forward.1} parent=5 // pred_region
        // Predicated region
        $region53: #{char_gru_forward.1} parent=51 // pred_check
          %p323 = pneg %p40
        $region54: #{char_gru_forward.1} parent=51 // pred_check_branch
          %325 = sbr.rel (%p323) target = $region56
        $region55: #{char_gru_forward.1} parent=51 // pred_region
          %s326 = smul.u32 8, %s20
          %p327 = scmp.lt.s32.totalorder %s326, 15
          %s328 = scalar_select %p327, %s326, 15
          %s329 = smul.addr %s328, 2
          %s330 = scalar_lea.vmem %s0, %s329
          %s331 = smul.u32 8, %s20
        $region56: #{char_gru_forward.1} parent=51 // pred_fallthru
          _
      $region52: #{char_gru_forward.1} parent=5 // pred_fallthru
        _
      %p332 = scmp.le.s32.totalorder 1, %s20
      %p333 = scmp.lt.s32.totalorder %s20, 3
      %p334 = pnand %p332, %p333
      %p335 = pneg %p334
      // Predicated region
      $region57: #{char_gru_forward.1} parent=5 // pred_check
        _
      $region58: #{char_gru_forward.1} parent=5 // pred_check_branch
        %337 = sbr.rel (%p334) target = $region60
      $region59: #{char_gru_forward.1} parent=5 // pred_region
        %s338 = ssub.s32 %s20, 1
        %s339 = smul.u32 8, %s25
        %p340 = scmp.lt.s32.totalorder %s339, 15
        %s341 = scalar_select %p340, %s339, 15
        %s342 = smul.addr %s341, 2
        %s343 = scalar_lea.vmem %s0, %s342
        %p344 = pneg %p46
        %p345 = pneg %p43
        %p346 = pneg %p67
        %p347 = pneg %p64
        %p348 = pneg %p88
        %p349 = pneg %p85
        %p350 = pneg %p109
        %p351 = pneg %p106
        %p352 = pneg %p130
        %p353 = pneg %p127
        %p354 = pneg %p151
        %p355 = pneg %p148
        %p356 = pneg %p172
        %p357 = pneg %p169
        %p358 = pneg %p193
        %p359 = pneg %p190
        %p360 = pneg %p214
        %p361 = pneg %p211
        %p362 = pneg %p235
        %p363 = pneg %p232
        %p364 = pneg %p256
        %p365 = pneg %p253
        %p366 = pneg %p277
        %p367 = pneg %p274
        %s368 = smul.u32 8, %s25
        %p369 = scmp.lt.s32.totalorder %s368, 15
        %s370 = scalar_select %p369, %s368, 15
        %s371 = smul.addr %s370, 2
        %s372 = scalar_lea.vmem %s0, %s371
        %s373 = smul.u32 8, %s25
        %p374 = scmp.eq.s32.totalorder %s25, 0
        // Predicated region
        $region61: #{char_gru_forward.1} parent=59 // pred_check
          %p375 = pneg %p374
        $region62: #{char_gru_forward.1} parent=59 // pred_check_branch
          %377 = sbr.rel (%p375) target = $region64
        $region63: #{char_gru_forward.1} parent=59 // pred_region
          %v378 = vld [vmem:[%s1] sm:$0x3]
          %vm379 = vcmask 254976
          %380 = vst.msk [vmem:[#allocation2] sm:$0x3] %vm379, %v378
          %s381 = scalar_lea.vmem %s1, 2
          %v382 = vld [vmem:[%s381] sm:$0x3]
          %383 = vst.msk [vmem:[#allocation3] sm:$0x3] %vm379, %v382
        $region64: #{char_gru_forward.1} parent=59 // pred_fallthru
          _
        %v384 = vld [vmem:[%s2] sm:$0xff]
        %v385 = vld [vmem:[%s2 + $0x8] sm:$0xff]
        %v386 = vld [vmem:[%s2 + $0x10] sm:$0xff]
        %v387 = vld [vmem:[%s2 + $0x18] sm:$0xff]
        %v388 = vld [vmem:[%s4] sm:$0xff]
        %v389 = vld [vmem:[%s4 + $0x8] sm:$0xff]
        %v390 = vld [vmem:[%s4 + $0x10] sm:$0xff]
        %v391 = vld [vmem:[%s4 + $0x18] sm:$0xff]
        %v392 = vld [vmem:[%s5] sm:$0xff]
        %v393 = vld [vmem:[%s5 + $0x8] sm:$0xff]
        %v394 = vld [vmem:[%s5 + $0x10] sm:$0xff]
        %v395 = vld [vmem:[%s5 + $0x18] sm:$0xff]
        %v396 = vld [vmem:[%s3] sm:$0x1]
        %v398 = vlaneseq
        %v399 = vshrl.u32 %v398, 7
        %v400 = vsub.s32 0, %v399
        %v401 = vrot.slane %v396, %v400
        %v402 = vld [vmem:[%s7] sm:$0x1]
        %v404 = vlaneseq
        %v405 = vshrl.u32 %v404, 7
        %v406 = vsub.s32 0, %v405
        %v407 = vrot.slane %v402, %v406
        %v408 = vld [vmem:[%s6] sm:$0x1]
        %v409 = vld [vmem:[#allocation2] sm:$0x3]
        %v410 = vld [vmem:[%s372] sm:$0x3]
        %vm411 = vcmask 261120
        %v413 = vsel %vm411, %v409, 0
        %415 = vmatprep.subr.mxu0 0.0
        %416 = vmatpush1.msra.mxu0 %v384
        %417 = vmatprep.subr.mxu0 0.0
        %418 = vmatpush1.msra.mxu0 %v385
        %419 = vmatprep.subr.mxu0 0.0
        %420 = vmatpush1.msra.mxu0 %v386
        %421 = vmatprep.subr.mxu0 0.0
        %422 = vmatpush1.msra.mxu0 %v387
        %423 = vmatprep.subr.mxu0 0.0
        %424 = vmatpush1.msra.mxu0 0.0
        %425 = vmatprep.subr.mxu0 0.0
        %426 = vmatpush1.msra.mxu0 0.0
        %427 = vmatprep.subr.mxu0 0.0
        %428 = vmatpush1.msra.mxu0 0.0
        %429 = vmatprep.subr.mxu0 0.0
        %430 = vmatpush1.msra.mxu0 0.0
        %431 = vmatprep.subr.mxu0 0.0
        %432 = vmatpush1.msra.mxu0 0.0
        %433 = vmatprep.subr.mxu0 0.0
        %434 = vmatpush1.msra.mxu0 0.0
        %435 = vmatprep.subr.mxu0 0.0
        %436 = vmatpush1.msra.mxu0 0.0
        %437 = vmatprep.subr.mxu0 0.0
        %438 = vmatpush1.msra.mxu0 0.0
        %439 = vmatprep.subr.mxu0 0.0
        %440 = vmatpush1.msra.mxu0 0.0
        %441 = vmatprep.subr.mxu0 0.0
        %442 = vmatpush1.msra.mxu0 0.0
        %443 = vmatprep.subr.mxu0 0.0
        %444 = vmatpush1.msra.mxu0 0.0
        %445 = vmatprep.subr.mxu0 0.0
        %446 = vmatpush1.msra.mxu0 0.0
        %447 = vmatprep.subr.mxu0 0.0
        %448 = vmatpush1.msra.mxu0 0.0
        %449 = vmatprep.subr.mxu0 0.0
        %450 = vmatpush1.msra.mxu0 0.0
        %451 = vmatprep.subr.mxu0 0.0
        %452 = vmatpush1.msra.mxu0 0.0
        %453 = vmatprep.subr.mxu0 0.0
        %454 = vmatpush1.msra.mxu0 0.0
        %455 = vmatprep.subr.mxu0 0.0
        %456 = vmatpush1.msra.mxu0 0.0
        %457 = vmatprep.subr.mxu0 0.0
        %458 = vmatpush1.msra.mxu0 0.0
        %459 = vmatprep.subr.mxu0 0.0
        %460 = vmatpush1.msra.mxu0 0.0
        %461 = vmatprep.subr.mxu0 0.0
        %462 = vmatpush1.msra.mxu0 0.0
        %463 = vmatprep.subr.mxu0 0.0
        %464 = vmatpush1.msra.mxu0 0.0
        %465 = vmatprep.subr.mxu0 0.0
        %466 = vmatpush1.msra.mxu0 0.0
        %467 = vmatprep.subr.mxu0 0.0
        %468 = vmatpush1.msra.mxu0 0.0
        %469 = vmatprep.subr.mxu0 0.0
        %470 = vmatpush1.msra.mxu0 0.0
        %471 = vmatprep.subr.mxu0 0.0
        %472 = vmatpush1.msra.mxu0 0.0
        %473 = vmatprep.subr.mxu0 0.0
        %474 = vmatpush1.msra.mxu0 0.0
        %475 = vmatprep.subr.mxu0 0.0
        %476 = vmatpush1.msra.mxu0 0.0
        %477 = vmatprep.subr.mxu0 0.0
        %478 = vmatpush1.msra.mxu0 0.0
        %479 = vmatprep.mubr.f32.mxu0 0.0
        %480 = vmatmul.mubr.f32.gmra.mrb[0].mxu0 %v413
        %v481 = vpop.f32.mrb[0].mxu0
        %v482 = vadd.f32 0.0, %v481
        %v483 = vpop.f32.mrb[0].mxu0
        %484 = vdwg.mxu0
        %v485 = vadd.f32 %v410, %v482
        %v486 = vxor.u32 %v485, 2147483648
        %v487 = vmul.f32 %v486, 1.442695
        %v488 = vpow.pop %v487
        %v489 = vadd.f32 %v488, 1.0
        %v490 = vrcp.pop %v489
        %v491 = vmul.f32 1.0, %v490
        %492 = vrot.lane.b32.xlu0 %v401, 64
        %v493 = vpop.permute.xlu0 %492
        %v495 = vadd.f32 %v482, %v493
        %497 = vrot.lane.b32.xlu0 %v495, 64
        %v498 = vpop.permute.xlu0 %497
        %v500 = vmul.f32 %v491, %v498
        %502 = vrot.lane.b32.xlu0 %v500, 64
        %v503 = vpop.permute.xlu0 %502
        %v505 = vadd.f32 %v410, %v503
        %v506 = vtanh.pop %v505
        %v507 = vsub.f32 1.0, %v491
        %509 = vrot.lane.b32.xlu0 %v506, 96
        %v510 = vpop.permute.xlu0 %509
        %v512 = vmul.f32 %v507, %v510
        %513 = vrot.lane.b32.xlu0 %v409, 32
        %v514 = vpop.permute.xlu0 %513
        %v516 = vmul.f32 %v491, %v514
        %v517 = vadd.f32 %v512, %v516
        %519 = vrot.lane.b32.xlu0 %v517, 96
        %v520 = vpop.permute.xlu0 %519
        %vm522 = vcmask 254976
        %523 = vst.msk [vmem:[#allocation4] sm:$0x3] %vm522, %v520
        %s524 = scalar_lea.vmem %s372, 2
        %v525 = vld [vmem:[%s524] sm:$0x3]
        %v526 = vsel %vm411, %v520, 0
        %528 = vmatprep.subr.mxu0 0.0
        %529 = vmatpush1.msra.mxu0 %v384
        %530 = vmatprep.subr.mxu0 0.0
        %531 = vmatpush1.msra.mxu0 %v385
        %532 = vmatprep.subr.mxu0 0.0
        %533 = vmatpush1.msra.mxu0 %v386
        %534 = vmatprep.subr.mxu0 0.0
        %535 = vmatpush1.msra.mxu0 %v387
        %536 = vmatprep.subr.mxu0 0.0
        %537 = vmatpush1.msra.mxu0 0.0
        %538 = vmatprep.subr.mxu0 0.0
        %539 = vmatpush1.msra.mxu0 0.0
        %540 = vmatprep.subr.mxu0 0.0
        %541 = vmatpush1.msra.mxu0 0.0
        %542 = vmatprep.subr.mxu0 0.0
        %543 = vmatpush1.msra.mxu0 0.0
        %544 = vmatprep.subr.mxu0 0.0
        %545 = vmatpush1.msra.mxu0 0.0
        %546 = vmatprep.subr.mxu0 0.0
        %547 = vmatpush1.msra.mxu0 0.0
        %548 = vmatprep.subr.mxu0 0.0
        %549 = vmatpush1.msra.mxu0 0.0
        %550 = vmatprep.subr.mxu0 0.0
        %551 = vmatpush1.msra.mxu0 0.0
        %552 = vmatprep.subr.mxu0 0.0
        %553 = vmatpush1.msra.mxu0 0.0
        %554 = vmatprep.subr.mxu0 0.0
        %555 = vmatpush1.msra.mxu0 0.0
        %556 = vmatprep.subr.mxu0 0.0
        %557 = vmatpush1.msra.mxu0 0.0
        %558 = vmatprep.subr.mxu0 0.0
        %559 = vmatpush1.msra.mxu0 0.0
        %560 = vmatprep.subr.mxu0 0.0
        %561 = vmatpush1.msra.mxu0 0.0
        %562 = vmatprep.subr.mxu0 0.0
        %563 = vmatpush1.msra.mxu0 0.0
        %564 = vmatprep.subr.mxu0 0.0
        %565 = vmatpush1.msra.mxu0 0.0
        %566 = vmatprep.subr.mxu0 0.0
        %567 = vmatpush1.msra.mxu0 0.0
        %568 = vmatprep.subr.mxu0 0.0
        %569 = vmatpush1.msra.mxu0 0.0
        %570 = vmatprep.subr.mxu0 0.0
        %571 = vmatpush1.msra.mxu0 0.0
        %572 = vmatprep.subr.mxu0 0.0
        %573 = vmatpush1.msra.mxu0 0.0
        %574 = vmatprep.subr.mxu0 0.0
        %575 = vmatpush1.msra.mxu0 0.0
        %576 = vmatprep.subr.mxu0 0.0
        %577 = vmatpush1.msra.mxu0 0.0
        %578 = vmatprep.subr.mxu0 0.0
        %579 = vmatpush1.msra.mxu0 0.0
        %580 = vmatprep.subr.mxu0 0.0
        %581 = vmatpush1.msra.mxu0 0.0
        %582 = vmatprep.subr.mxu0 0.0
        %583 = vmatpush1.msra.mxu0 0.0
        %584 = vmatprep.subr.mxu0 0.0
        %585 = vmatpush1.msra.mxu0 0.0
        %586 = vmatprep.subr.mxu0 0.0
        %587 = vmatpush1.msra.mxu0 0.0
        %588 = vmatprep.subr.mxu0 0.0
        %589 = vmatpush1.msra.mxu0 0.0
        %590 = vmatprep.subr.mxu0 0.0
        %591 = vmatpush1.msra.mxu0 0.0
        %592 = vmatprep.mubr.f32.mxu0 0.0
        %593 = vmatmul.mubr.f32.gmra.mrb[0].mxu0 %v526
        %v594 = vpop.f32.mrb[0].mxu0
        %v595 = vadd.f32 0.0, %v594
        %v596 = vpop.f32.mrb[0].mxu0
        %597 = vdwg.mxu0
        %v598 = vadd.f32 %v525, %v595
        %v599 = vxor.u32 %v598, 2147483648
        %v600 = vmul.f32 %v599, 1.442695
        %v601 = vpow.pop %v600
        %v602 = vadd.f32 %v601, 1.0
        %v603 = vrcp.pop %v602
        %v604 = vmul.f32 1.0, %v603
        %v605 = vadd.f32 %v595, %v493
        %607 = vrot.lane.b32.xlu0 %v605, 64
        %v608 = vpop.permute.xlu0 %607
        %v610 = vmul.f32 %v604, %v608
        %612 = vrot.lane.b32.xlu0 %v610, 64
        %v613 = vpop.permute.xlu0 %612
        %v615 = vadd.f32 %v525, %v613
        %v616 = vtanh.pop %v615
        %v617 = vsub.f32 1.0, %v604
        %619 = vrot.lane.b32.xlu0 %v616, 96
        %v620 = vpop.permute.xlu0 %619
        %v622 = vmul.f32 %v617, %v620
        %v623 = vmul.f32 %v604, %v517
        %v624 = vadd.f32 %v622, %v623
        %626 = vrot.lane.b32.xlu0 %v624, 96
        %v627 = vpop.permute.xlu0 %626
        %629 = vst.msk [vmem:[#allocation4 + $0x2] sm:$0x3] %vm522, %v627
        %s630 = scalar_lea.vmem %s372, 4
        %v631 = vld [vmem:[%s630] sm:$0x3]
        %v632 = vsel %vm411, %v627, 0
        %634 = vmatprep.subr.mxu0 0.0
        %635 = vmatpush1.msra.mxu0 %v384
        %636 = vmatprep.subr.mxu0 0.0
        %637 = vmatpush1.msra.mxu0 %v385
        %638 = vmatprep.subr.mxu0 0.0
        %639 = vmatpush1.msra.mxu0 %v386
        %640 = vmatprep.subr.mxu0 0.0
        %641 = vmatpush1.msra.mxu0 %v387
        %642 = vmatprep.subr.mxu0 0.0
        %643 = vmatpush1.msra.mxu0 0.0
        %644 = vmatprep.subr.mxu0 0.0
        %645 = vmatpush1.msra.mxu0 0.0
        %646 = vmatprep.subr.mxu0 0.0
        %647 = vmatpush1.msra.mxu0 0.0
        %648 = vmatprep.subr.mxu0 0.0
        %649 = vmatpush1.msra.mxu0 0.0
        %650 = vmatprep.subr.mxu0 0.0
        %651 = vmatpush1.msra.mxu0 0.0
        %652 = vmatprep.subr.mxu0 0.0
        %653 = vmatpush1.msra.mxu0 0.0
        %654 = vmatprep.subr.mxu0 0.0
        %655 = vmatpush1.msra.mxu0 0.0
        %656 = vmatprep.subr.mxu0 0.0
        %657 = vmatpush1.msra.mxu0 0.0
        %658 = vmatprep.subr.mxu0 0.0
        %659 = vmatpush1.msra.mxu0 0.0
        %660 = vmatprep.subr.mxu0 0.0
        %661 = vmatpush1.msra.mxu0 0.0
        %662 = vmatprep.subr.mxu0 0.0
        %663 = vmatpush1.msra.mxu0 0.0
        %664 = vmatprep.subr.mxu0 0.0
        %665 = vmatpush1.msra.mxu0 0.0
        %666 = vmatprep.subr.mxu0 0.0
        %667 = vmatpush1.msra.mxu0 0.0
        %668 = vmatprep.subr.mxu0 0.0
        %669 = vmatpush1.msra.mxu0 0.0
        %670 = vmatprep.subr.mxu0 0.0
        %671 = vmatpush1.msra.mxu0 0.0
        %672 = vmatprep.subr.mxu0 0.0
        %673 = vmatpush1.msra.mxu0 0.0
        %674 = vmatprep.subr.mxu0 0.0
        %675 = vmatpush1.msra.mxu0 0.0
        %676 = vmatprep.subr.mxu0 0.0
        %677 = vmatpush1.msra.mxu0 0.0
        %678 = vmatprep.subr.mxu0 0.0
        %679 = vmatpush1.msra.mxu0 0.0
        %680 = vmatprep.subr.mxu0 0.0
        %681 = vmatpush1.msra.mxu0 0.0
        %682 = vmatprep.subr.mxu0 0.0
        %683 = vmatpush1.msra.mxu0 0.0
        %684 = vmatprep.subr.mxu0 0.0
        %685 = vmatpush1.msra.mxu0 0.0
        %686 = vmatprep.subr.mxu0 0.0
        %687 = vmatpush1.msra.mxu0 0.0
        %688 = vmatprep.subr.mxu0 0.0
        %689 = vmatpush1.msra.mxu0 0.0
        %690 = vmatprep.subr.mxu0 0.0
        %691 = vmatpush1.msra.mxu0 0.0
        %692 = vmatprep.subr.mxu0 0.0
        %693 = vmatpush1.msra.mxu0 0.0
        %694 = vmatprep.subr.mxu0 0.0
        %695 = vmatpush1.msra.mxu0 0.0
        %696 = vmatprep.subr.mxu0 0.0
        %697 = vmatpush1.msra.mxu0 0.0
        %698 = vmatprep.mubr.f32.mxu0 0.0
        %699 = vmatmul.mubr.f32.gmra.mrb[0].mxu0 %v632
        %v700 = vpop.f32.mrb[0].mxu0
        %v701 = vadd.f32 0.0, %v700
        %v702 = vpop.f32.mrb[0].mxu0
        %703 = vdwg.mxu0
        %v704 = vadd.f32 %v631, %v701
        %v705 = vxor.u32 %v704, 2147483648
        %v706 = vmul.f32 %v705, 1.442695
        %v707 = vpow.pop %v706
        %v708 = vadd.f32 %v707, 1.0
        %v709 = vrcp.pop %v708
        %v710 = vmul.f32 1.0, %v709
        %v711 = vadd.f32 %v701, %v493
        %713 = vrot.lane.b32.xlu0 %v711, 64
        %v714 = vpop.permute.xlu0 %713
        %v716 = vmul.f32 %v710, %v714
        %718 = vrot.lane.b32.xlu0 %v716, 64
        %v719 = vpop.permute.xlu0 %718
        %v721 = vadd.f32 %v631, %v719
        %v722 = vtanh.pop %v721
        %v723 = vsub.f32 1.0, %v710
        %725 = vrot.lane.b32.xlu0 %v722, 96
        %v726 = vpop.permute.xlu0 %725
        %v728 = vmul.f32 %v723, %v726
        %v729 = vmul.f32 %v710, %v624
        %v730 = vadd.f32 %v728, %v729
        %732 = vrot.lane.b32.xlu0 %v730, 96
        %v733 = vpop.permute.xlu0 %732
        %735 = vst.msk [vmem:[#allocation4 + $0x4] sm:$0x3] %vm522, %v733
        %s736 = scalar_lea.vmem %s372, 6
        %v737 = vld [vmem:[%s736] sm:$0x3]
        %v738 = vsel %vm411, %v733, 0
        %740 = vmatprep.subr.mxu0 0.0
        %741 = vmatpush1.msra.mxu0 %v384
        %742 = vmatprep.subr.mxu0 0.0
        %743 = vmatpush1.msra.mxu0 %v385
        %744 = vmatprep.subr.mxu0 0.0
        %745 = vmatpush1.msra.mxu0 %v386
        %746 = vmatprep.subr.mxu0 0.0
        %747 = vmatpush1.msra.mxu0 %v387
        %748 = vmatprep.subr.mxu0 0.0
        %749 = vmatpush1.msra.mxu0 0.0
        %750 = vmatprep.subr.mxu0 0.0
        %751 = vmatpush1.msra.mxu0 0.0
        %752 = vmatprep.subr.mxu0 0.0
        %753 = vmatpush1.msra.mxu0 0.0
        %754 = vmatprep.subr.mxu0 0.0
        %755 = vmatpush1.msra.mxu0 0.0
        %756 = vmatprep.subr.mxu0 0.0
        %757 = vmatpush1.msra.mxu0 0.0
        %758 = vmatprep.subr.mxu0 0.0
        %759 = vmatpush1.msra.mxu0 0.0
        %760 = vmatprep.subr.mxu0 0.0
        %761 = vmatpush1.msra.mxu0 0.0
        %762 = vmatprep.subr.mxu0 0.0
        %763 = vmatpush1.msra.mxu0 0.0
        %764 = vmatprep.subr.mxu0 0.0
        %765 = vmatpush1.msra.mxu0 0.0
        %766 = vmatprep.subr.mxu0 0.0
        %767 = vmatpush1.msra.mxu0 0.0
        %768 = vmatprep.subr.mxu0 0.0
        %769 = vmatpush1.msra.mxu0 0.0
        %770 = vmatprep.subr.mxu0 0.0
        %771 = vmatpush1.msra.mxu0 0.0
        %772 = vmatprep.subr.mxu0 0.0
        %773 = vmatpush1.msra.mxu0 0.0
        %774 = vmatprep.subr.mxu0 0.0
        %775 = vmatpush1.msra.mxu0 0.0
        %776 = vmatprep.subr.mxu0 0.0
        %777 = vmatpush1.msra.mxu0 0.0
        %778 = vmatprep.subr.mxu0 0.0
        %779 = vmatpush1.msra.mxu0 0.0
        %780 = vmatprep.subr.mxu0 0.0
        %781 = vmatpush1.msra.mxu0 0.0
        %782 = vmatprep.subr.mxu0 0.0
        %783 = vmatpush1.msra.mxu0 0.0
        %784 = vmatprep.subr.mxu0 0.0
        %785 = vmatpush1.msra.mxu0 0.0
        %786 = vmatprep.subr.mxu0 0.0
        %787 = vmatpush1.msra.mxu0 0.0
        %788 = vmatprep.subr.mxu0 0.0
        %789 = vmatpush1.msra.mxu0 0.0
        %790 = vmatprep.subr.mxu0 0.0
        %791 = vmatpush1.msra.mxu0 0.0
        %792 = vmatprep.subr.mxu0 0.0
        %793 = vmatpush1.msra.mxu0 0.0
        %794 = vmatprep.subr.mxu0 0.0
        %795 = vmatpush1.msra.mxu0 0.0
        %796 = vmatprep.subr.mxu0 0.0
        %797 = vmatpush1.msra.mxu0 0.0
        %798 = vmatprep.subr.mxu0 0.0
        %799 = vmatpush1.msra.mxu0 0.0
        %800 = vmatprep.subr.mxu0 0.0
        %801 = vmatpush1.msra.mxu0 0.0
        %802 = vmatprep.subr.mxu0 0.0
        %803 = vmatpush1.msra.mxu0 0.0
        %804 = vmatprep.mubr.f32.mxu0 0.0
        %805 = vmatmul.mubr.f32.gmra.mrb[0].mxu0 %v738
        %v806 = vpop.f32.mrb[0].mxu0
        %v807 = vadd.f32 0.0, %v806
        %v808 = vpop.f32.mrb[0].mxu0
        %809 = vdwg.mxu0
        %v810 = vadd.f32 %v737, %v807
        %v811 = vxor.u32 %v810, 2147483648
        %v812 = vmul.f32 %v811, 1.442695
        %v813 = vpow.pop %v812
        %v814 = vadd.f32 %v813, 1.0
        %v815 = vrcp.pop %v814
        %v816 = vmul.f32 1.0, %v815
        %v817 = vadd.f32 %v807, %v493
        %819 = vrot.lane.b32.xlu0 %v817, 64
        %v820 = vpop.permute.xlu0 %819
        %v822 = vmul.f32 %v816, %v820
        %824 = vrot.lane.b32.xlu0 %v822, 64
        %v825 = vpop.permute.xlu0 %824
        %v827 = vadd.f32 %v737, %v825
        %v828 = vtanh.pop %v827
        %v829 = vsub.f32 1.0, %v816
        %831 = vrot.lane.b32.xlu0 %v828, 96
        %v832 = vpop.permute.xlu0 %831
        %v834 = vmul.f32 %v829, %v832
        %v835 = vmul.f32 %v816, %v730
        %v836 = vadd.f32 %v834, %v835
        %838 = vrot.lane.b32.xlu0 %v836, 96
        %v839 = vpop.permute.xlu0 %838
        %841 = vst.msk [vmem:[#allocation4 + $0x6] sm:$0x3] %vm522, %v839
        %s842 = scalar_lea.vmem %s372, 8
        %v843 = vld [vmem:[%s842] sm:$0x3]
        %v844 = vsel %vm411, %v839, 0
        %846 = vmatprep.subr.mxu0 0.0
        %847 = vmatpush1.msra.mxu0 %v384
        %848 = vmatprep.subr.mxu0 0.0
        %849 = vmatpush1.msra.mxu0 %v385
        %850 = vmatprep.subr.mxu0 0.0
        %851 = vmatpush1.msra.mxu0 %v386
        %852 = vmatprep.subr.mxu0 0.0
        %853 = vmatpush1.msra.mxu0 %v387
        %854 = vmatprep.subr.mxu0 0.0
        %855 = vmatpush1.msra.mxu0 0.0
        %856 = vmatprep.subr.mxu0 0.0
        %857 = vmatpush1.msra.mxu0 0.0
        %858 = vmatprep.subr.mxu0 0.0
        %859 = vmatpush1.msra.mxu0 0.0
        %860 = vmatprep.subr.mxu0 0.0
        %861 = vmatpush1.msra.mxu0 0.0
        %862 = vmatprep.subr.mxu0 0.0
        %863 = vmatpush1.msra.mxu0 0.0
        %864 = vmatprep.subr.mxu0 0.0
        %865 = vmatpush1.msra.mxu0 0.0
        %866 = vmatprep.subr.mxu0 0.0
        %867 = vmatpush1.msra.mxu0 0.0
        %868 = vmatprep.subr.mxu0 0.0
        %869 = vmatpush1.msra.mxu0 0.0
        %870 = vmatprep.subr.mxu0 0.0
        %871 = vmatpush1.msra.mxu0 0.0
        %872 = vmatprep.subr.mxu0 0.0
        %873 = vmatpush1.msra.mxu0 0.0
        %874 = vmatprep.subr.mxu0 0.0
        %875 = vmatpush1.msra.mxu0 0.0
        %876 = vmatprep.subr.mxu0 0.0
        %877 = vmatpush1.msra.mxu0 0.0
        %878 = vmatprep.subr.mxu0 0.0
        %879 = vmatpush1.msra.mxu0 0.0
        %880 = vmatprep.subr.mxu0 0.0
        %881 = vmatpush1.msra.mxu0 0.0
        %882 = vmatprep.subr.mxu0 0.0
        %883 = vmatpush1.msra.mxu0 0.0
        %884 = vmatprep.subr.mxu0 0.0
        %885 = vmatpush1.msra.mxu0 0.0
        %886 = vmatprep.subr.mxu0 0.0
        %887 = vmatpush1.msra.mxu0 0.0
        %888 = vmatprep.subr.mxu0 0.0
        %889 = vmatpush1.msra.mxu0 0.0
        %890 = vmatprep.subr.mxu0 0.0
        %891 = vmatpush1.msra.mxu0 0.0
        %892 = vmatprep.subr.mxu0 0.0
        %893 = vmatpush1.msra.mxu0 0.0
        %894 = vmatprep.subr.mxu0 0.0
        %895 = vmatpush1.msra.mxu0 0.0
        %896 = vmatprep.subr.mxu0 0.0
        %897 = vmatpush1.msra.mxu0 0.0
        %898 = vmatprep.subr.mxu0 0.0
        %899 = vmatpush1.msra.mxu0 0.0
        %900 = vmatprep.subr.mxu0 0.0
        %901 = vmatpush1.msra.mxu0 0.0
        %902 = vmatprep.subr.mxu0 0.0
        %903 = vmatpush1.msra.mxu0 0.0
        %904 = vmatprep.subr.mxu0 0.0
        %905 = vmatpush1.msra.mxu0 0.0
        %906 = vmatprep.subr.mxu0 0.0
        %907 = vmatpush1.msra.mxu0 0.0
        %908 = vmatprep.subr.mxu0 0.0
        %909 = vmatpush1.msra.mxu0 0.0
        %910 = vmatprep.mubr.f32.mxu0 0.0
        %911 = vmatmul.mubr.f32.gmra.mrb[0].mxu0 %v844
        %v912 = vpop.f32.mrb[0].mxu0
        %v913 = vadd.f32 0.0, %v912
        %v914 = vpop.f32.mrb[0].mxu0
        %915 = vdwg.mxu0
        %v916 = vadd.f32 %v843, %v913
        %v917 = vxor.u32 %v916, 2147483648
        %v918 = vmul.f32 %v917, 1.442695
        %v919 = vpow.pop %v918
        %v920 = vadd.f32 %v919, 1.0
        %v921 = vrcp.pop %v920
        %v922 = vmul.f32 1.0, %v921
        %v923 = vadd.f32 %v913, %v493
        %925 = vrot.lane.b32.xlu0 %v923, 64
        %v926 = vpop.permute.xlu0 %925
        %v928 = vmul.f32 %v922, %v926
        %930 = vrot.lane.b32.xlu0 %v928, 64
        %v931 = vpop.permute.xlu0 %930
        %v933 = vadd.f32 %v843, %v931
        %v934 = vtanh.pop %v933
        %v935 = vsub.f32 1.0, %v922
        %937 = vrot.lane.b32.xlu0 %v934, 96
        %v938 = vpop.permute.xlu0 %937
        %v940 = vmul.f32 %v935, %v938
        %v941 = vmul.f32 %v922, %v836
        %v942 = vadd.f32 %v940, %v941
        %944 = vrot.lane.b32.xlu0 %v942, 96
        %v945 = vpop.permute.xlu0 %944
        %947 = vst.msk [vmem:[#allocation4 + $0x8] sm:$0x3] %vm522, %v945
        %s948 = scalar_lea.vmem %s372, 10
        %v949 = vld [vmem:[%s948] sm:$0x3]
        %v950 = vsel %vm411, %v945, 0
        %952 = vmatprep.subr.mxu0 0.0
        %953 = vmatpush1.msra.mxu0 %v384
        %954 = vmatprep.subr.mxu0 0.0
        %955 = vmatpush1.msra.mxu0 %v385
        %956 = vmatprep.subr.mxu0 0.0
        %957 = vmatpush1.msra.mxu0 %v386
        %958 = vmatprep.subr.mxu0 0.0
        %959 = vmatpush1.msra.mxu0 %v387
        %960 = vmatprep.subr.mxu0 0.0
        %961 = vmatpush1.msra.mxu0 0.0
        %962 = vmatprep.subr.mxu0 0.0
        %963 = vmatpush1.msra.mxu0 0.0
        %964 = vmatprep.subr.mxu0 0.0
        %965 = vmatpush1.msra.mxu0 0.0
        %966 = vmatprep.subr.mxu0 0.0
        %967 = vmatpush1.msra.mxu0 0.0
        %968 = vmatprep.subr.mxu0 0.0
        %969 = vmatpush1.msra.mxu0 0.0
        %970 = vmatprep.subr.mxu0 0.0
        %971 = vmatpush1.msra.mxu0 0.0
        %972 = vmatprep.subr.mxu0 0.0
        %973 = vmatpush1.msra.mxu0 0.0
        %974 = vmatprep.subr.mxu0 0.0
        %975 = vmatpush1.msra.mxu0 0.0
        %976 = vmatprep.subr.mxu0 0.0
        %977 = vmatpush1.msra.mxu0 0.0
        %978 = vmatprep.subr.mxu0 0.0
        %979 = vmatpush1.msra.mxu0 0.0
        %980 = vmatprep.subr.mxu0 0.0
        %981 = vmatpush1.msra.mxu0 0.0
        %982 = vmatprep.subr.mxu0 0.0
        %983 = vmatpush1.msra.mxu0 0.0
        %984 = vmatprep.subr.mxu0 0.0
        %985 = vmatpush1.msra.mxu0 0.0
        %986 = vmatprep.subr.mxu0 0.0
        %987 = vmatpush1.msra.mxu0 0.0
        %988 = vmatprep.subr.mxu0 0.0
        %989 = vmatpush1.msra.mxu0 0.0
        %990 = vmatprep.subr.mxu0 0.0
        %991 = vmatpush1.msra.mxu0 0.0
        %992 = vmatprep.subr.mxu0 0.0
        %993 = vmatpush1.msra.mxu0 0.0
        %994 = vmatprep.subr.mxu0 0.0
        %995 = vmatpush1.msra.mxu0 0.0
        %996 = vmatprep.subr.mxu0 0.0
        %997 = vmatpush1.msra.mxu0 0.0
        %998 = vmatprep.subr.mxu0 0.0
        %999 = vmatpush1.msra.mxu0 0.0
        %1000 = vmatprep.subr.mxu0 0.0
        %1001 = vmatpush1.msra.mxu0 0.0
        %1002 = vmatprep.subr.mxu0 0.0
        %1003 = vmatpush1.msra.mxu0 0.0
        %1004 = vmatprep.subr.mxu0 0.0
        %1005 = vmatpush1.msra.mxu0 0.0
        %1006 = vmatprep.subr.mxu0 0.0
        %1007 = vmatpush1.msra.mxu0 0.0
        %1008 = vmatprep.subr.mxu0 0.0
        %1009 = vmatpush1.msra.mxu0 0.0
        %1010 = vmatprep.subr.mxu0 0.0
        %1011 = vmatpush1.msra.mxu0 0.0
        %1012 = vmatprep.subr.mxu0 0.0
        %1013 = vmatpush1.msra.mxu0 0.0
        %1014 = vmatprep.subr.mxu0 0.0
        %1015 = vmatpush1.msra.mxu0 0.0
        %1016 = vmatprep.mubr.f32.mxu0 0.0
        %1017 = vmatmul.mubr.f32.gmra.mrb[0].mxu0 %v950
        %v1018 = vpop.f32.mrb[0].mxu0
        %v1019 = vadd.f32 0.0, %v1018
        %v1020 = vpop.f32.mrb[0].mxu0
        %1021 = vdwg.mxu0
        %v1022 = vadd.f32 %v949, %v1019
        %v1023 = vxor.u32 %v1022, 2147483648
        %v1024 = vmul.f32 %v1023, 1.442695
        %v1025 = vpow.pop %v1024
        %v1026 = vadd.f32 %v1025, 1.0
        %v1027 = vrcp.pop %v1026
        %v1028 = vmul.f32 1.0, %v1027
        %v1029 = vadd.f32 %v1019, %v493
        %1031 = vrot.lane.b32.xlu0 %v1029, 64
        %v1032 = vpop.permute.xlu0 %1031
        %v1034 = vmul.f32 %v1028, %v1032
        %1036 = vrot.lane.b32.xlu0 %v1034, 64
        %v1037 = vpop.permute.xlu0 %1036
        %v1039 = vadd.f32 %v949, %v1037
        %v1040 = vtanh.pop %v1039
        %v1041 = vsub.f32 1.0, %v1028
        %1043 = vrot.lane.b32.xlu0 %v1040, 96
        %v1044 = vpop.permute.xlu0 %1043
        %v1046 = vmul.f32 %v1041, %v1044
        %v1047 = vmul.f32 %v1028, %v942
        %v1048 = vadd.f32 %v1046, %v1047
        %1050 = vrot.lane.b32.xlu0 %v1048, 96
        %v1051 = vpop.permute.xlu0 %1050
        %1053 = vst.msk [vmem:[#allocation4 + $0xa] sm:$0x3] %vm522, %v1051
        %s1054 = scalar_lea.vmem %s372, 12
        %v1055 = vld [vmem:[%s1054] sm:$0x3]
        %v1056 = vsel %vm411, %v1051, 0
        %1058 = vmatprep.subr.mxu0 0.0
        %1059 = vmatpush1.msra.mxu0 %v384
        %1060 = vmatprep.subr.mxu0 0.0
        %1061 = vmatpush1.msra.mxu0 %v385
        %1062 = vmatprep.subr.mxu0 0.0
        %1063 = vmatpush1.msra.mxu0 %v386
        %1064 = vmatprep.subr.mxu0 0.0
        %1065 = vmatpush1.msra.mxu0 %v387
        %1066 = vmatprep.subr.mxu0 0.0
        %1067 = vmatpush1.msra.mxu0 0.0
        %1068 = vmatprep.subr.mxu0 0.0
        %1069 = vmatpush1.msra.mxu0 0.0
        %1070 = vmatprep.subr.mxu0 0.0
        %1071 = vmatpush1.msra.mxu0 0.0
        %1072 = vmatprep.subr.mxu0 0.0
        %1073 = vmatpush1.msra.mxu0 0.0
        %1074 = vmatprep.subr.mxu0 0.0
        %1075 = vmatpush1.msra.mxu0 0.0
        %1076 = vmatprep.subr.mxu0 0.0
        %1077 = vmatpush1.msra.mxu0 0.0
        %1078 = vmatprep.subr.mxu0 0.0
        %1079 = vmatpush1.msra.mxu0 0.0
        %1080 = vmatprep.subr.mxu0 0.0
        %1081 = vmatpush1.msra.mxu0 0.0
        %1082 = vmatprep.subr.mxu0 0.0
        %1083 = vmatpush1.msra.mxu0 0.0
        %1084 = vmatprep.subr.mxu0 0.0
        %1085 = vmatpush1.msra.mxu0 0.0
        %1086 = vmatprep.subr.mxu0 0.0
        %1087 = vmatpush1.msra.mxu0 0.0
        %1088 = vmatprep.subr.mxu0 0.0
        %1089 = vmatpush1.msra.mxu0 0.0
        %1090 = vmatprep.subr.mxu0 0.0
        %1091 = vmatpush1.msra.mxu0 0.0
        %1092 = vmatprep.subr.mxu0 0.0
        %1093 = vmatpush1.msra.mxu0 0.0
        %1094 = vmatprep.subr.mxu0 0.0
        %1095 = vmatpush1.msra.mxu0 0.0
        %1096 = vmatprep.subr.mxu0 0.0
        %1097 = vmatpush1.msra.mxu0 0.0
        %1098 = vmatprep.subr.mxu0 0.0
        %1099 = vmatpush1.msra.mxu0 0.0
        %1100 = vmatprep.subr.mxu0 0.0
        %1101 = vmatpush1.msra.mxu0 0.0
        %1102 = vmatprep.subr.mxu0 0.0
        %1103 = vmatpush1.msra.mxu0 0.0
        %1104 = vmatprep.subr.mxu0 0.0
        %1105 = vmatpush1.msra.mxu0 0.0
        %1106 = vmatprep.subr.mxu0 0.0
        %1107 = vmatpush1.msra.mxu0 0.0
        %1108 = vmatprep.subr.mxu0 0.0
        %1109 = vmatpush1.msra.mxu0 0.0
        %1110 = vmatprep.subr.mxu0 0.0
        %1111 = vmatpush1.msra.mxu0 0.0
        %1112 = vmatprep.subr.mxu0 0.0
        %1113 = vmatpush1.msra.mxu0 0.0
        %1114 = vmatprep.subr.mxu0 0.0
        %1115 = vmatpush1.msra.mxu0 0.0
        %1116 = vmatprep.subr.mxu0 0.0
        %1117 = vmatpush1.msra.mxu0 0.0
        %1118 = vmatprep.subr.mxu0 0.0
        %1119 = vmatpush1.msra.mxu0 0.0
        %1120 = vmatprep.subr.mxu0 0.0
        %1121 = vmatpush1.msra.mxu0 0.0
        %1122 = vmatprep.mubr.f32.mxu0 0.0
        %1123 = vmatmul.mubr.f32.gmra.mrb[0].mxu0 %v1056
        %v1124 = vpop.f32.mrb[0].mxu0
        %v1125 = vadd.f32 0.0, %v1124
        %v1126 = vpop.f32.mrb[0].mxu0
        %1127 = vdwg.mxu0
        %v1128 = vadd.f32 %v1055, %v1125
        %v1129 = vxor.u32 %v1128, 2147483648
        %v1130 = vmul.f32 %v1129, 1.442695
        %v1131 = vpow.pop %v1130
        %v1132 = vadd.f32 %v1131, 1.0
        %v1133 = vrcp.pop %v1132
        %v1134 = vmul.f32 1.0, %v1133
        %v1135 = vadd.f32 %v1125, %v493
        %1137 = vrot.lane.b32.xlu0 %v1135, 64
        %v1138 = vpop.permute.xlu0 %1137
        %v1140 = vmul.f32 %v1134, %v1138
        %1142 = vrot.lane.b32.xlu0 %v1140, 64
        %v1143 = vpop.permute.xlu0 %1142
        %v1145 = vadd.f32 %v1055, %v1143
        %v1146 = vtanh.pop %v1145
        %v1147 = vsub.f32 1.0, %v1134
        %1149 = vrot.lane.b32.xlu0 %v1146, 96
        %v1150 = vpop.permute.xlu0 %1149
        %v1152 = vmul.f32 %v1147, %v1150
        %v1153 = vmul.f32 %v1134, %v1048
        %v1154 = vadd.f32 %v1152, %v1153
        %1156 = vrot.lane.b32.xlu0 %v1154, 96
        %v1157 = vpop.permute.xlu0 %1156
        %1159 = vst.msk [vmem:[#allocation4 + $0xc] sm:$0x3] %vm522, %v1157
        %s1160 = scalar_lea.vmem %s372, 14
        %v1161 = vld [vmem:[%s1160] sm:$0x3]
        %v1162 = vsel %vm411, %v1157, 0
        %1164 = vmatprep.subr.mxu0 0.0
        %1165 = vmatpush1.msra.mxu0 %v384
        %1166 = vmatprep.subr.mxu0 0.0
        %1167 = vmatpush1.msra.mxu0 %v385
        %1168 = vmatprep.subr.mxu0 0.0
        %1169 = vmatpush1.msra.mxu0 %v386
        %1170 = vmatprep.subr.mxu0 0.0
        %1171 = vmatpush1.msra.mxu0 %v387
        %1172 = vmatprep.subr.mxu0 0.0
        %1173 = vmatpush1.msra.mxu0 0.0
        %1174 = vmatprep.subr.mxu0 0.0
        %1175 = vmatpush1.msra.mxu0 0.0
        %1176 = vmatprep.subr.mxu0 0.0
        %1177 = vmatpush1.msra.mxu0 0.0
        %1178 = vmatprep.subr.mxu0 0.0
        %1179 = vmatpush1.msra.mxu0 0.0
        %1180 = vmatprep.subr.mxu0 0.0
        %1181 = vmatpush1.msra.mxu0 0.0
        %1182 = vmatprep.subr.mxu0 0.0
        %1183 = vmatpush1.msra.mxu0 0.0
        %1184 = vmatprep.subr.mxu0 0.0
        %1185 = vmatpush1.msra.mxu0 0.0
        %1186 = vmatprep.subr.mxu0 0.0
        %1187 = vmatpush1.msra.mxu0 0.0
        %1188 = vmatprep.subr.mxu0 0.0
        %1189 = vmatpush1.msra.mxu0 0.0
        %1190 = vmatprep.subr.mxu0 0.0
        %1191 = vmatpush1.msra.mxu0 0.0
        %1192 = vmatprep.subr.mxu0 0.0
        %1193 = vmatpush1.msra.mxu0 0.0
        %1194 = vmatprep.subr.mxu0 0.0
        %1195 = vmatpush1.msra.mxu0 0.0
        %1196 = vmatprep.subr.mxu0 0.0
        %1197 = vmatpush1.msra.mxu0 0.0
        %1198 = vmatprep.subr.mxu0 0.0
        %1199 = vmatpush1.msra.mxu0 0.0
        %1200 = vmatprep.subr.mxu0 0.0
        %1201 = vmatpush1.msra.mxu0 0.0
        %1202 = vmatprep.subr.mxu0 0.0
        %1203 = vmatpush1.msra.mxu0 0.0
        %1204 = vmatprep.subr.mxu0 0.0
        %1205 = vmatpush1.msra.mxu0 0.0
        %1206 = vmatprep.subr.mxu0 0.0
        %1207 = vmatpush1.msra.mxu0 0.0
        %1208 = vmatprep.subr.mxu0 0.0
        %1209 = vmatpush1.msra.mxu0 0.0
        %1210 = vmatprep.subr.mxu0 0.0
        %1211 = vmatpush1.msra.mxu0 0.0
        %1212 = vmatprep.subr.mxu0 0.0
        %1213 = vmatpush1.msra.mxu0 0.0
        %1214 = vmatprep.subr.mxu0 0.0
        %1215 = vmatpush1.msra.mxu0 0.0
        %1216 = vmatprep.subr.mxu0 0.0
        %1217 = vmatpush1.msra.mxu0 0.0
        %1218 = vmatprep.subr.mxu0 0.0
        %1219 = vmatpush1.msra.mxu0 0.0
        %1220 = vmatprep.subr.mxu0 0.0
        %1221 = vmatpush1.msra.mxu0 0.0
        %1222 = vmatprep.subr.mxu0 0.0
        %1223 = vmatpush1.msra.mxu0 0.0
        %1224 = vmatprep.subr.mxu0 0.0
        %1225 = vmatpush1.msra.mxu0 0.0
        %1226 = vmatprep.subr.mxu0 0.0
        %1227 = vmatpush1.msra.mxu0 0.0
        %1228 = vmatprep.mubr.f32.mxu0 0.0
        %1229 = vmatmul.mubr.f32.gmra.mrb[0].mxu0 %v1162
        %v1230 = vpop.f32.mrb[0].mxu0
        %v1231 = vadd.f32 0.0, %v1230
        %v1232 = vpop.f32.mrb[0].mxu0
        %1233 = vdwg.mxu0
        %v1234 = vadd.f32 %v1161, %v1231
        %v1235 = vxor.u32 %v1234, 2147483648
        %v1236 = vmul.f32 %v1235, 1.442695
        %v1237 = vpow.pop %v1236
        %v1238 = vadd.f32 %v1237, 1.0
        %v1239 = vrcp.pop %v1238
        %v1240 = vmul.f32 1.0, %v1239
        %v1241 = vadd.f32 %v1231, %v493
        %1243 = vrot.lane.b32.xlu0 %v1241, 64
        %v1244 = vpop.permute.xlu0 %1243
        %v1246 = vmul.f32 %v1240, %v1244
        %1248 = vrot.lane.b32.xlu0 %v1246, 64
        %v1249 = vpop.permute.xlu0 %1248
        %v1251 = vadd.f32 %v1161, %v1249
        %v1252 = vtanh.pop %v1251
        %v1253 = vsub.f32 1.0, %v1240
        %1255 = vrot.lane.b32.xlu0 %v1252, 96
        %v1256 = vpop.permute.xlu0 %1255
        %v1258 = vmul.f32 %v1253, %v1256
        %v1259 = vmul.f32 %v1240, %v1154
        %v1260 = vadd.f32 %v1258, %v1259
        %1262 = vrot.lane.b32.xlu0 %v1260, 96
        %v1263 = vpop.permute.xlu0 %1262
        %1265 = vst.msk [vmem:[#allocation4 + $0xe] sm:$0x3] %vm522, %v1263
        %1266 = vst.msk [vmem:[#allocation2] sm:$0x3] %vm522, %v1263
        %v1267 = vld [vmem:[#allocation4] sm:$0xff]
        %v1268 = vld [vmem:[#allocation4 + $0x8] sm:$0xff]
        %v1270 = vlaneseq
        %v1271 = vshrl.u32 %v1270, 7
        %v1272 = vsub.s32 0, %v1271
        %v1273 = vrot.slane %v408, %v1272
        %v1276 = vsel %vm411, %v1267, 0
        %v1279 = vsel %vm411, %v1268, 0
        %1281 = vmatprep.subr.mxu0 0.0
        %1282 = vmatpush1.msra.mxu0 %v388
        %1283 = vmatprep.subr.mxu0 0.0
        %1284 = vmatpush1.msra.mxu0 %v389
        %1285 = vmatprep.subr.mxu0 0.0
        %1286 = vmatpush1.msra.mxu0 %v390
        %1287 = vmatprep.subr.mxu0 0.0
        %1288 = vmatpush1.msra.mxu0 %v391
        %1289 = vmatprep.subr.mxu0 0.0
        %1290 = vmatpush1.msra.mxu0 0.0
        %1291 = vmatprep.subr.mxu0 0.0
        %1292 = vmatpush1.msra.mxu0 0.0
        %1293 = vmatprep.subr.mxu0 0.0
        %1294 = vmatpush1.msra.mxu0 0.0
        %1295 = vmatprep.subr.mxu0 0.0
        %1296 = vmatpush1.msra.mxu0 0.0
        %1297 = vmatprep.subr.mxu0 0.0
        %1298 = vmatpush1.msra.mxu0 0.0
        %1299 = vmatprep.subr.mxu0 0.0
        %1300 = vmatpush1.msra.mxu0 0.0
        %1301 = vmatprep.subr.mxu0 0.0
        %1302 = vmatpush1.msra.mxu0 0.0
        %1303 = vmatprep.subr.mxu0 0.0
        %1304 = vmatpush1.msra.mxu0 0.0
        %1305 = vmatprep.subr.mxu0 0.0
        %1306 = vmatpush1.msra.mxu0 0.0
        %1307 = vmatprep.subr.mxu0 0.0
        %1308 = vmatpush1.msra.mxu0 0.0
        %1309 = vmatprep.subr.mxu0 0.0
        %1310 = vmatpush1.msra.mxu0 0.0
        %1311 = vmatprep.subr.mxu0 0.0
        %1312 = vmatpush1.msra.mxu0 0.0
        %1313 = vmatprep.subr.mxu0 0.0
        %1314 = vmatpush1.msra.mxu0 0.0
        %1315 = vmatprep.subr.mxu0 0.0
        %1316 = vmatpush1.msra.mxu0 0.0
        %1317 = vmatprep.subr.mxu0 0.0
        %1318 = vmatpush1.msra.mxu0 0.0
        %1319 = vmatprep.subr.mxu0 0.0
        %1320 = vmatpush1.msra.mxu0 0.0
        %1321 = vmatprep.subr.mxu0 0.0
        %1322 = vmatpush1.msra.mxu0 0.0
        %1323 = vmatprep.subr.mxu0 0.0
        %1324 = vmatpush1.msra.mxu0 0.0
        %1325 = vmatprep.subr.mxu0 0.0
        %1326 = vmatpush1.msra.mxu0 0.0
        %1327 = vmatprep.subr.mxu0 0.0
        %1328 = vmatpush1.msra.mxu0 0.0
        %1329 = vmatprep.subr.mxu0 0.0
        %1330 = vmatpush1.msra.mxu0 0.0
        %1331 = vmatprep.subr.mxu0 0.0
        %1332 = vmatpush1.msra.mxu0 0.0
        %1333 = vmatprep.subr.mxu0 0.0
        %1334 = vmatpush1.msra.mxu0 0.0
        %1335 = vmatprep.subr.mxu0 0.0
        %1336 = vmatpush1.msra.mxu0 0.0
        %1337 = vmatprep.subr.mxu0 0.0
        %1338 = vmatpush1.msra.mxu0 0.0
        %1339 = vmatprep.subr.mxu0 0.0
        %1340 = vmatpush1.msra.mxu0 0.0
        %1341 = vmatprep.subr.mxu0 0.0
        %1342 = vmatpush1.msra.mxu0 0.0
        %1343 = vmatprep.subr.mxu0 0.0
        %1344 = vmatpush1.msra.mxu0 0.0
        %1345 = vmatprep.mubr.f32.mxu0 0.0
        %1346 = vmatmul.mubr.f32.gmra.mrb[0].mxu0 %v1276
        %v1347 = vpop.f32.mrb[0].mxu0
        %v1348 = vadd.f32 %v1273, %v1347
        %v1349 = vpop.f32.mrb[0].mxu0
        %1350 = vmatprep.mubr.f32.mxu0 0.0
        %1351 = vmatmul.mubr.f32.gmra.mrb[0].mxu0 %v1279
        %v1352 = vpop.f32.mrb[0].mxu0
        %v1353 = vadd.f32 %v1273, %v1352
        %v1354 = vpop.f32.mrb[0].mxu0
        %1355 = vdwg.mxu0
        %v1356 = vld [vmem:[#allocation3] sm:$0x3]
        %v1358 = vsel %vm411, %v1356, 0
        %1360 = vmatprep.subr.mxu0 0.0
        %1361 = vmatpush1.msra.mxu0 %v392
        %1362 = vmatprep.subr.mxu0 0.0
        %1363 = vmatpush1.msra.mxu0 %v393
        %1364 = vmatprep.subr.mxu0 0.0
        %1365 = vmatpush1.msra.mxu0 %v394
        %1366 = vmatprep.subr.mxu0 0.0
        %1367 = vmatpush1.msra.mxu0 %v395
        %1368 = vmatprep.subr.mxu0 0.0
        %1369 = vmatpush1.msra.mxu0 0.0
        %1370 = vmatprep.subr.mxu0 0.0
        %1371 = vmatpush1.msra.mxu0 0.0
        %1372 = vmatprep.subr.mxu0 0.0
        %1373 = vmatpush1.msra.mxu0 0.0
        %1374 = vmatprep.subr.mxu0 0.0
        %1375 = vmatpush1.msra.mxu0 0.0
        %1376 = vmatprep.subr.mxu0 0.0
        %1377 = vmatpush1.msra.mxu0 0.0
        %1378 = vmatprep.subr.mxu0 0.0
        %1379 = vmatpush1.msra.mxu0 0.0
        %1380 = vmatprep.subr.mxu0 0.0
        %1381 = vmatpush1.msra.mxu0 0.0
        %1382 = vmatprep.subr.mxu0 0.0
        %1383 = vmatpush1.msra.mxu0 0.0
        %1384 = vmatprep.subr.mxu0 0.0
        %1385 = vmatpush1.msra.mxu0 0.0
        %1386 = vmatprep.subr.mxu0 0.0
        %1387 = vmatpush1.msra.mxu0 0.0
        %1388 = vmatprep.subr.mxu0 0.0
        %1389 = vmatpush1.msra.mxu0 0.0
        %1390 = vmatprep.subr.mxu0 0.0
        %1391 = vmatpush1.msra.mxu0 0.0
        %1392 = vmatprep.subr.mxu0 0.0
        %1393 = vmatpush1.msra.mxu0 0.0
        %1394 = vmatprep.subr.mxu0 0.0
        %1395 = vmatpush1.msra.mxu0 0.0
        %1396 = vmatprep.subr.mxu0 0.0
        %1397 = vmatpush1.msra.mxu0 0.0
        %1398 = vmatprep.subr.mxu0 0.0
        %1399 = vmatpush1.msra.mxu0 0.0
        %1400 = vmatprep.subr.mxu0 0.0
        %1401 = vmatpush1.msra.mxu0 0.0
        %1402 = vmatprep.subr.mxu0 0.0
        %1403 = vmatpush1.msra.mxu0 0.0
        %1404 = vmatprep.subr.mxu0 0.0
        %1405 = vmatpush1.msra.mxu0 0.0
        %1406 = vmatprep.subr.mxu0 0.0
        %1407 = vmatpush1.msra.mxu0 0.0
        %1408 = vmatprep.subr.mxu0 0.0
        %1409 = vmatpush1.msra.mxu0 0.0
        %1410 = vmatprep.subr.mxu0 0.0
        %1411 = vmatpush1.msra.mxu0 0.0
        %1412 = vmatprep.subr.mxu0 0.0
        %1413 = vmatpush1.msra.mxu0 0.0
        %1414 = vmatprep.subr.mxu0 0.0
        %1415 = vmatpush1.msra.mxu0 0.0
        %1416 = vmatprep.subr.mxu0 0.0
        %1417 = vmatpush1.msra.mxu0 0.0
        %1418 = vmatprep.subr.mxu0 0.0
        %1419 = vmatpush1.msra.mxu0 0.0
        %1420 = vmatprep.subr.mxu0 0.0
        %1421 = vmatpush1.msra.mxu0 0.0
        %1422 = vmatprep.subr.mxu0 0.0
        %1423 = vmatpush1.msra.mxu0 0.0
        %1424 = vmatprep.mubr.f32.mxu0 0.0
        %1425 = vmatmul.mubr.f32.gmra.mrb[0].mxu0 %v1358
        %v1426 = vpop.f32.mrb[0].mxu0
        %v1427 = vadd.f32 0.0, %v1426
        %v1428 = vpop.f32.mrb[0].mxu0
        %1429 = vdwg.mxu0
        %v1430 = vadd.f32 %v1348, %v1427
        %v1431 = vxor.u32 %v1430, 2147483648
        %v1432 = vmul.f32 %v1431, 1.442695
        %v1433 = vpow.pop %v1432
        %v1434 = vadd.f32 %v1433, 1.0
        %v1435 = vrcp.pop %v1434
        %v1436 = vmul.f32 1.0, %v1435
        %1437 = vrot.lane.b32.xlu0 %v407, 64
        %v1438 = vpop.permute.xlu0 %1437
        %v1440 = vadd.f32 %v1427, %v1438
        %1442 = vrot.lane.b32.xlu0 %v1440, 64
        %v1443 = vpop.permute.xlu0 %1442
        %v1445 = vmul.f32 %v1436, %v1443
        %1447 = vrot.lane.b32.xlu0 %v1445, 64
        %v1448 = vpop.permute.xlu0 %1447
        %v1450 = vadd.f32 %v1348, %v1448
        %v1451 = vtanh.pop %v1450
        %v1452 = vsub.f32 1.0, %v1436
        %1454 = vrot.lane.b32.xlu0 %v1451, 96
        %v1455 = vpop.permute.xlu0 %1454
        %v1457 = vmul.f32 %v1452, %v1455
        %1458 = vrot.lane.b32.xlu0 %v1356, 32
        %v1459 = vpop.permute.xlu0 %1458
        %v1461 = vmul.f32 %v1436, %v1459
        %v1462 = vadd.f32 %v1457, %v1461
        %1464 = vrot.lane.b32.xlu0 %v1462, 96
        %v1465 = vpop.permute.xlu0 %1464
        %v1466 = vsel %vm411, %v1465, 0
        %1468 = vmatprep.subr.mxu0 0.0
        %1469 = vmatpush1.msra.mxu0 %v392
        %1470 = vmatprep.subr.mxu0 0.0
        %1471 = vmatpush1.msra.mxu0 %v393
        %1472 = vmatprep.subr.mxu0 0.0
        %1473 = vmatpush1.msra.mxu0 %v394
        %1474 = vmatprep.subr.mxu0 0.0
        %1475 = vmatpush1.msra.mxu0 %v395
        %1476 = vmatprep.subr.mxu0 0.0
        %1477 = vmatpush1.msra.mxu0 0.0
        %1478 = vmatprep.subr.mxu0 0.0
        %1479 = vmatpush1.msra.mxu0 0.0
        %1480 = vmatprep.subr.mxu0 0.0
        %1481 = vmatpush1.msra.mxu0 0.0
        %1482 = vmatprep.subr.mxu0 0.0
        %1483 = vmatpush1.msra.mxu0 0.0
        %1484 = vmatprep.subr.mxu0 0.0
        %1485 = vmatpush1.msra.mxu0 0.0
        %1486 = vmatprep.subr.mxu0 0.0
        %1487 = vmatpush1.msra.mxu0 0.0
        %1488 = vmatprep.subr.mxu0 0.0
        %1489 = vmatpush1.msra.mxu0 0.0
        %1490 = vmatprep.subr.mxu0 0.0
        %1491 = vmatpush1.msra.mxu0 0.0
        %1492 = vmatprep.subr.mxu0 0.0
        %1493 = vmatpush1.msra.mxu0 0.0
        %1494 = vmatprep.subr.mxu0 0.0
        %1495 = vmatpush1.msra.mxu0 0.0
        %1496 = vmatprep.subr.mxu0 0.0
        %1497 = vmatpush1.msra.mxu0 0.0
        %1498 = vmatprep.subr.mxu0 0.0
        %1499 = vmatpush1.msra.mxu0 0.0
        %1500 = vmatprep.subr.mxu0 0.0
        %1501 = vmatpush1.msra.mxu0 0.0
        %1502 = vmatprep.subr.mxu0 0.0
        %1503 = vmatpush1.msra.mxu0 0.0
        %1504 = vmatprep.subr.mxu0 0.0
        %1505 = vmatpush1.msra.mxu0 0.0
        %1506 = vmatprep.subr.mxu0 0.0
        %1507 = vmatpush1.msra.mxu0 0.0
        %1508 = vmatprep.subr.mxu0 0.0
        %1509 = vmatpush1.msra.mxu0 0.0
        %1510 = vmatprep.subr.mxu0 0.0
        %1511 = vmatpush1.msra.mxu0 0.0
        %1512 = vmatprep.subr.mxu0 0.0
        %1513 = vmatpush1.msra.mxu0 0.0
        %1514 = vmatprep.subr.mxu0 0.0
        %1515 = vmatpush1.msra.mxu0 0.0
        %1516 = vmatprep.subr.mxu0 0.0
        %1517 = vmatpush1.msra.mxu0 0.0
        %1518 = vmatprep.subr.mxu0 0.0
        %1519 = vmatpush1.msra.mxu0 0.0
        %1520 = vmatprep.subr.mxu0 0.0
        %1521 = vmatpush1.msra.mxu0 0.0
        %1522 = vmatprep.subr.mxu0 0.0
        %1523 = vmatpush1.msra.mxu0 0.0
        %1524 = vmatprep.subr.mxu0 0.0
        %1525 = vmatpush1.msra.mxu0 0.0
        %1526 = vmatprep.subr.mxu0 0.0
        %1527 = vmatpush1.msra.mxu0 0.0
        %1528 = vmatprep.subr.mxu0 0.0
        %1529 = vmatpush1.msra.mxu0 0.0
        %1530 = vmatprep.subr.mxu0 0.0
        %1531 = vmatpush1.msra.mxu0 0.0
        %1532 = vmatprep.mubr.f32.mxu0 0.0
        %1533 = vmatmul.mubr.f32.gmra.mrb[0].mxu0 %v1466
        %v1534 = vpop.f32.mrb[0].mxu0
        %v1535 = vadd.f32 0.0, %v1534
        %v1536 = vpop.f32.mrb[0].mxu0
        %1537 = vdwg.mxu0
        %v1539 = vrot.slane %v1535, 6
        %v1541 = vadd.f32 %v1348, %v1539
        %v1542 = vxor.u32 %v1541, 2147483648
        %v1543 = vmul.f32 %v1542, 1.442695
        %v1544 = vpow.pop %v1543
        %v1545 = vadd.f32 %v1544, 1.0
        %v1546 = vrcp.pop %v1545
        %v1547 = vmul.f32 1.0, %v1546
        %v1548 = vadd.f32 %v1535, %v1438
        %v1550 = vrot.slane %v1548, 6
        %1551 = vrot.lane.b32.xlu0 %v1550, 64
        %v1552 = vpop.permute.xlu0 %1551
        %v1554 = vmul.f32 %v1547, %v1552
        %1556 = vrot.lane.b32.xlu0 %v1554, 64
        %v1557 = vpop.permute.xlu0 %1556
        %v1559 = vadd.f32 %v1348, %v1557
        %v1560 = vtanh.pop %v1559
        %v1561 = vsub.f32 1.0, %v1547
        %1563 = vrot.lane.b32.xlu0 %v1560, 96
        %v1564 = vpop.permute.xlu0 %1563
        %v1566 = vmul.f32 %v1561, %v1564
        %v1567 = vrot.slane %v1462, 6
        %v1569 = vmul.f32 %v1547, %v1567
        %v1570 = vadd.f32 %v1566, %v1569
        %v1572 = vrot.slane %v1570, 2
        %1573 = vrot.lane.b32.xlu0 %v1572, 96
        %v1574 = vpop.permute.xlu0 %1573
        %v1575 = vsel %vm411, %v1574, 0
        %1577 = vmatprep.subr.mxu0 0.0
        %1578 = vmatpush1.msra.mxu0 %v392
        %1579 = vmatprep.subr.mxu0 0.0
        %1580 = vmatpush1.msra.mxu0 %v393
        %1581 = vmatprep.subr.mxu0 0.0
        %1582 = vmatpush1.msra.mxu0 %v394
        %1583 = vmatprep.subr.mxu0 0.0
        %1584 = vmatpush1.msra.mxu0 %v395
        %1585 = vmatprep.subr.mxu0 0.0
        %1586 = vmatpush1.msra.mxu0 0.0
        %1587 = vmatprep.subr.mxu0 0.0
        %1588 = vmatpush1.msra.mxu0 0.0
        %1589 = vmatprep.subr.mxu0 0.0
        %1590 = vmatpush1.msra.mxu0 0.0
        %1591 = vmatprep.subr.mxu0 0.0
        %1592 = vmatpush1.msra.mxu0 0.0
        %1593 = vmatprep.subr.mxu0 0.0
        %1594 = vmatpush1.msra.mxu0 0.0
        %1595 = vmatprep.subr.mxu0 0.0
        %1596 = vmatpush1.msra.mxu0 0.0
        %1597 = vmatprep.subr.mxu0 0.0
        %1598 = vmatpush1.msra.mxu0 0.0
        %1599 = vmatprep.subr.mxu0 0.0
        %1600 = vmatpush1.msra.mxu0 0.0
        %1601 = vmatprep.subr.mxu0 0.0
        %1602 = vmatpush1.msra.mxu0 0.0
        %1603 = vmatprep.subr.mxu0 0.0
        %1604 = vmatpush1.msra.mxu0 0.0
        %1605 = vmatprep.subr.mxu0 0.0
        %1606 = vmatpush1.msra.mxu0 0.0
        %1607 = vmatprep.subr.mxu0 0.0
        %1608 = vmatpush1.msra.mxu0 0.0
        %1609 = vmatprep.subr.mxu0 0.0
        %1610 = vmatpush1.msra.mxu0 0.0
        %1611 = vmatprep.subr.mxu0 0.0
        %1612 = vmatpush1.msra.mxu0 0.0
        %1613 = vmatprep.subr.mxu0 0.0
        %1614 = vmatpush1.msra.mxu0 0.0
        %1615 = vmatprep.subr.mxu0 0.0
        %1616 = vmatpush1.msra.mxu0 0.0
        %1617 = vmatprep.subr.mxu0 0.0
        %1618 = vmatpush1.msra.mxu0 0.0
        %1619 = vmatprep.subr.mxu0 0.0
        %1620 = vmatpush1.msra.mxu0 0.0
        %1621 = vmatprep.subr.mxu0 0.0
        %1622 = vmatpush1.msra.mxu0 0.0
        %1623 = vmatprep.subr.mxu0 0.0
        %1624 = vmatpush1.msra.mxu0 0.0
        %1625 = vmatprep.subr.mxu0 0.0
        %1626 = vmatpush1.msra.mxu0 0.0
        %1627 = vmatprep.subr.mxu0 0.0
        %1628 = vmatpush1.msra.mxu0 0.0
        %1629 = vmatprep.subr.mxu0 0.0
        %1630 = vmatpush1.msra.mxu0 0.0
        %1631 = vmatprep.subr.mxu0 0.0
        %1632 = vmatpush1.msra.mxu0 0.0
        %1633 = vmatprep.subr.mxu0 0.0
        %1634 = vmatpush1.msra.mxu0 0.0
        %1635 = vmatprep.subr.mxu0 0.0
        %1636 = vmatpush1.msra.mxu0 0.0
        %1637 = vmatprep.subr.mxu0 0.0
        %1638 = vmatpush1.msra.mxu0 0.0
        %1639 = vmatprep.subr.mxu0 0.0
        %1640 = vmatpush1.msra.mxu0 0.0
        %1641 = vmatprep.mubr.f32.mxu0 0.0
        %1642 = vmatmul.mubr.f32.gmra.mrb[0].mxu0 %v1575
        %v1643 = vpop.f32.mrb[0].mxu0
        %v1644 = vadd.f32 0.0, %v1643
        %v1645 = vpop.f32.mrb[0].mxu0
        %1646 = vdwg.mxu0
        %v1648 = vrot.slane %v1644, 4
        %v1650 = vadd.f32 %v1348, %v1648
        %v1651 = vxor.u32 %v1650, 2147483648
        %v1652 = vmul.f32 %v1651, 1.442695
        %v1653 = vpow.pop %v1652
        %v1654 = vadd.f32 %v1653, 1.0
        %v1655 = vrcp.pop %v1654
        %v1656 = vmul.f32 1.0, %v1655
        %v1657 = vadd.f32 %v1644, %v1438
        %v1659 = vrot.slane %v1657, 4
        %1660 = vrot.lane.b32.xlu0 %v1659, 64
        %v1661 = vpop.permute.xlu0 %1660
        %v1663 = vmul.f32 %v1656, %v1661
        %1665 = vrot.lane.b32.xlu0 %v1663, 64
        %v1666 = vpop.permute.xlu0 %1665
        %v1668 = vadd.f32 %v1348, %v1666
        %v1669 = vtanh.pop %v1668
        %v1670 = vsub.f32 1.0, %v1656
        %1672 = vrot.lane.b32.xlu0 %v1669, 96
        %v1673 = vpop.permute.xlu0 %1672
        %v1675 = vmul.f32 %v1670, %v1673
        %v1676 = vrot.slane %v1570, 6
        %v1678 = vmul.f32 %v1656, %v1676
        %v1679 = vadd.f32 %v1675, %v1678
        %v1681 = vrot.slane %v1679, 4
        %1682 = vrot.lane.b32.xlu0 %v1681, 96
        %v1683 = vpop.permute.xlu0 %1682
        %v1684 = vsel %vm411, %v1683, 0
        %1686 = vmatprep.subr.mxu0 0.0
        %1687 = vmatpush1.msra.mxu0 %v392
        %1688 = vmatprep.subr.mxu0 0.0
        %1689 = vmatpush1.msra.mxu0 %v393
        %1690 = vmatprep.subr.mxu0 0.0
        %1691 = vmatpush1.msra.mxu0 %v394
        %1692 = vmatprep.subr.mxu0 0.0
        %1693 = vmatpush1.msra.mxu0 %v395
        %1694 = vmatprep.subr.mxu0 0.0
        %1695 = vmatpush1.msra.mxu0 0.0
        %1696 = vmatprep.subr.mxu0 0.0
        %1697 = vmatpush1.msra.mxu0 0.0
        %1698 = vmatprep.subr.mxu0 0.0
        %1699 = vmatpush1.msra.mxu0 0.0
        %1700 = vmatprep.subr.mxu0 0.0
        %1701 = vmatpush1.msra.mxu0 0.0
        %1702 = vmatprep.subr.mxu0 0.0
        %1703 = vmatpush1.msra.mxu0 0.0
        %1704 = vmatprep.subr.mxu0 0.0
        %1705 = vmatpush1.msra.mxu0 0.0
        %1706 = vmatprep.subr.mxu0 0.0
        %1707 = vmatpush1.msra.mxu0 0.0
        %1708 = vmatprep.subr.mxu0 0.0
        %1709 = vmatpush1.msra.mxu0 0.0
        %1710 = vmatprep.subr.mxu0 0.0
        %1711 = vmatpush1.msra.mxu0 0.0
        %1712 = vmatprep.subr.mxu0 0.0
        %1713 = vmatpush1.msra.mxu0 0.0
        %1714 = vmatprep.subr.mxu0 0.0
        %1715 = vmatpush1.msra.mxu0 0.0
        %1716 = vmatprep.subr.mxu0 0.0
        %1717 = vmatpush1.msra.mxu0 0.0
        %1718 = vmatprep.subr.mxu0 0.0
        %1719 = vmatpush1.msra.mxu0 0.0
        %1720 = vmatprep.subr.mxu0 0.0
        %1721 = vmatpush1.msra.mxu0 0.0
        %1722 = vmatprep.subr.mxu0 0.0
        %1723 = vmatpush1.msra.mxu0 0.0
        %1724 = vmatprep.subr.mxu0 0.0
        %1725 = vmatpush1.msra.mxu0 0.0
        %1726 = vmatprep.subr.mxu0 0.0
        %1727 = vmatpush1.msra.mxu0 0.0
        %1728 = vmatprep.subr.mxu0 0.0
        %1729 = vmatpush1.msra.mxu0 0.0
        %1730 = vmatprep.subr.mxu0 0.0
        %1731 = vmatpush1.msra.mxu0 0.0
        %1732 = vmatprep.subr.mxu0 0.0
        %1733 = vmatpush1.msra.mxu0 0.0
        %1734 = vmatprep.subr.mxu0 0.0
        %1735 = vmatpush1.msra.mxu0 0.0
        %1736 = vmatprep.subr.mxu0 0.0
        %1737 = vmatpush1.msra.mxu0 0.0
        %1738 = vmatprep.subr.mxu0 0.0
        %1739 = vmatpush1.msra.mxu0 0.0
        %1740 = vmatprep.subr.mxu0 0.0
        %1741 = vmatpush1.msra.mxu0 0.0
        %1742 = vmatprep.subr.mxu0 0.0
        %1743 = vmatpush1.msra.mxu0 0.0
        %1744 = vmatprep.subr.mxu0 0.0
        %1745 = vmatpush1.msra.mxu0 0.0
        %1746 = vmatprep.subr.mxu0 0.0
        %1747 = vmatpush1.msra.mxu0 0.0
        %1748 = vmatprep.subr.mxu0 0.0
        %1749 = vmatpush1.msra.mxu0 0.0
        %1750 = vmatprep.mubr.f32.mxu0 0.0
        %1751 = vmatmul.mubr.f32.gmra.mrb[0].mxu0 %v1684
        %v1752 = vpop.f32.mrb[0].mxu0
        %v1753 = vadd.f32 0.0, %v1752
        %v1754 = vpop.f32.mrb[0].mxu0
        %1755 = vdwg.mxu0
        %v1757 = vrot.slane %v1753, 2
        %v1759 = vadd.f32 %v1348, %v1757
        %v1760 = vxor.u32 %v1759, 2147483648
        %v1761 = vmul.f32 %v1760, 1.442695
        %v1762 = vpow.pop %v1761
        %v1763 = vadd.f32 %v1762, 1.0
        %v1764 = vrcp.pop %v1763
        %v1765 = vmul.f32 1.0, %v1764
        %v1766 = vadd.f32 %v1753, %v1438
        %v1768 = vrot.slane %v1766, 2
        %1769 = vrot.lane.b32.xlu0 %v1768, 64
        %v1770 = vpop.permute.xlu0 %1769
        %v1772 = vmul.f32 %v1765, %v1770
        %1774 = vrot.lane.b32.xlu0 %v1772, 64
        %v1775 = vpop.permute.xlu0 %1774
        %v1777 = vadd.f32 %v1348, %v1775
        %v1778 = vtanh.pop %v1777
        %v1779 = vsub.f32 1.0, %v1765
        %1781 = vrot.lane.b32.xlu0 %v1778, 96
        %v1782 = vpop.permute.xlu0 %1781
        %v1784 = vmul.f32 %v1779, %v1782
        %v1785 = vrot.slane %v1679, 6
        %v1787 = vmul.f32 %v1765, %v1785
        %v1788 = vadd.f32 %v1784, %v1787
        %v1790 = vrot.slane %v1788, 6
        %1791 = vrot.lane.b32.xlu0 %v1790, 96
        %v1792 = vpop.permute.xlu0 %1791
        %v1793 = vsel %vm411, %v1792, 0
        %1795 = vmatprep.subr.mxu0 0.0
        %1796 = vmatpush1.msra.mxu0 %v392
        %1797 = vmatprep.subr.mxu0 0.0
        %1798 = vmatpush1.msra.mxu0 %v393
        %1799 = vmatprep.subr.mxu0 0.0
        %1800 = vmatpush1.msra.mxu0 %v394
        %1801 = vmatprep.subr.mxu0 0.0
        %1802 = vmatpush1.msra.mxu0 %v395
        %1803 = vmatprep.subr.mxu0 0.0
        %1804 = vmatpush1.msra.mxu0 0.0
        %1805 = vmatprep.subr.mxu0 0.0
        %1806 = vmatpush1.msra.mxu0 0.0
        %1807 = vmatprep.subr.mxu0 0.0
        %1808 = vmatpush1.msra.mxu0 0.0
        %1809 = vmatprep.subr.mxu0 0.0
        %1810 = vmatpush1.msra.mxu0 0.0
        %1811 = vmatprep.subr.mxu0 0.0
        %1812 = vmatpush1.msra.mxu0 0.0
        %1813 = vmatprep.subr.mxu0 0.0
        %1814 = vmatpush1.msra.mxu0 0.0
        %1815 = vmatprep.subr.mxu0 0.0
        %1816 = vmatpush1.msra.mxu0 0.0
        %1817 = vmatprep.subr.mxu0 0.0
        %1818 = vmatpush1.msra.mxu0 0.0
        %1819 = vmatprep.subr.mxu0 0.0
        %1820 = vmatpush1.msra.mxu0 0.0
        %1821 = vmatprep.subr.mxu0 0.0
        %1822 = vmatpush1.msra.mxu0 0.0
        %1823 = vmatprep.subr.mxu0 0.0
        %1824 = vmatpush1.msra.mxu0 0.0
        %1825 = vmatprep.subr.mxu0 0.0
        %1826 = vmatpush1.msra.mxu0 0.0
        %1827 = vmatprep.subr.mxu0 0.0
        %1828 = vmatpush1.msra.mxu0 0.0
        %1829 = vmatprep.subr.mxu0 0.0
        %1830 = vmatpush1.msra.mxu0 0.0
        %1831 = vmatprep.subr.mxu0 0.0
        %1832 = vmatpush1.msra.mxu0 0.0
        %1833 = vmatprep.subr.mxu0 0.0
        %1834 = vmatpush1.msra.mxu0 0.0
        %1835 = vmatprep.subr.mxu0 0.0
        %1836 = vmatpush1.msra.mxu0 0.0
        %1837 = vmatprep.subr.mxu0 0.0
        %1838 = vmatpush1.msra.mxu0 0.0
        %1839 = vmatprep.subr.mxu0 0.0
        %1840 = vmatpush1.msra.mxu0 0.0
        %1841 = vmatprep.subr.mxu0 0.0
        %1842 = vmatpush1.msra.mxu0 0.0
        %1843 = vmatprep.subr.mxu0 0.0
        %1844 = vmatpush1.msra.mxu0 0.0
        %1845 = vmatprep.subr.mxu0 0.0
        %1846 = vmatpush1.msra.mxu0 0.0
        %1847 = vmatprep.subr.mxu0 0.0
        %1848 = vmatpush1.msra.mxu0 0.0
        %1849 = vmatprep.subr.mxu0 0.0
        %1850 = vmatpush1.msra.mxu0 0.0
        %1851 = vmatprep.subr.mxu0 0.0
        %1852 = vmatpush1.msra.mxu0 0.0
        %1853 = vmatprep.subr.mxu0 0.0
        %1854 = vmatpush1.msra.mxu0 0.0
        %1855 = vmatprep.subr.mxu0 0.0
        %1856 = vmatpush1.msra.mxu0 0.0
        %1857 = vmatprep.subr.mxu0 0.0
        %1858 = vmatpush1.msra.mxu0 0.0
        %1859 = vmatprep.mubr.f32.mxu0 0.0
        %1860 = vmatmul.mubr.f32.gmra.mrb[0].mxu0 %v1793
        %v1861 = vpop.f32.mrb[0].mxu0
        %v1862 = vadd.f32 0.0, %v1861
        %v1863 = vpop.f32.mrb[0].mxu0
        %1864 = vdwg.mxu0
        %v1865 = vadd.f32 %v1353, %v1862
        %v1866 = vxor.u32 %v1865, 2147483648
        %v1867 = vmul.f32 %v1866, 1.442695
        %v1868 = vpow.pop %v1867
        %v1869 = vadd.f32 %v1868, 1.0
        %v1870 = vrcp.pop %v1869
        %v1871 = vmul.f32 1.0, %v1870
        %v1872 = vadd.f32 %v1862, %v1438
        %1874 = vrot.lane.b32.xlu0 %v1872, 64
        %v1875 = vpop.permute.xlu0 %1874
        %v1877 = vmul.f32 %v1871, %v1875
        %1879 = vrot.lane.b32.xlu0 %v1877, 64
        %v1880 = vpop.permute.xlu0 %1879
        %v1882 = vadd.f32 %v1353, %v1880
        %v1883 = vtanh.pop %v1882
        %v1884 = vsub.f32 1.0, %v1871
        %1886 = vrot.lane.b32.xlu0 %v1883, 96
        %v1887 = vpop.permute.xlu0 %1886
        %v1889 = vmul.f32 %v1884, %v1887
        %v1891 = vmul.f32 %v1871, %v1790
        %v1892 = vadd.f32 %v1889, %v1891
        %1894 = vrot.lane.b32.xlu0 %v1892, 96
        %v1895 = vpop.permute.xlu0 %1894
        %v1896 = vsel %vm411, %v1895, 0
        %1898 = vmatprep.subr.mxu0 0.0
        %1899 = vmatpush1.msra.mxu0 %v392
        %1900 = vmatprep.subr.mxu0 0.0
        %1901 = vmatpush1.msra.mxu0 %v393
        %1902 = vmatprep.subr.mxu0 0.0
        %1903 = vmatpush1.msra.mxu0 %v394
        %1904 = vmatprep.subr.mxu0 0.0
        %1905 = vmatpush1.msra.mxu0 %v395
        %1906 = vmatprep.subr.mxu0 0.0
        %1907 = vmatpush1.msra.mxu0 0.0
        %1908 = vmatprep.subr.mxu0 0.0
        %1909 = vmatpush1.msra.mxu0 0.0
        %1910 = vmatprep.subr.mxu0 0.0
        %1911 = vmatpush1.msra.mxu0 0.0
        %1912 = vmatprep.subr.mxu0 0.0
        %1913 = vmatpush1.msra.mxu0 0.0
        %1914 = vmatprep.subr.mxu0 0.0
        %1915 = vmatpush1.msra.mxu0 0.0
        %1916 = vmatprep.subr.mxu0 0.0
        %1917 = vmatpush1.msra.mxu0 0.0
        %1918 = vmatprep.subr.mxu0 0.0
        %1919 = vmatpush1.msra.mxu0 0.0
        %1920 = vmatprep.subr.mxu0 0.0
        %1921 = vmatpush1.msra.mxu0 0.0
        %1922 = vmatprep.subr.mxu0 0.0
        %1923 = vmatpush1.msra.mxu0 0.0
        %1924 = vmatprep.subr.mxu0 0.0
        %1925 = vmatpush1.msra.mxu0 0.0
        %1926 = vmatprep.subr.mxu0 0.0
        %1927 = vmatpush1.msra.mxu0 0.0
        %1928 = vmatprep.subr.mxu0 0.0
        %1929 = vmatpush1.msra.mxu0 0.0
        %1930 = vmatprep.subr.mxu0 0.0
        %1931 = vmatpush1.msra.mxu0 0.0
        %1932 = vmatprep.subr.mxu0 0.0
        %1933 = vmatpush1.msra.mxu0 0.0
        %1934 = vmatprep.subr.mxu0 0.0
        %1935 = vmatpush1.msra.mxu0 0.0
        %1936 = vmatprep.subr.mxu0 0.0
        %1937 = vmatpush1.msra.mxu0 0.0
        %1938 = vmatprep.subr.mxu0 0.0
        %1939 = vmatpush1.msra.mxu0 0.0
        %1940 = vmatprep.subr.mxu0 0.0
        %1941 = vmatpush1.msra.mxu0 0.0
        %1942 = vmatprep.subr.mxu0 0.0
        %1943 = vmatpush1.msra.mxu0 0.0
        %1944 = vmatprep.subr.mxu0 0.0
        %1945 = vmatpush1.msra.mxu0 0.0
        %1946 = vmatprep.subr.mxu0 0.0
        %1947 = vmatpush1.msra.mxu0 0.0
        %1948 = vmatprep.subr.mxu0 0.0
        %1949 = vmatpush1.msra.mxu0 0.0
        %1950 = vmatprep.subr.mxu0 0.0
        %1951 = vmatpush1.msra.mxu0 0.0
        %1952 = vmatprep.subr.mxu0 0.0
        %1953 = vmatpush1.msra.mxu0 0.0
        %1954 = vmatprep.subr.mxu0 0.0
        %1955 = vmatpush1.msra.mxu0 0.0
        %1956 = vmatprep.subr.mxu0 0.0
        %1957 = vmatpush1.msra.mxu0 0.0
        %1958 = vmatprep.subr.mxu0 0.0
        %1959 = vmatpush1.msra.mxu0 0.0
        %1960 = vmatprep.subr.mxu0 0.0
        %1961 = vmatpush1.msra.mxu0 0.0
        %1962 = vmatprep.mubr.f32.mxu0 0.0
        %1963 = vmatmul.mubr.f32.gmra.mrb[0].mxu0 %v1896
        %v1964 = vpop.f32.mrb[0].mxu0
        %v1965 = vadd.f32 0.0, %v1964
        %v1966 = vpop.f32.mrb[0].mxu0
        %1967 = vdwg.mxu0
        %v1969 = vrot.slane %v1965, 6
        %v1971 = vadd.f32 %v1353, %v1969
        %v1972 = vxor.u32 %v1971, 2147483648
        %v1973 = vmul.f32 %v1972, 1.442695
        %v1974 = vpow.pop %v1973
        %v1975 = vadd.f32 %v1974, 1.0
        %v1976 = vrcp.pop %v1975
        %v1977 = vmul.f32 1.0, %v1976
        %v1978 = vadd.f32 %v1965, %v1438
        %v1980 = vrot.slane %v1978, 6
        %1981 = vrot.lane.b32.xlu0 %v1980, 64
        %v1982 = vpop.permute.xlu0 %1981
        %v1984 = vmul.f32 %v1977, %v1982
        %1986 = vrot.lane.b32.xlu0 %v1984, 64
        %v1987 = vpop.permute.xlu0 %1986
        %v1989 = vadd.f32 %v1353, %v1987
        %v1990 = vtanh.pop %v1989
        %v1991 = vsub.f32 1.0, %v1977
        %1993 = vrot.lane.b32.xlu0 %v1990, 96
        %v1994 = vpop.permute.xlu0 %1993
        %v1996 = vmul.f32 %v1991, %v1994
        %v1997 = vrot.slane %v1892, 6
        %v1999 = vmul.f32 %v1977, %v1997
        %v2000 = vadd.f32 %v1996, %v1999
        %v2002 = vrot.slane %v2000, 2
        %2003 = vrot.lane.b32.xlu0 %v2002, 96
        %v2004 = vpop.permute.xlu0 %2003
        %v2005 = vsel %vm411, %v2004, 0
        %2007 = vmatprep.subr.mxu0 0.0
        %2008 = vmatpush1.msra.mxu0 %v392
        %2009 = vmatprep.subr.mxu0 0.0
        %2010 = vmatpush1.msra.mxu0 %v393
        %2011 = vmatprep.subr.mxu0 0.0
        %2012 = vmatpush1.msra.mxu0 %v394
        %2013 = vmatprep.subr.mxu0 0.0
        %2014 = vmatpush1.msra.mxu0 %v395
        %2015 = vmatprep.subr.mxu0 0.0
        %2016 = vmatpush1.msra.mxu0 0.0
        %2017 = vmatprep.subr.mxu0 0.0
        %2018 = vmatpush1.msra.mxu0 0.0
        %2019 = vmatprep.subr.mxu0 0.0
        %2020 = vmatpush1.msra.mxu0 0.0
        %2021 = vmatprep.subr.mxu0 0.0
        %2022 = vmatpush1.msra.mxu0 0.0
        %2023 = vmatprep.subr.mxu0 0.0
        %2024 = vmatpush1.msra.mxu0 0.0
        %2025 = vmatprep.subr.mxu0 0.0
        %2026 = vmatpush1.msra.mxu0 0.0
        %2027 = vmatprep.subr.mxu0 0.0
        %2028 = vmatpush1.msra.mxu0 0.0
        %2029 = vmatprep.subr.mxu0 0.0
        %2030 = vmatpush1.msra.mxu0 0.0
        %2031 = vmatprep.subr.mxu0 0.0
        %2032 = vmatpush1.msra.mxu0 0.0
        %2033 = vmatprep.subr.mxu0 0.0
        %2034 = vmatpush1.msra.mxu0 0.0
        %2035 = vmatprep.subr.mxu0 0.0
        %2036 = vmatpush1.msra.mxu0 0.0
        %2037 = vmatprep.subr.mxu0 0.0
        %2038 = vmatpush1.msra.mxu0 0.0
        %2039 = vmatprep.subr.mxu0 0.0
        %2040 = vmatpush1.msra.mxu0 0.0
        %2041 = vmatprep.subr.mxu0 0.0
        %2042 = vmatpush1.msra.mxu0 0.0
        %2043 = vmatprep.subr.mxu0 0.0
        %2044 = vmatpush1.msra.mxu0 0.0
        %2045 = vmatprep.subr.mxu0 0.0
        %2046 = vmatpush1.msra.mxu0 0.0
        %2047 = vmatprep.subr.mxu0 0.0
        %2048 = vmatpush1.msra.mxu0 0.0
        %2049 = vmatprep.subr.mxu0 0.0
        %2050 = vmatpush1.msra.mxu0 0.0
        %2051 = vmatprep.subr.mxu0 0.0
        %2052 = vmatpush1.msra.mxu0 0.0
        %2053 = vmatprep.subr.mxu0 0.0
        %2054 = vmatpush1.msra.mxu0 0.0
        %2055 = vmatprep.subr.mxu0 0.0
        %2056 = vmatpush1.msra.mxu0 0.0
        %2057 = vmatprep.subr.mxu0 0.0
        %2058 = vmatpush1.msra.mxu0 0.0
        %2059 = vmatprep.subr.mxu0 0.0
        %2060 = vmatpush1.msra.mxu0 0.0
        %2061 = vmatprep.subr.mxu0 0.0
        %2062 = vmatpush1.msra.mxu0 0.0
        %2063 = vmatprep.subr.mxu0 0.0
        %2064 = vmatpush1.msra.mxu0 0.0
        %2065 = vmatprep.subr.mxu0 0.0
        %2066 = vmatpush1.msra.mxu0 0.0
        %2067 = vmatprep.subr.mxu0 0.0
        %2068 = vmatpush1.msra.mxu0 0.0
        %2069 = vmatprep.subr.mxu0 0.0
        %2070 = vmatpush1.msra.mxu0 0.0
        %2071 = vmatprep.mubr.f32.mxu0 0.0
        %2072 = vmatmul.mubr.f32.gmra.mrb[0].mxu0 %v2005
        %v2073 = vpop.f32.mrb[0].mxu0
        %v2074 = vadd.f32 0.0, %v2073
        %v2075 = vpop.f32.mrb[0].mxu0
        %2076 = vdwg.mxu0
        %v2078 = vrot.slane %v2074, 4
        %v2080 = vadd.f32 %v1353, %v2078
        %v2081 = vxor.u32 %v2080, 2147483648
        %v2082 = vmul.f32 %v2081, 1.442695
        %v2083 = vpow.pop %v2082
        %v2084 = vadd.f32 %v2083, 1.0
        %v2085 = vrcp.pop %v2084
        %v2086 = vmul.f32 1.0, %v2085
        %v2087 = vadd.f32 %v2074, %v1438
        %v2089 = vrot.slane %v2087, 4
        %2090 = vrot.lane.b32.xlu0 %v2089, 64
        %v2091 = vpop.permute.xlu0 %2090
        %v2093 = vmul.f32 %v2086, %v2091
        %2095 = vrot.lane.b32.xlu0 %v2093, 64
        %v2096 = vpop.permute.xlu0 %2095
        %v2098 = vadd.f32 %v1353, %v2096
        %v2099 = vtanh.pop %v2098
        %v2100 = vsub.f32 1.0, %v2086
        %2102 = vrot.lane.b32.xlu0 %v2099, 96
        %v2103 = vpop.permute.xlu0 %2102
        %v2105 = vmul.f32 %v2100, %v2103
        %v2106 = vrot.slane %v2000, 6
        %v2108 = vmul.f32 %v2086, %v2106
        %v2109 = vadd.f32 %v2105, %v2108
        %v2111 = vrot.slane %v2109, 4
        %2112 = vrot.lane.b32.xlu0 %v2111, 96
        %v2113 = vpop.permute.xlu0 %2112
        %v2114 = vsel %vm411, %v2113, 0
        %2116 = vmatprep.subr.mxu0 0.0
        %2117 = vmatpush1.msra.mxu0 %v392
        %2118 = vmatprep.subr.mxu0 0.0
        %2119 = vmatpush1.msra.mxu0 %v393
        %2120 = vmatprep.subr.mxu0 0.0
        %2121 = vmatpush1.msra.mxu0 %v394
        %2122 = vmatprep.subr.mxu0 0.0
        %2123 = vmatpush1.msra.mxu0 %v395
        %2124 = vmatprep.subr.mxu0 0.0
        %2125 = vmatpush1.msra.mxu0 0.0
        %2126 = vmatprep.subr.mxu0 0.0
        %2127 = vmatpush1.msra.mxu0 0.0
        %2128 = vmatprep.subr.mxu0 0.0
        %2129 = vmatpush1.msra.mxu0 0.0
        %2130 = vmatprep.subr.mxu0 0.0
        %2131 = vmatpush1.msra.mxu0 0.0
        %2132 = vmatprep.subr.mxu0 0.0
        %2133 = vmatpush1.msra.mxu0 0.0
        %2134 = vmatprep.subr.mxu0 0.0
        %2135 = vmatpush1.msra.mxu0 0.0
        %2136 = vmatprep.subr.mxu0 0.0
        %2137 = vmatpush1.msra.mxu0 0.0
        %2138 = vmatprep.subr.mxu0 0.0
        %2139 = vmatpush1.msra.mxu0 0.0
        %2140 = vmatprep.subr.mxu0 0.0
        %2141 = vmatpush1.msra.mxu0 0.0
        %2142 = vmatprep.subr.mxu0 0.0
        %2143 = vmatpush1.msra.mxu0 0.0
        %2144 = vmatprep.subr.mxu0 0.0
        %2145 = vmatpush1.msra.mxu0 0.0
        %2146 = vmatprep.subr.mxu0 0.0
        %2147 = vmatpush1.msra.mxu0 0.0
        %2148 = vmatprep.subr.mxu0 0.0
        %2149 = vmatpush1.msra.mxu0 0.0
        %2150 = vmatprep.subr.mxu0 0.0
        %2151 = vmatpush1.msra.mxu0 0.0
        %2152 = vmatprep.subr.mxu0 0.0
        %2153 = vmatpush1.msra.mxu0 0.0
        %2154 = vmatprep.subr.mxu0 0.0
        %2155 = vmatpush1.msra.mxu0 0.0
        %2156 = vmatprep.subr.mxu0 0.0
        %2157 = vmatpush1.msra.mxu0 0.0
        %2158 = vmatprep.subr.mxu0 0.0
        %2159 = vmatpush1.msra.mxu0 0.0
        %2160 = vmatprep.subr.mxu0 0.0
        %2161 = vmatpush1.msra.mxu0 0.0
        %2162 = vmatprep.subr.mxu0 0.0
        %2163 = vmatpush1.msra.mxu0 0.0
        %2164 = vmatprep.subr.mxu0 0.0
        %2165 = vmatpush1.msra.mxu0 0.0
        %2166 = vmatprep.subr.mxu0 0.0
        %2167 = vmatpush1.msra.mxu0 0.0
        %2168 = vmatprep.subr.mxu0 0.0
        %2169 = vmatpush1.msra.mxu0 0.0
        %2170 = vmatprep.subr.mxu0 0.0
        %2171 = vmatpush1.msra.mxu0 0.0
        %2172 = vmatprep.subr.mxu0 0.0
        %2173 = vmatpush1.msra.mxu0 0.0
        %2174 = vmatprep.subr.mxu0 0.0
        %2175 = vmatpush1.msra.mxu0 0.0
        %2176 = vmatprep.subr.mxu0 0.0
        %2177 = vmatpush1.msra.mxu0 0.0
        %2178 = vmatprep.subr.mxu0 0.0
        %2179 = vmatpush1.msra.mxu0 0.0
        %2180 = vmatprep.mubr.f32.mxu0 0.0
        %2181 = vmatmul.mubr.f32.gmra.mrb[0].mxu0 %v2114
        %v2182 = vpop.f32.mrb[0].mxu0
        %v2183 = vadd.f32 0.0, %v2182
        %v2184 = vpop.f32.mrb[0].mxu0
        %2185 = vdwg.mxu0
        %v2187 = vrot.slane %v2183, 2
        %v2189 = vadd.f32 %v1353, %v2187
        %v2190 = vxor.u32 %v2189, 2147483648
        %v2191 = vmul.f32 %v2190, 1.442695
        %v2192 = vpow.pop %v2191
        %v2193 = vadd.f32 %v2192, 1.0
        %v2194 = vrcp.pop %v2193
        %v2195 = vmul.f32 1.0, %v2194
        %v2196 = vadd.f32 %v2183, %v1438
        %v2198 = vrot.slane %v2196, 2
        %2199 = vrot.lane.b32.xlu0 %v2198, 64
        %v2200 = vpop.permute.xlu0 %2199
        %v2202 = vmul.f32 %v2195, %v2200
        %2204 = vrot.lane.b32.xlu0 %v2202, 64
        %v2205 = vpop.permute.xlu0 %2204
        %v2207 = vadd.f32 %v1353, %v2205
        %v2208 = vtanh.pop %v2207
        %v2209 = vsub.f32 1.0, %v2195
        %2211 = vrot.lane.b32.xlu0 %v2208, 96
        %v2212 = vpop.permute.xlu0 %2211
        %v2214 = vmul.f32 %v2209, %v2212
        %v2215 = vrot.slane %v2109, 6
        %v2217 = vmul.f32 %v2195, %v2215
        %v2218 = vadd.f32 %v2214, %v2217
        %2220 = vrot.lane.b32.xlu0 %v2218, 96
        %v2221 = vpop.permute.xlu0 %2220
        %vm2223 = vcmask 261126
        %2224 = vst.msk [vmem:[#allocation3 - $0x6] sm:$0xc0] %vm2223, %v2221
        %p2225 = scmp.eq.s32.totalorder %s25, 1
        // Predicated region
        $region65: #{char_gru_forward.1} parent=59 // pred_check
          %p2226 = pneg %p2225
        $region66: #{char_gru_forward.1} parent=59 // pred_check_branch
          %2228 = sbr.rel (%p2226) target = $region68
        $region67: #{char_gru_forward.1} parent=59 // pred_region
          %v2229 = vld [vmem:[%s8] sm:$0xff]
          %v2230 = vld [vmem:[%s8 + $0x8] sm:$0xff]
          %v2231 = vld [vmem:[%s8 + $0x10] sm:$0xff]
          %v2232 = vld [vmem:[%s8 + $0x18] sm:$0xff]
          %v2233 = vld [vmem:[%s9] sm:$0x1]
          %v2235 = vlaneseq
          %v2236 = vshrl.u32 %v2235, 7
          %v2237 = vsub.s32 0, %v2236
          %v2238 = vrot.slane %v2233, %v2237
          %v2240 = vrot.slane %v2218, 6
          %2241 = vrot.lane.b32.xlu0 %v2240, 96
          %v2242 = vpop.permute.xlu0 %2241
          %v2243 = vsel %vm411, %v2242, 0
          %2245 = vmatprep.subr.mxu0 0.0
          %2246 = vmatpush1.msra.mxu0 %v2229
          %2247 = vmatprep.subr.mxu0 0.0
          %2248 = vmatpush1.msra.mxu0 %v2230
          %2249 = vmatprep.subr.mxu0 0.0
          %2250 = vmatpush1.msra.mxu0 %v2231
          %2251 = vmatprep.subr.mxu0 0.0
          %2252 = vmatpush1.msra.mxu0 %v2232
          %2253 = vmatprep.subr.mxu0 0.0
          %2254 = vmatpush1.msra.mxu0 0.0
          %2255 = vmatprep.subr.mxu0 0.0
          %2256 = vmatpush1.msra.mxu0 0.0
          %2257 = vmatprep.subr.mxu0 0.0
          %2258 = vmatpush1.msra.mxu0 0.0
          %2259 = vmatprep.subr.mxu0 0.0
          %2260 = vmatpush1.msra.mxu0 0.0
          %2261 = vmatprep.subr.mxu0 0.0
          %2262 = vmatpush1.msra.mxu0 0.0
          %2263 = vmatprep.subr.mxu0 0.0
          %2264 = vmatpush1.msra.mxu0 0.0
          %2265 = vmatprep.subr.mxu0 0.0
          %2266 = vmatpush1.msra.mxu0 0.0
          %2267 = vmatprep.subr.mxu0 0.0
          %2268 = vmatpush1.msra.mxu0 0.0
          %2269 = vmatprep.subr.mxu0 0.0
          %2270 = vmatpush1.msra.mxu0 0.0
          %2271 = vmatprep.subr.mxu0 0.0
          %2272 = vmatpush1.msra.mxu0 0.0
          %2273 = vmatprep.subr.mxu0 0.0
          %2274 = vmatpush1.msra.mxu0 0.0
          %2275 = vmatprep.subr.mxu0 0.0
          %2276 = vmatpush1.msra.mxu0 0.0
          %2277 = vmatprep.subr.mxu0 0.0
          %2278 = vmatpush1.msra.mxu0 0.0
          %2279 = vmatprep.subr.mxu0 0.0
          %2280 = vmatpush1.msra.mxu0 0.0
          %2281 = vmatprep.subr.mxu0 0.0
          %2282 = vmatpush1.msra.mxu0 0.0
          %2283 = vmatprep.subr.mxu0 0.0
          %2284 = vmatpush1.msra.mxu0 0.0
          %2285 = vmatprep.subr.mxu0 0.0
          %2286 = vmatpush1.msra.mxu0 0.0
          %2287 = vmatprep.subr.mxu0 0.0
          %2288 = vmatpush1.msra.mxu0 0.0
          %2289 = vmatprep.subr.mxu0 0.0
          %2290 = vmatpush1.msra.mxu0 0.0
          %2291 = vmatprep.subr.mxu0 0.0
          %2292 = vmatpush1.msra.mxu0 0.0
          %2293 = vmatprep.subr.mxu0 0.0
          %2294 = vmatpush1.msra.mxu0 0.0
          %2295 = vmatprep.subr.mxu0 0.0
          %2296 = vmatpush1.msra.mxu0 0.0
          %2297 = vmatprep.subr.mxu0 0.0
          %2298 = vmatpush1.msra.mxu0 0.0
          %2299 = vmatprep.subr.mxu0 0.0
          %2300 = vmatpush1.msra.mxu0 0.0
          %2301 = vmatprep.subr.mxu0 0.0
          %2302 = vmatpush1.msra.mxu0 0.0
          %2303 = vmatprep.subr.mxu0 0.0
          %2304 = vmatpush1.msra.mxu0 0.0
          %2305 = vmatprep.subr.mxu0 0.0
          %2306 = vmatpush1.msra.mxu0 0.0
          %2307 = vmatprep.subr.mxu0 0.0
          %2308 = vmatpush1.msra.mxu0 0.0
          %2309 = vmatprep.mubr.f32.mxu0 0.0
          %2310 = vmatmul.mubr.f32.gmra.mrb[0].mxu0 %v2243
          %v2311 = vpop.f32.mrb[0].mxu0
          %v2312 = vadd.f32 %v2238, %v2311
          %v2313 = vpop.f32.mrb[0].mxu0
          %2314 = vdwg.mxu0
          %vm2315 = vcmask 58368
          %2316 = vst.msk [vmem:[#allocation5] sm:$0x3] %vm2315, %v2312
          %2317 = vst.msk [vmem:[#allocation7] sm:$0x3] %vm522, %v1263
          %s2318 = scalar_lea.vmem [#allocation7], 2
          %2319 = vst.msk [vmem:[%s2318 - $0x6] sm:$0xc0] %vm2223, %v2221
        $region68: #{char_gru_forward.1} parent=59 // pred_fallthru
          _
        // Predicated region
        $region69: #{char_gru_forward.1} parent=59 // pred_check
          %p2320 = pneg %p253
        $region70: #{char_gru_forward.1} parent=59 // pred_check_branch
          %2322 = sbr.rel (%p2320) target = $region72
        $region71: #{char_gru_forward.1} parent=59 // pred_region
          %s2324 = ssub.s32 32, 32
          %2325 = vsyncadd [#allocation6], %s2324
          %s2327 = sshll.u32 [#allocation5], 4
          %s2328 = int_to_ptr.vmem [resolvable:$true] %s2327
          %2330 = dma.vmem_to_hbm [thread:$0]  %s2328, 32, %s10, [#allocation6]
        $region72: #{char_gru_forward.1} parent=59 // pred_fallthru
          _
        // Predicated region
        $region73: #{char_gru_forward.1} parent=59 // pred_check
          %p2331 = pneg %p274
        $region74: #{char_gru_forward.1} parent=59 // pred_check_branch
          %2333 = sbr.rel (%p2331) target = $region76
        $region75: #{char_gru_forward.1} parent=59 // pred_region
          %s2335 = ssub.s32 64, 64
          %2336 = vsyncadd [#allocation8], %s2335
          %s2337 = sshll.u32 [#allocation7], 4
          %s2338 = int_to_ptr.vmem [resolvable:$true] %s2337
          %2343 = dma.vmem_to_hbm [thread:$0]  %s2338, 64, %s11, [#allocation8], 32, 32, 2
        $region76: #{char_gru_forward.1} parent=59 // pred_fallthru
          _
        // Predicated region
        $region77: #{char_gru_forward.1} parent=59 // pred_check
          %p2344 = pneg %p253
        $region78: #{char_gru_forward.1} parent=59 // pred_check_branch
          %2346 = sbr.rel (%p2344) target = $region80
        $region79: #{char_gru_forward.1} parent=59 // pred_region
          %2347 = dma.done [#allocation6], 32
        $region80: #{char_gru_forward.1} parent=59 // pred_fallthru
          _
        // Predicated region
        $region81: #{char_gru_forward.1} parent=59 // pred_check
          %p2348 = pneg %p274
        $region82: #{char_gru_forward.1} parent=59 // pred_check_branch
          %2350 = sbr.rel (%p2348) target = $region84
        $region83: #{char_gru_forward.1} parent=59 // pred_region
          %2351 = dma.done [#allocation8], 64
        $region84: #{char_gru_forward.1} parent=59 // pred_fallthru
          _
      $region60: #{char_gru_forward.1} parent=5 // pred_fallthru
        _
      %p2352 = scmp.le.s32.totalorder 2, %s20
      // Predicated region
      $region85: #{char_gru_forward.1} parent=5 // pred_check
        %p2353 = pneg %p2352
      $region86: #{char_gru_forward.1} parent=5 // pred_check_branch
        %2355 = sbr.rel (%p2353) target = $region88
      $region87: #{char_gru_forward.1} parent=5 // pred_region
        %s2356 = ssub.s32 %s20, 2
      $region88: #{char_gru_forward.1} parent=5 // pred_fallthru
        _
    $region6: #{char_gru_forward.1} parent=1 // loop_footer
      %s24 = sadd.s32 1, %s20
    $region7: #{char_gru_forward.1} parent=1 // loop_footer_branch
      %19 = sbr.rel target = $region3
    $region8: #{char_gru_forward.1} parent=1 // loop_exit
      _
    %2357 = vsyncpa [#allocation6], 1
    %s2358 = scalar_lea.sflag [#allocation6], 1
    %2359 = vsyncpa %s2358, 1
    %2360 = vsyncpa [#allocation8], 1

</llo_original>
